<compile_context>
chip_gen: v6e
topology: v6e:2x2x1
jax: 0.10.0
libtpu: 0.0.40
codegen_flags: <defaults>
</compile_context>

<pallas_src>
import jax
import jax.numpy as jnp
import numpy as np
from jax import lax
from jax.experimental import pallas as pl
from jax.experimental.pallas import tpu as pltpu


def _gelu_exact(x):
    # nn.GELU() default == exact erf formulation
    return 0.5 * x * (1.0 + lax.erf(x * (1.0 / jnp.sqrt(2.0))))


# dot_general contraction:  A (M, K)  x  B (N, K)  ->  (M, N), i.e. A @ B^T
_DN = (((1,), (1,)), ((), ()))


def _mm(a, b):
    return lax.dot_general(a.astype(jnp.bfloat16), b, _DN,
                           preferred_element_type=jnp.float32)


def kckl_head_kernel(x_ref, w1_ref, b1_ref, w2_ref, b2_ref, w3_ref, b3_ref,
                     wl_ref, o_ref, zn_ref):
    oj = pl.program_id(1)

    # Compute the MLP + L2-normalize once per batch tile (first out-dim tile),
    # cache the normalized bottleneck activations (bf16) in VMEM scratch.
    # NOTE: this is only correct because axis 1 (out_dim) is the innermost,
    # sequentially iterated, "arbitrary" grid axis.
    @pl.when(oj == 0)
    def _():
        # layer 1: Linear + GELU (bf16 MXU inputs, f32 accumulate, f32 epilogue)
        h = _mm(x_ref[...], w1_ref[...]) + b1_ref[...]
        h = _gelu_exact(h)
        # layer 2: Linear + GELU
        h = _mm(h, w2_ref[...]) + b2_ref[...]
        h = _gelu_exact(h)
        # layer 3: Linear (bottleneck)
        z = _mm(h, w3_ref[...]) + b3_ref[...]
        # F.normalize(dim=-1, p=2, eps=1e-12): single rsqrt(max(ssq, eps^2))
        ssq = jnp.sum(z * z, axis=-1, keepdims=True)
        inv = lax.rsqrt(jnp.maximum(ssq, 1e-24))     # == 1 / max(||z||, 1e-12)
        zn_ref[...] = (z * inv).astype(zn_ref.dtype)  # cast to bf16 ONCE per batch tile

    # weight-normalized last layer (W_last = V / ||V||_row, weight_g == 1;
    # row-normalized + bf16-cast once in prepare_params).  Streamed out-dim tile.
    # zn scratch is already bf16 -> no per-step cast on the LHS.
    out = lax.dot_general(zn_ref[...], wl_ref[...], _DN,
                          preferred_element_type=jnp.float32)
    o_ref[...] = out.astype(o_ref.dtype)


def prepare_params(params):
    """One-time parameter prep (call once, not per forward):
    row-normalize V (weight_norm with g == 1) and cast MXU weights to bf16."""
    v = params["v"].astype(jnp.float32)
    w_last = v * lax.rsqrt(jnp.sum(v * v, axis=-1, keepdims=True))
    bf = lambda a: a.astype(jnp.bfloat16)
    f32row = lambda a: a.astype(jnp.float32).reshape(1, -1)
    return dict(
        w1=bf(params["w1"]), w2=bf(params["w2"]), w3=bf(params["w3"]),
        wl=bf(w_last),
        b1=f32row(params["b1"]), b2=f32row(params["b2"]), b3=f32row(params["b3"]),
    )


def kckl_head_forward(x, prepared, *, tb=256, tn=1024,
                      out_dtype=jnp.bfloat16, buffering_hints=True):
    B, in_dim = x.shape
    hid = prepared["w1"].shape[0]
    bot = prepared["w3"].shape[0]
    out_dim = prepared["wl"].shape[0]

    tb = min(tb, B)
    tn = min(tn, out_dim)
    assert B % tb == 0 and out_dim % tn == 0, "pad batch/out_dim to tile multiples"

    # bf16 at the MXU input; biases stay f32 for the f32 epilogue.
    x_bf = x.astype(jnp.bfloat16)

    # Buffering hints: resident weights (constant index_map) single-buffered,
    # streamed W_last triple-buffered so it prefetches under the oj==0 MLP step.
    res_mode = pl.Buffered(1) if buffering_hints else None
    wl_mode = pl.Buffered(3) if buffering_hints else None

    def spec(shape, index_map, mode=None):
        if mode is None:
            return pl.BlockSpec(shape, index_map)
        return pl.BlockSpec(shape, index_map, pipeline_mode=mode)

    # VMEM budget: residents + double-buffered x/out tiles + W_last buffers + zn scratch.
    res_bufs = 1 if buffering_hints else 2
    wl_bufs = 3 if buffering_hints else 2
    out_bpe = jnp.dtype(out_dtype).itemsize
    need = ((hid * in_dim + hid * hid + bot * hid) * 2 * res_bufs     # bf16 weights
            + (hid + hid + bot) * 4 * res_bufs                        # f32 biases
            + (tb * in_dim * 2) * 2                                   # x tiles
            + (tn * bot * 2) * wl_bufs                                # W_last tiles
            + (tb * tn * out_bpe) * 2                                 # out tiles
            + tb * bot * 2)                                           # zn scratch (bf16)
    vmem_limit = int(min(max(need * 5 // 4 + (2 << 20), 32 << 20), 128 << 20))

    grid = (B // tb, out_dim // tn)
    return pl.pallas_call(
        kckl_head_kernel,
        out_shape=jax.ShapeDtypeStruct((B, out_dim), out_dtype),
        grid_spec=pltpu.PrefetchScalarGridSpec(
            num_scalar_prefetch=0,
            grid=grid,
            in_specs=[
                spec((tb, in_dim), lambda bi, oj: (bi, 0)),            # x: batch tile
                spec((hid, in_dim), lambda bi, oj: (0, 0), res_mode),  # W1: resident
                spec((1, hid), lambda bi, oj: (0, 0), res_mode),       # b1
                spec((hid, hid), lambda bi, oj: (0, 0), res_mode),     # W2: resident
                spec((1, hid), lambda bi, oj: (0, 0), res_mode),       # b2
                spec((bot, hid), lambda bi, oj: (0, 0), res_mode),     # W3: resident
                spec((1, bot), lambda bi, oj: (0, 0), res_mode),       # b3
                spec((tn, bot), lambda bi, oj: (oj, 0), wl_mode),      # W_last: streamed
            ],
            out_specs=pl.BlockSpec((tb, tn), lambda bi, oj: (bi, oj)),
            scratch_shapes=[pltpu.VMEM((tb, bot), jnp.bfloat16)],      # cached zn (bf16)
        ),
        # IMPORTANT: axis 1 (out_dim) must stay "arbitrary" and innermost — the
        # zn scratch written at oj==0 is reused by all oj>0 steps of a batch tile.
        compiler_params=pltpu.CompilerParams(
            dimension_semantics=("parallel", "arbitrary"),
            vmem_limit_bytes=vmem_limit),
    )(x_bf, prepared["w1"], prepared["b1"], prepared["w2"], prepared["b2"],
      prepared["w3"], prepared["b3"], prepared["wl"])


def init_params(key, in_dim, hidden_dim, bottleneck_dim, out_dim):
    """trunc_normal(std=0.02) weights, zero biases, weight_norm direction V (g == 1)."""
    ks = jax.random.split(key, 4)

    def trunc(k, shape, std=0.02):
        return jax.random.truncated_normal(k, -2.0, 2.0, shape, jnp.float32) * std

    return dict(
        w1=trunc(ks[0], (hidden_dim, in_dim)),
        b1=jnp.zeros((1, hidden_dim), jnp.float32),
        w2=trunc(ks[1], (hidden_dim, hidden_dim)),
        b2=jnp.zeros((1, hidden_dim), jnp.float32),
        w3=trunc(ks[2], (bottleneck_dim, hidden_dim)),
        b3=jnp.zeros((1, bottleneck_dim), jnp.float32),
        v=trunc(ks[3], (out_dim, bottleneck_dim)),
    )


def reference_forward(x, p):
    """Pure-JAX reference with matching bf16 MXU inputs / f32 accumulation."""
    def mm(a, w):
        return lax.dot_general(a.astype(jnp.bfloat16), w.astype(jnp.bfloat16), _DN,
                               preferred_element_type=jnp.float32)

    h = _gelu_exact(mm(x, p["w1"]) + p["b1"])
    h = _gelu_exact(mm(h, p["w2"]) + p["b2"])
    z = mm(h, p["w3"]) + p["b3"]
    zn = z / jnp.maximum(jnp.sqrt(jnp.sum(z * z, -1, keepdims=True)), 1e-12)
    v = p["v"].astype(jnp.float32)
    wl = v * lax.rsqrt(jnp.sum(v * v, -1, keepdims=True))
    return mm(zn, wl)


if __name__ == "__main__":
    # Small but lane-aligned shapes (multiples of 128) consistent with the module
    # (bottleneck_dim matches the module default of 256).  B/tb == 2 so both v7x
    # TensorCores get a batch tile; out_dim/tn == 2 exercises the zn-reuse path.
    batch, in_dim, hidden_dim, bottleneck_dim, out_dim = 512, 256, 256, 256, 2048
    # TODO(synk): linear_forward (linear_classifier + CrossEntropyLoss) is not part
    # of forward(); omitted.

    key = jax.random.PRNGKey(0)
    kx, kp = jax.random.split(key)
    x = jax.random.normal(kx, (batch, in_dim), jnp.float32)
    params = init_params(kp, in_dim, hidden_dim, bottleneck_dim, out_dim)

    # One-time prep (row-normalize V, bf16 casts) — off the per-call hot path.
    prepared = prepare_params(params)

    try:
        out = kckl_head_forward(x, prepared, tb=256, tn=1024)
    except Exception:
        # Fallback for jax versions without BlockSpec(pipeline_mode=...):
        # identical semantics, default double-buffering.
        out = kckl_head_forward(x, prepared, tb=256, tn=1024, buffering_hints=False)
    out = jax.block_until_ready(out)

    ref = reference_forward(x, params)
    np.testing.assert_allclose(np.asarray(out, dtype=np.float32), np.asarray(ref),
                               rtol=2e-2, atol=3e-3)

    print("KERNEL_OK")
</pallas_src>

<mosaic_0001>
module attributes {stable_mosaic.version = 11 : i64} {
  func.func @kckl_head_kernel(%arg0: i32, %arg1: i32, %arg2: memref<256x256xbf16, #tpu.memory_space<vmem>>, %arg3: memref<256x256xbf16, #tpu.memory_space<vmem>>, %arg4: memref<1x256xf32, #tpu.memory_space<vmem>>, %arg5: memref<256x256xbf16, #tpu.memory_space<vmem>>, %arg6: memref<1x256xf32, #tpu.memory_space<vmem>>, %arg7: memref<256x256xbf16, #tpu.memory_space<vmem>>, %arg8: memref<1x256xf32, #tpu.memory_space<vmem>>, %arg9: memref<1024x256xbf16, #tpu.memory_space<vmem>>, %arg10: memref<256x1024xbf16, #tpu.memory_space<vmem>>, %arg11: memref<256x256xbf16, #tpu.memory_space<vmem>>) attributes {dimension_semantics = [#tpu.dimension_semantics<parallel>, #tpu.dimension_semantics<arbitrary>], iteration_bounds = array<i64: 2, 2>, scalar_prefetch = 0 : i64, scratch_operands = 1 : i64, tpu.core_type = #tpu.core_type<tc>, window_params = [{transform_indices = @transform_0, window_bounds = array<i64: 256, 256>}, {pipeline_mode = #tpu.pipeline_mode<synchronous>, transform_indices = @transform_1, window_bounds = array<i64: 256, 256>}, {pipeline_mode = #tpu.pipeline_mode<synchronous>, transform_indices = @transform_2, window_bounds = array<i64: 1, 256>}, {pipeline_mode = #tpu.pipeline_mode<synchronous>, transform_indices = @transform_3, window_bounds = array<i64: 256, 256>}, {pipeline_mode = #tpu.pipeline_mode<synchronous>, transform_indices = @transform_4, window_bounds = array<i64: 1, 256>}, {pipeline_mode = #tpu.pipeline_mode<synchronous>, transform_indices = @transform_5, window_bounds = array<i64: 256, 256>}, {pipeline_mode = #tpu.pipeline_mode<synchronous>, transform_indices = @transform_6, window_bounds = array<i64: 1, 256>}, {transform_indices = @transform_7, window_bounds = array<i64: 1024, 256>}, {transform_indices = @transform_8, window_bounds = array<i64: 256, 1024>}]} {
    %c0_i32 = arith.constant 0 : i32
    %0 = arith.cmpi eq, %arg1, %c0_i32 : i32
    %1 = arith.extui %0 : i1 to i32
    %c0_i32_0 = arith.constant 0 : i32
    %2 = arith.cmpi ne, %1, %c0_i32_0 : i32
    scf.if %2 {
      %c0_6 = arith.constant 0 : index
      %c0_7 = arith.constant 0 : index
      %8 = vector.load %arg2[%c0_6, %c0_7] : memref<256x256xbf16, #tpu.memory_space<vmem>>, vector<256x256xbf16>
      %c0_8 = arith.constant 0 : index
      %c0_9 = arith.constant 0 : index
      %9 = vector.load %arg3[%c0_8, %c0_9] : memref<256x256xbf16, #tpu.memory_space<vmem>>, vector<256x256xbf16>
      %cst_10 = arith.constant dense<0.000000e+00> : vector<256x256xf32>
      %10 = tpu.matmul %8, %9, %cst_10 {dimension_numbers = #tpu.dot_dimension_numbers<[1], [1], [0], [0], [0, 0, 1, 0], [], []>} : vector<256x256xbf16>, vector<256x256xbf16>, vector<256x256xf32> -> vector<256x256xf32>
      %c0_11 = arith.constant 0 : index
      %c0_12 = arith.constant 0 : index
      %11 = vector.load %arg4[%c0_11, %c0_12] : memref<1x256xf32, #tpu.memory_space<vmem>>, vector<1x256xf32>
      %12 = vector.broadcast %11 : vector<1x256xf32> to vector<256x256xf32>
      %13 = arith.addf %10, %12 : vector<256x256xf32>
      %cst_13 = arith.constant 5.000000e-01 : f32
      %14 = vector.broadcast %cst_13 : f32 to vector<256x256xf32>
      %15 = arith.mulf %14, %13 : vector<256x256xf32>
      %cst_14 = arith.constant 2.000000e+00 : f32
      %16 = math.sqrt %cst_14 : f32
      %cst_15 = arith.constant 1.000000e+00 : f32
      %17 = arith.divf %cst_15, %16 : f32
      %18 = vector.broadcast %17 : f32 to vector<256x256xf32>
      %19 = arith.mulf %13, %18 : vector<256x256xf32>
      %20 = math.erf %19 : vector<256x256xf32>
      %cst_16 = arith.constant 1.000000e+00 : f32
      %21 = vector.broadcast %cst_16 : f32 to vector<256x256xf32>
      %22 = arith.addf %21, %20 : vector<256x256xf32>
      %23 = arith.mulf %15, %22 : vector<256x256xf32>
      %c0_17 = arith.constant 0 : index
      %c0_18 = arith.constant 0 : index
      %24 = vector.load %arg5[%c0_17, %c0_18] : memref<256x256xbf16, #tpu.memory_space<vmem>>, vector<256x256xbf16>
      %25 = arith.truncf %23 : vector<256x256xf32> to vector<256x256xbf16>
      %cst_19 = arith.constant dense<0.000000e+00> : vector<256x256xf32>
      %26 = tpu.matmul %25, %24, %cst_19 {dimension_numbers = #tpu.dot_dimension_numbers<[1], [1], [0], [0], [0, 0, 1, 0], [], []>} : vector<256x256xbf16>, vector<256x256xbf16>, vector<256x256xf32> -> vector<256x256xf32>
      %c0_20 = arith.constant 0 : index
      %c0_21 = arith.constant 0 : index
      %27 = vector.load %arg6[%c0_20, %c0_21] : memref<1x256xf32, #tpu.memory_space<vmem>>, vector<1x256xf32>
      %28 = vector.broadcast %27 : vector<1x256xf32> to vector<256x256xf32>
      %29 = arith.addf %26, %28 : vector<256x256xf32>
      %cst_22 = arith.constant 5.000000e-01 : f32
      %30 = vector.broadcast %cst_22 : f32 to vector<256x256xf32>
      %31 = arith.mulf %30, %29 : vector<256x256xf32>
      %cst_23 = arith.constant 2.000000e+00 : f32
      %32 = math.sqrt %cst_23 : f32
      %cst_24 = arith.constant 1.000000e+00 : f32
      %33 = arith.divf %cst_24, %32 : f32
      %34 = vector.broadcast %33 : f32 to vector<256x256xf32>
      %35 = arith.mulf %29, %34 : vector<256x256xf32>
      %36 = math.erf %35 : vector<256x256xf32>
      %cst_25 = arith.constant 1.000000e+00 : f32
      %37 = vector.broadcast %cst_25 : f32 to vector<256x256xf32>
      %38 = arith.addf %37, %36 : vector<256x256xf32>
      %39 = arith.mulf %31, %38 : vector<256x256xf32>
      %c0_26 = arith.constant 0 : index
      %c0_27 = arith.constant 0 : index
      %40 = vector.load %arg7[%c0_26, %c0_27] : memref<256x256xbf16, #tpu.memory_space<vmem>>, vector<256x256xbf16>
      %41 = arith.truncf %39 : vector<256x256xf32> to vector<256x256xbf16>
      %cst_28 = arith.constant dense<0.000000e+00> : vector<256x256xf32>
      %42 = tpu.matmul %41, %40, %cst_28 {dimension_numbers = #tpu.dot_dimension_numbers<[1], [1], [0], [0], [0, 0, 1, 0], [], []>} : vector<256x256xbf16>, vector<256x256xbf16>, vector<256x256xf32> -> vector<256x256xf32>
      %c0_29 = arith.constant 0 : index
      %c0_30 = arith.constant 0 : index
      %43 = vector.load %arg8[%c0_29, %c0_30] : memref<1x256xf32, #tpu.memory_space<vmem>>, vector<1x256xf32>
      %44 = vector.broadcast %43 : vector<1x256xf32> to vector<256x256xf32>
      %45 = arith.addf %42, %44 : vector<256x256xf32>
      %46 = arith.mulf %45, %45 : vector<256x256xf32>
      %cst_31 = arith.constant dense<0.000000e+00> : vector<256xf32>
      %47 = vector.multi_reduction <add>, %46, %cst_31 [1] : vector<256x256xf32> to vector<256xf32>
      %48 = vector.shape_cast %47 : vector<256xf32> to vector<256x1xf32>
      %cst_32 = arith.constant 1.000000e-24 : f32
      %49 = vector.broadcast %cst_32 : f32 to vector<256x1xf32>
      %50 = arith.maximumf %48, %49 : vector<256x1xf32>
      %51 = math.rsqrt %50 : vector<256x1xf32>
      %52 = vector.broadcast %51 : vector<256x1xf32> to vector<256x256xf32>
      %53 = arith.mulf %45, %52 : vector<256x256xf32>
      %54 = arith.truncf %53 : vector<256x256xf32> to vector<256x256xbf16>
      %c0_33 = arith.constant 0 : index
      %c0_34 = arith.constant 0 : index
      %55 = vector.load %arg11[%c0_33, %c0_34] : memref<256x256xbf16, #tpu.memory_space<vmem>>, vector<256x256xbf16>
      tpu.vector_store %arg11[%c0_33, %c0_34], %54 {strides = array<i32>} : memref<256x256xbf16, #tpu.memory_space<vmem>>, vector<256x256xbf16>,
    } else {
    }
    %c0 = arith.constant 0 : index
    %c0_1 = arith.constant 0 : index
    %3 = vector.load %arg11[%c0, %c0_1] : memref<256x256xbf16, #tpu.memory_space<vmem>>, vector<256x256xbf16>
    %c0_2 = arith.constant 0 : index
    %c0_3 = arith.constant 0 : index
    %4 = vector.load %arg9[%c0_2, %c0_3] : memref<1024x256xbf16, #tpu.memory_space<vmem>>, vector<1024x256xbf16>
    %cst = arith.constant dense<0.000000e+00> : vector<256x1024xf32>
    %5 = tpu.matmul %3, %4, %cst {dimension_numbers = #tpu.dot_dimension_numbers<[1], [1], [0], [0], [0, 0, 1, 0], [], []>} : vector<256x256xbf16>, vector<1024x256xbf16>, vector<256x1024xf32> -> vector<256x1024xf32>
    %6 = arith.truncf %5 : vector<256x1024xf32> to vector<256x1024xbf16>
    %c0_4 = arith.constant 0 : index
    %c0_5 = arith.constant 0 : index
    %7 = vector.load %arg10[%c0_4, %c0_5] : memref<256x1024xbf16, #tpu.memory_space<vmem>>, vector<256x1024xbf16>
    tpu.vector_store %arg10[%c0_4, %c0_5], %6 {strides = array<i32>} : memref<256x1024xbf16, #tpu.memory_space<vmem>>, vector<256x1024xbf16>,
    return
  }
  func.func @transform_0(%arg0: i32, %arg1: i32) -> (i32, i32) {
    %c0_i32 = arith.constant 0 : i32
    %c0_i32_0 = arith.constant 0 : i32
    return %arg0, %c0_i32 : i32, i32
  }
  func.func @transform_1(%arg0: i32, %arg1: i32) -> (i32, i32) {
    %c0_i32 = arith.constant 0 : i32
    %c0_i32_0 = arith.constant 0 : i32
    %c0_i32_1 = arith.constant 0 : i32
    return %c0_i32, %c0_i32_0 : i32, i32
  }
  func.func @transform_2(%arg0: i32, %arg1: i32) -> (i32, i32) {
    %c0_i32 = arith.constant 0 : i32
    %c0_i32_0 = arith.constant 0 : i32
    %c0_i32_1 = arith.constant 0 : i32
    return %c0_i32, %c0_i32_0 : i32, i32
  }
  func.func @transform_3(%arg0: i32, %arg1: i32) -> (i32, i32) {
    %c0_i32 = arith.constant 0 : i32
    %c0_i32_0 = arith.constant 0 : i32
    %c0_i32_1 = arith.constant 0 : i32
    return %c0_i32, %c0_i32_0 : i32, i32
  }
  func.func @transform_4(%arg0: i32, %arg1: i32) -> (i32, i32) {
    %c0_i32 = arith.constant 0 : i32
    %c0_i32_0 = arith.constant 0 : i32
    %c0_i32_1 = arith.constant 0 : i32
    return %c0_i32, %c0_i32_0 : i32, i32
  }
  func.func @transform_5(%arg0: i32, %arg1: i32) -> (i32, i32) {
    %c0_i32 = arith.constant 0 : i32
    %c0_i32_0 = arith.constant 0 : i32
    %c0_i32_1 = arith.constant 0 : i32
    return %c0_i32, %c0_i32_0 : i32, i32
  }
  func.func @transform_6(%arg0: i32, %arg1: i32) -> (i32, i32) {
    %c0_i32 = arith.constant 0 : i32
    %c0_i32_0 = arith.constant 0 : i32
    %c0_i32_1 = arith.constant 0 : i32
    return %c0_i32, %c0_i32_0 : i32, i32
  }
  func.func @transform_7(%arg0: i32, %arg1: i32) -> (i32, i32) {
    %c0_i32 = arith.constant 0 : i32
    %c0_i32_0 = arith.constant 0 : i32
    return %arg1, %c0_i32 : i32, i32
  }
  func.func @transform_8(%arg0: i32, %arg1: i32) -> (i32, i32) {
    %c0_i32 = arith.constant 0 : i32
    return %arg0, %arg1 : i32, i32
  }
}

</mosaic_0001>

<llo_original>
// kernel: tpu_custom_call.1
$region0: #{tpu_custom_call.1}
  #allocation0 [shape = 'u32[]', space=smem, size = 0x4, offset = 0x4, fixed_abs, tag = 'smem constant byte address 0x4 - core index']
  #allocation1 [shape = 'u32[144,128]{1,0:T(1,128)}', space=vmem, size = 0x12000, scoped, tag = 'internal scratch']
  #allocation2 [shape = 'bf16[256,256]{1,0:T(8,128)(2,1)}', space=vmem, size = 0x20000, scoped, tag = 'scratch operand']
  %s0 = inlined_call_operand.hbm [shape: bf16[512,256], index: 0, kind: input, shape index: {}]
  %s1 = inlined_call_operand.hbm [shape: bf16[256,256], index: 1, kind: input, shape index: {}]
  %s2 = inlined_call_operand.hbm [shape: f32[1,256], index: 2, kind: input, shape index: {}]
  %s3 = inlined_call_operand.hbm [shape: bf16[256,256], index: 3, kind: input, shape index: {}]
  %s4 = inlined_call_operand.hbm [shape: f32[1,256], index: 4, kind: input, shape index: {}]
  %s5 = inlined_call_operand.hbm [shape: bf16[256,256], index: 5, kind: input, shape index: {}]
  %s6 = inlined_call_operand.hbm [shape: f32[1,256], index: 6, kind: input, shape index: {}]
  %s7 = inlined_call_operand.hbm [shape: bf16[2048,256], index: 7, kind: input, shape index: {}]
  %s8 = inlined_call_operand.hbm [shape: bf16[512,2048], index: 8, kind: output, shape index: {}]
  %s9 = sld [smem:[#allocation0]]
  $region101: #{tpu_custom_call.1} parent=0
    _
  %s11 = ssub.s32 1, %s9
  %s12 = scalar_select 0, %s11, %s9
  $region1: #{tpu_custom_call.1} parent=0
    #allocation3 [shape = 'u8[262144]{0}', space=vmem, size = 0x40000, scoped, tag = 'input window, operand 0']
    #allocation4 [shape = 's32[2]{0}', space=sflag, size = 0x8, scoped, tag = 'scoped memory for tpu_custom_call.1']
    #allocation5 [shape = 's32[2]{0}', space=sflag, size = 0x8, scoped, tag = 'scoped memory for tpu_custom_call.1']
    #allocation6 [shape = 'u8[131072]{0}', space=vmem, size = 0x20000, scoped, tag = 'input window, operand 1, single buffered']
    #allocation7 [shape = 's32[1]{0}', space=sflag, size = 0x4, scoped, tag = 'scoped memory for tpu_custom_call.1']
    #allocation8 [shape = 'u8[1024]{0}', space=vmem, size = 0x400, scoped, tag = 'input window, operand 2, single buffered']
    #allocation9 [shape = 'u8[131072]{0}', space=vmem, size = 0x20000, scoped, tag = 'input window, operand 3, single buffered']
    #allocation10 [shape = 's32[1]{0}', space=sflag, size = 0x4, scoped, tag = 'scoped memory for tpu_custom_call.1']
    #allocation11 [shape = 'u8[1024]{0}', space=vmem, size = 0x400, scoped, tag = 'input window, operand 4, single buffered']
    #allocation12 [shape = 'u8[131072]{0}', space=vmem, size = 0x20000, scoped, tag = 'input window, operand 5, single buffered']
    #allocation13 [shape = 's32[1]{0}', space=sflag, size = 0x4, scoped, tag = 'scoped memory for tpu_custom_call.1']
    #allocation14 [shape = 'u8[1024]{0}', space=vmem, size = 0x400, scoped, tag = 'input window, operand 6, single buffered']
    #allocation15 [shape = 'u8[1048576]{0}', space=vmem, size = 0x100000, scoped, tag = 'input window, operand 7']
    #allocation16 [shape = 's32[2]{0}', space=sflag, size = 0x8, scoped, tag = 'scoped memory for tpu_custom_call.1']
    #allocation17 [shape = 'u8[1048576]{0}', space=vmem, size = 0x100000, scoped, tag = 'output window, operand 0']
    %13 = vsyncpa [#allocation4], 0
    %s14 = scalar_lea.sflag [#allocation4], 1
    %15 = vsyncpa %s14, 0
    %16 = vsyncpa [#allocation7], 0
    %17 = vsyncpa [#allocation10], 0
    %18 = vsyncpa [#allocation13], 0
    %19 = vsyncpa [#allocation16], 0
    %s20 = scalar_lea.sflag [#allocation16], 1
    %21 = vsyncpa %s20, 0
    %22 = vsyncpa [#allocation5], 0
    %s23 = scalar_lea.sflag [#allocation5], 1
    %24 = vsyncpa %s23, 0
    loop: start=0, step=1, limit=6
    $region2: #{tpu_custom_call.1} parent=1 // loop_pre_header
      _
    $region3: #{tpu_custom_call.1} parent=1 // loop_header
      %s26 = sphi 0, %s30
      %p27 = scmp.ge.s32.totalorder %s26, 6
      %s33 = sphi 0, %s45
      %s34 = sphi 0, %s41
      %s35 = sphi 0, %s33
      %s36 = sphi 0, %s34
      %s37 = sphi 0, %s35
      %s38 = sphi 0, %s36
      %s48 = sphi 0, %s50
      %s51 = sphi 0, %s48
      %s52 = sphi 0, %s51
      %s68 = sphi 0, %s52
      %s72 = sphi 0, %s72
      %s74 = sphi 0, %s72
      %s75 = sphi 0, %s74
      %s89 = sphi 0, %s75
      %s93 = sphi 0, %s93
      %s95 = sphi 0, %s93
      %s96 = sphi 0, %s95
      %s110 = sphi 0, %s96
      %s114 = sphi 0, %s114
      %s116 = sphi 0, %s114
      %s117 = sphi 0, %s116
      %s131 = sphi 0, %s117
      %s135 = sphi 0, %s135
      %s137 = sphi 0, %s135
      %s138 = sphi 0, %s137
      %s152 = sphi 0, %s138
      %s156 = sphi 0, %s156
      %s158 = sphi 0, %s156
      %s159 = sphi 0, %s158
      %s173 = sphi 0, %s159
      %s177 = sphi 0, %s177
      %s179 = sphi 0, %s177
      %s180 = sphi 0, %s179
      %s194 = sphi 0, %s180
      %s200 = sphi 0, %s202
      %s203 = sphi 0, %s200
      %s204 = sphi 0, %s203
      %s220 = sphi 0, %s204
      %s228 = sphi 0, %s230
      %s231 = sphi 0, %s228
      %s232 = sphi 0, %s231
      %s248 = sphi 0, %s232
    $region4: #{tpu_custom_call.1} parent=1 // loop_header_branch
      %29 = sbr.rel (%p27) target = $region8
    $region5: #{tpu_custom_call.1} parent=1 // loop_body
      %s31 = ssub.s32 %s26, 1
      %s32 = ssub.s32 %s26, 2
      %s39 = sadd.s32 1, %s34
      %p40 = scmp.ge.s32.totalorder %s39, 2
      %s41 = scalar_select %p40, 0, %s39
      %s42 = sadd.s32 1, %s33
      %s43 = scalar_select %p40, %s42, %s33
      %p44 = scmp.ge.s32.totalorder %s43, 2
      %s45 = scalar_select %p44, 0, %s43
      %s46 = ssub.s32 %s33, %s45
      %p47 = scmp.eq.s32.totalorder %s46, 0
      %s49 = sadd.s32 %s48, 1
      %s50 = scalar_select %p47, %s48, %s49
      %p53 = pneg %p47
      %p54 = scmp.eq.s32.totalorder %s26, 3
      %p55 = por %p53, %p54
      %p56 = scmp.ne.s32.totalorder %s48, %s51
      %p57 = scmp.eq.s32.totalorder %s26, 0
      %p58 = por %p56, %p57
      %p59 = scmp.ne.s32.totalorder %s48, %s51
      %p60 = scmp.eq.s32.totalorder %s31, 3
      %p61 = por %p59, %p60
      %p62 = scmp.ne.s32.totalorder %s51, %s52
      %p63 = scmp.eq.s32.totalorder %s31, 0
      %p64 = por %p62, %p63
      %p65 = scmp.ne.s32.totalorder %s51, %s52
      %p66 = scmp.eq.s32.totalorder %s32, 3
      %p67 = por %p65, %p66
      %p69 = scmp.ne.s32.totalorder %s52, %s68
      %p70 = scmp.eq.s32.totalorder %s32, 0
      %p71 = por %p69, %p70
      %s73 = sadd.s32 %s72, 1
      %p76 = scmp.eq.s32.totalorder %s26, 3
      %p77 = scmp.ne.s32.totalorder %s72, %s74
      %p78 = scmp.eq.s32.totalorder %s26, 0
      %p79 = por %p77, %p78
      %p80 = scmp.ne.s32.totalorder %s72, %s74
      %p81 = scmp.eq.s32.totalorder %s31, 3
      %p82 = por %p80, %p81
      %p83 = scmp.ne.s32.totalorder %s74, %s75
      %p84 = scmp.eq.s32.totalorder %s31, 0
      %p85 = por %p83, %p84
      %p86 = scmp.ne.s32.totalorder %s74, %s75
      %p87 = scmp.eq.s32.totalorder %s32, 3
      %p88 = por %p86, %p87
      %p90 = scmp.ne.s32.totalorder %s75, %s89
      %p91 = scmp.eq.s32.totalorder %s32, 0
      %p92 = por %p90, %p91
      %s94 = sadd.s32 %s93, 1
      %p97 = scmp.eq.s32.totalorder %s26, 3
      %p98 = scmp.ne.s32.totalorder %s93, %s95
      %p99 = scmp.eq.s32.totalorder %s26, 0
      %p100 = por %p98, %p99
      %p101 = scmp.ne.s32.totalorder %s93, %s95
      %p102 = scmp.eq.s32.totalorder %s31, 3
      %p103 = por %p101, %p102
      %p104 = scmp.ne.s32.totalorder %s95, %s96
      %p105 = scmp.eq.s32.totalorder %s31, 0
      %p106 = por %p104, %p105
      %p107 = scmp.ne.s32.totalorder %s95, %s96
      %p108 = scmp.eq.s32.totalorder %s32, 3
      %p109 = por %p107, %p108
      %p111 = scmp.ne.s32.totalorder %s96, %s110
      %p112 = scmp.eq.s32.totalorder %s32, 0
      %p113 = por %p111, %p112
      %s115 = sadd.s32 %s114, 1
      %p118 = scmp.eq.s32.totalorder %s26, 3
      %p119 = scmp.ne.s32.totalorder %s114, %s116
      %p120 = scmp.eq.s32.totalorder %s26, 0
      %p121 = por %p119, %p120
      %p122 = scmp.ne.s32.totalorder %s114, %s116
      %p123 = scmp.eq.s32.totalorder %s31, 3
      %p124 = por %p122, %p123
      %p125 = scmp.ne.s32.totalorder %s116, %s117
      %p126 = scmp.eq.s32.totalorder %s31, 0
      %p127 = por %p125, %p126
      %p128 = scmp.ne.s32.totalorder %s116, %s117
      %p129 = scmp.eq.s32.totalorder %s32, 3
      %p130 = por %p128, %p129
      %p132 = scmp.ne.s32.totalorder %s117, %s131
      %p133 = scmp.eq.s32.totalorder %s32, 0
      %p134 = por %p132, %p133
      %s136 = sadd.s32 %s135, 1
      %p139 = scmp.eq.s32.totalorder %s26, 3
      %p140 = scmp.ne.s32.totalorder %s135, %s137
      %p141 = scmp.eq.s32.totalorder %s26, 0
      %p142 = por %p140, %p141
      %p143 = scmp.ne.s32.totalorder %s135, %s137
      %p144 = scmp.eq.s32.totalorder %s31, 3
      %p145 = por %p143, %p144
      %p146 = scmp.ne.s32.totalorder %s137, %s138
      %p147 = scmp.eq.s32.totalorder %s31, 0
      %p148 = por %p146, %p147
      %p149 = scmp.ne.s32.totalorder %s137, %s138
      %p150 = scmp.eq.s32.totalorder %s32, 3
      %p151 = por %p149, %p150
      %p153 = scmp.ne.s32.totalorder %s138, %s152
      %p154 = scmp.eq.s32.totalorder %s32, 0
      %p155 = por %p153, %p154
      %s157 = sadd.s32 %s156, 1
      %p160 = scmp.eq.s32.totalorder %s26, 3
      %p161 = scmp.ne.s32.totalorder %s156, %s158
      %p162 = scmp.eq.s32.totalorder %s26, 0
      %p163 = por %p161, %p162
      %p164 = scmp.ne.s32.totalorder %s156, %s158
      %p165 = scmp.eq.s32.totalorder %s31, 3
      %p166 = por %p164, %p165
      %p167 = scmp.ne.s32.totalorder %s158, %s159
      %p168 = scmp.eq.s32.totalorder %s31, 0
      %p169 = por %p167, %p168
      %p170 = scmp.ne.s32.totalorder %s158, %s159
      %p171 = scmp.eq.s32.totalorder %s32, 3
      %p172 = por %p170, %p171
      %p174 = scmp.ne.s32.totalorder %s159, %s173
      %p175 = scmp.eq.s32.totalorder %s32, 0
      %p176 = por %p174, %p175
      %s178 = sadd.s32 %s177, 1
      %p181 = scmp.eq.s32.totalorder %s26, 3
      %p182 = scmp.ne.s32.totalorder %s177, %s179
      %p183 = scmp.eq.s32.totalorder %s26, 0
      %p184 = por %p182, %p183
      %p185 = scmp.ne.s32.totalorder %s177, %s179
      %p186 = scmp.eq.s32.totalorder %s31, 3
      %p187 = por %p185, %p186
      %p188 = scmp.ne.s32.totalorder %s179, %s180
      %p189 = scmp.eq.s32.totalorder %s31, 0
      %p190 = por %p188, %p189
      %p191 = scmp.ne.s32.totalorder %s179, %s180
      %p192 = scmp.eq.s32.totalorder %s32, 3
      %p193 = por %p191, %p192
      %p195 = scmp.ne.s32.totalorder %s180, %s194
      %p196 = scmp.eq.s32.totalorder %s32, 0
      %p197 = por %p195, %p196
      %s198 = ssub.s32 %s34, %s41
      %p199 = scmp.eq.s32.totalorder %s198, 0
      %s201 = sadd.s32 %s200, 1
      %s202 = scalar_select %p199, %s200, %s201
      %p205 = pneg %p199
      %p206 = scmp.eq.s32.totalorder %s26, 3
      %p207 = por %p205, %p206
      %p208 = scmp.ne.s32.totalorder %s200, %s203
      %p209 = scmp.eq.s32.totalorder %s26, 0
      %p210 = por %p208, %p209
      %p211 = scmp.ne.s32.totalorder %s200, %s203
      %p212 = scmp.eq.s32.totalorder %s31, 3
      %p213 = por %p211, %p212
      %p214 = scmp.ne.s32.totalorder %s203, %s204
      %p215 = scmp.eq.s32.totalorder %s31, 0
      %p216 = por %p214, %p215
      %p217 = scmp.ne.s32.totalorder %s203, %s204
      %p218 = scmp.eq.s32.totalorder %s32, 3
      %p219 = por %p217, %p218
      %p221 = scmp.ne.s32.totalorder %s204, %s220
      %p222 = scmp.eq.s32.totalorder %s32, 0
      %p223 = por %p221, %p222
      %s224 = ssub.s32 %s33, %s45
      %s225 = ssub.s32 %s34, %s41
      %s226 = sor.u32 %s224, %s225
      %p227 = scmp.eq.s32.totalorder %s226, 0
      %s229 = sadd.s32 %s228, 1
      %s230 = scalar_select %p227, %s228, %s229
      %p233 = pneg %p227
      %p234 = scmp.eq.s32.totalorder %s26, 3
      %p235 = por %p233, %p234
      %p236 = scmp.ne.s32.totalorder %s228, %s231
      %p237 = scmp.eq.s32.totalorder %s26, 0
      %p238 = por %p236, %p237
      %p239 = scmp.ne.s32.totalorder %s228, %s231
      %p240 = scmp.eq.s32.totalorder %s31, 3
      %p241 = por %p239, %p240
      %p242 = scmp.ne.s32.totalorder %s231, %s232
      %p243 = scmp.eq.s32.totalorder %s31, 0
      %p244 = por %p242, %p243
      %p245 = scmp.ne.s32.totalorder %s231, %s232
      %p246 = scmp.eq.s32.totalorder %s32, 3
      %p247 = por %p245, %p246
      %p249 = scmp.ne.s32.totalorder %s232, %s248
      %p250 = scmp.eq.s32.totalorder %s32, 0
      %p251 = por %p249, %p250
      %p252 = scmp.le.s32.totalorder 1, %s26
      %p253 = scmp.lt.s32.totalorder %s26, 5
      %p254 = pnand %p252, %p253
      %p255 = pneg %p254
      // Predicated region
      $region9: #{tpu_custom_call.1} parent=5 // pred_check
        _
      $region10: #{tpu_custom_call.1} parent=5 // pred_check_branch
        %257 = sbr.rel (%p254) target = $region12
      $region11: #{tpu_custom_call.1} parent=5 // pred_region
        %s258 = ssub.s32 %s26, 1
        // Predicated region
        $region13: #{tpu_custom_call.1} parent=11 // pred_check
          %p259 = pneg %p85
        $region14: #{tpu_custom_call.1} parent=11 // pred_check_branch
          %261 = sbr.rel (%p259) target = $region16
        $region15: #{tpu_custom_call.1} parent=11 // pred_region
          %s263 = ssub.s32 4096, 4096
          %264 = vsyncadd [#allocation7], %s263
          %s265 = sshll.u32 [#allocation6], 4
          %s266 = int_to_ptr.vmem [resolvable:$true] %s265
          %271 = dma.hbm_to_vmem [thread:$0]  %s1, 4096, %s266, [#allocation7], 128, 128, 8
        $region16: #{tpu_custom_call.1} parent=11 // pred_fallthru
          _
        // Predicated region
        $region17: #{tpu_custom_call.1} parent=11 // pred_check
          %p272 = pneg %p106
        $region18: #{tpu_custom_call.1} parent=11 // pred_check_branch
          %274 = sbr.rel (%p272) target = $region20
        $region19: #{tpu_custom_call.1} parent=11 // pred_region
          %s276 = ssub.s32 32, 32
          %277 = vsyncadd [#allocation7], %s276
          %s279 = sshll.u32 [#allocation8], 4
          %s280 = int_to_ptr.vmem [resolvable:$true] %s279
          %282 = dma.hbm_to_vmem [thread:$0]  %s2, 32, %s280, [#allocation7]
        $region20: #{tpu_custom_call.1} parent=11 // pred_fallthru
          _
        // Predicated region
        $region21: #{tpu_custom_call.1} parent=11 // pred_check
          %p283 = pneg %p127
        $region22: #{tpu_custom_call.1} parent=11 // pred_check_branch
          %285 = sbr.rel (%p283) target = $region24
        $region23: #{tpu_custom_call.1} parent=11 // pred_region
          %s287 = ssub.s32 4096, 4096
          %288 = vsyncadd [#allocation10], %s287
          %s289 = sshll.u32 [#allocation9], 4
          %s290 = int_to_ptr.vmem [resolvable:$true] %s289
          %295 = dma.hbm_to_vmem [thread:$0]  %s3, 4096, %s290, [#allocation10], 128, 128, 8
        $region24: #{tpu_custom_call.1} parent=11 // pred_fallthru
          _
        // Predicated region
        $region25: #{tpu_custom_call.1} parent=11 // pred_check
          %p296 = pneg %p148
        $region26: #{tpu_custom_call.1} parent=11 // pred_check_branch
          %298 = sbr.rel (%p296) target = $region28
        $region27: #{tpu_custom_call.1} parent=11 // pred_region
          %s300 = ssub.s32 32, 32
          %301 = vsyncadd [#allocation10], %s300
          %s303 = sshll.u32 [#allocation11], 4
          %s304 = int_to_ptr.vmem [resolvable:$true] %s303
          %306 = dma.hbm_to_vmem [thread:$0]  %s4, 32, %s304, [#allocation10]
        $region28: #{tpu_custom_call.1} parent=11 // pred_fallthru
          _
        // Predicated region
        $region29: #{tpu_custom_call.1} parent=11 // pred_check
          %p307 = pneg %p169
        $region30: #{tpu_custom_call.1} parent=11 // pred_check_branch
          %309 = sbr.rel (%p307) target = $region32
        $region31: #{tpu_custom_call.1} parent=11 // pred_region
          %s311 = ssub.s32 4096, 4096
          %312 = vsyncadd [#allocation13], %s311
          %s313 = sshll.u32 [#allocation12], 4
          %s314 = int_to_ptr.vmem [resolvable:$true] %s313
          %319 = dma.hbm_to_vmem [thread:$0]  %s5, 4096, %s314, [#allocation13], 128, 128, 8
        $region32: #{tpu_custom_call.1} parent=11 // pred_fallthru
          _
        // Predicated region
        $region33: #{tpu_custom_call.1} parent=11 // pred_check
          %p320 = pneg %p190
        $region34: #{tpu_custom_call.1} parent=11 // pred_check_branch
          %322 = sbr.rel (%p320) target = $region36
        $region35: #{tpu_custom_call.1} parent=11 // pred_region
          %s324 = ssub.s32 32, 32
          %325 = vsyncadd [#allocation13], %s324
          %s327 = sshll.u32 [#allocation14], 4
          %s328 = int_to_ptr.vmem [resolvable:$true] %s327
          %330 = dma.hbm_to_vmem [thread:$0]  %s6, 32, %s328, [#allocation13]
        $region36: #{tpu_custom_call.1} parent=11 // pred_fallthru
          _
      $region12: #{tpu_custom_call.1} parent=5 // pred_fallthru
        _
      %p331 = scmp.lt.s32.totalorder %s26, 4
      // Predicated region
      $region37: #{tpu_custom_call.1} parent=5 // pred_check
        %p332 = pneg %p331
      $region38: #{tpu_custom_call.1} parent=5 // pred_check_branch
        %334 = sbr.rel (%p332) target = $region40
      $region39: #{tpu_custom_call.1} parent=5 // pred_region
        // Predicated region
        $region41: #{tpu_custom_call.1} parent=39 // pred_check
          %p335 = pneg %p58
        $region42: #{tpu_custom_call.1} parent=39 // pred_check_branch
          %337 = sbr.rel (%p335) target = $region44
        $region43: #{tpu_custom_call.1} parent=39 // pred_region
          %s338 = sand.u32 %s48, 1
          %s339 = scalar_lea.sflag [#allocation4], %s338
          %s340 = sand.u32 %s48, 1
          %s341 = smul.addr %s340, 256
          %s342 = scalar_lea.vmem [#allocation3], %s341
          %s343 = smul.u32 32, %s33
          %s345 = ssub.s32 4096, 4096
          %346 = vsyncadd %s339, %s345
          %s347 = smul.addr %s343, 2
          %s348 = smul.addr %s347, 64
          %s349 = scalar_lea.hbm %s0, %s348
          %s350 = sshll.u32 %s342, 4
          %s351 = int_to_ptr.vmem [resolvable:$true] %s350
          %356 = dma.hbm_to_vmem [thread:$0]  %s349, 4096, %s351, %s339, 128, 128, 8
        $region44: #{tpu_custom_call.1} parent=39 // pred_fallthru
          _
        // Predicated region
        $region45: #{tpu_custom_call.1} parent=39 // pred_check
          %p357 = pneg %p210
        $region46: #{tpu_custom_call.1} parent=39 // pred_check_branch
          %359 = sbr.rel (%p357) target = $region48
        $region47: #{tpu_custom_call.1} parent=39 // pred_region
          %s360 = sand.u32 %s200, 1
          %s361 = scalar_lea.sflag [#allocation16], %s360
          %s362 = sand.u32 %s200, 1
          %s363 = smul.addr %s362, 1024
          %s364 = scalar_lea.vmem [#allocation15], %s363
          %s365 = smul.u32 128, %s34
          %s367 = ssub.s32 16384, 16384
          %368 = vsyncadd %s361, %s367
          %s369 = smul.addr %s365, 2
          %s370 = smul.addr %s369, 64
          %s371 = scalar_lea.hbm %s7, %s370
          %s372 = sshll.u32 %s364, 4
          %s373 = int_to_ptr.vmem [resolvable:$true] %s372
          %378 = dma.hbm_to_vmem [thread:$0]  %s371, 16384, %s373, %s361, 128, 128, 8
        $region48: #{tpu_custom_call.1} parent=39 // pred_fallthru
          _
      $region40: #{tpu_custom_call.1} parent=5 // pred_fallthru
        _
      %p379 = scmp.le.s32.totalorder 1, %s26
      %p380 = scmp.lt.s32.totalorder %s26, 5
      %p381 = pnand %p379, %p380
      %p382 = pneg %p381
      // Predicated region
      $region49: #{tpu_custom_call.1} parent=5 // pred_check
        _
      $region50: #{tpu_custom_call.1} parent=5 // pred_check_branch
        %384 = sbr.rel (%p381) target = $region52
      $region51: #{tpu_custom_call.1} parent=5 // pred_region
        %s385 = ssub.s32 %s26, 1
        %s386 = sand.u32 %s51, 1
        %s387 = scalar_lea.sflag [#allocation4], %s386
        %s388 = sand.u32 %s51, 1
        %s389 = smul.addr %s388, 256
        %s390 = scalar_lea.vmem [#allocation3], %s389
        // Predicated region
        $region53: #{tpu_custom_call.1} parent=51 // pred_check
          %p391 = pneg %p64
        $region54: #{tpu_custom_call.1} parent=51 // pred_check_branch
          %393 = sbr.rel (%p391) target = $region56
        $region55: #{tpu_custom_call.1} parent=51 // pred_region
          %394 = dma.done %s387, 4096
        $region56: #{tpu_custom_call.1} parent=51 // pred_fallthru
          _
        // Predicated region
        $region57: #{tpu_custom_call.1} parent=51 // pred_check
          %p395 = pneg %p85
        $region58: #{tpu_custom_call.1} parent=51 // pred_check_branch
          %397 = sbr.rel (%p395) target = $region60
        $region59: #{tpu_custom_call.1} parent=51 // pred_region
          %398 = dma.done [#allocation7], 4096
        $region60: #{tpu_custom_call.1} parent=51 // pred_fallthru
          _
        // Predicated region
        $region61: #{tpu_custom_call.1} parent=51 // pred_check
          %p399 = pneg %p106
        $region62: #{tpu_custom_call.1} parent=51 // pred_check_branch
          %401 = sbr.rel (%p399) target = $region64
        $region63: #{tpu_custom_call.1} parent=51 // pred_region
          %402 = dma.done [#allocation7], 32
        $region64: #{tpu_custom_call.1} parent=51 // pred_fallthru
          _
        // Predicated region
        $region65: #{tpu_custom_call.1} parent=51 // pred_check
          %p403 = pneg %p127
        $region66: #{tpu_custom_call.1} parent=51 // pred_check_branch
          %405 = sbr.rel (%p403) target = $region68
        $region67: #{tpu_custom_call.1} parent=51 // pred_region
          %406 = dma.done [#allocation10], 4096
        $region68: #{tpu_custom_call.1} parent=51 // pred_fallthru
          _
        // Predicated region
        $region69: #{tpu_custom_call.1} parent=51 // pred_check
          %p407 = pneg %p148
        $region70: #{tpu_custom_call.1} parent=51 // pred_check_branch
          %409 = sbr.rel (%p407) target = $region72
        $region71: #{tpu_custom_call.1} parent=51 // pred_region
          %410 = dma.done [#allocation10], 32
        $region72: #{tpu_custom_call.1} parent=51 // pred_fallthru
          _
        // Predicated region
        $region73: #{tpu_custom_call.1} parent=51 // pred_check
          %p411 = pneg %p169
        $region74: #{tpu_custom_call.1} parent=51 // pred_check_branch
          %413 = sbr.rel (%p411) target = $region76
        $region75: #{tpu_custom_call.1} parent=51 // pred_region
          %414 = dma.done [#allocation13], 4096
        $region76: #{tpu_custom_call.1} parent=51 // pred_fallthru
          _
        // Predicated region
        $region77: #{tpu_custom_call.1} parent=51 // pred_check
          %p415 = pneg %p190
        $region78: #{tpu_custom_call.1} parent=51 // pred_check_branch
          %417 = sbr.rel (%p415) target = $region80
        $region79: #{tpu_custom_call.1} parent=51 // pred_region
          %418 = dma.done [#allocation13], 32
        $region80: #{tpu_custom_call.1} parent=51 // pred_fallthru
          _
        %s419 = sand.u32 %s203, 1
        %s420 = scalar_lea.sflag [#allocation16], %s419
        %s421 = sand.u32 %s203, 1
        %s422 = smul.addr %s421, 1024
        %s423 = scalar_lea.vmem [#allocation15], %s422
        // Predicated region
        $region81: #{tpu_custom_call.1} parent=51 // pred_check
          %p424 = pneg %p216
        $region82: #{tpu_custom_call.1} parent=51 // pred_check_branch
          %426 = sbr.rel (%p424) target = $region84
        $region83: #{tpu_custom_call.1} parent=51 // pred_region
          %427 = dma.done %s420, 16384
        $region84: #{tpu_custom_call.1} parent=51 // pred_fallthru
          _
        %s428 = sand.u32 %s51, 1
        %s429 = scalar_lea.sflag [#allocation4], %s428
        %s430 = sand.u32 %s51, 1
        %s431 = smul.addr %s430, 256
        %s432 = scalar_lea.vmem [#allocation3], %s431
        %p433 = pneg %p64
        %p434 = pneg %p61
        %p435 = pneg %p85
        %p436 = pneg %p82
        %p437 = pneg %p106
        %p438 = pneg %p103
        %p439 = pneg %p127
        %p440 = pneg %p124
        %p441 = pneg %p148
        %p442 = pneg %p145
        %p443 = pneg %p169
        %p444 = pneg %p166
        %p445 = pneg %p190
        %p446 = pneg %p187
        %s447 = sand.u32 %s203, 1
        %s448 = scalar_lea.sflag [#allocation16], %s447
        %s449 = sand.u32 %s203, 1
        %s450 = smul.addr %s449, 1024
        %s451 = scalar_lea.vmem [#allocation15], %s450
        %p452 = pneg %p216
        %p453 = pneg %p213
        %p454 = pneg %p244
        %p455 = pneg %p241
        %s456 = sand.u32 %s231, 1
        %s457 = scalar_lea.sflag [#allocation5], %s456
        %s458 = sand.u32 %s231, 1
        %s459 = smul.addr %s458, 1024
        %s460 = scalar_lea.vmem [#allocation17], %s459
        %s461 = smul.u32 32, %s35
        %s462 = smul.u32 128, %s36
        %s463 = smul.u32 32, %s35
        %s464 = smul.u32 8, %s36
        %p465 = scmp.eq.s32.totalorder %s36, 0
        // Predicated region
        $region85: #{tpu_custom_call.1} parent=51 // pred_check
          %p466 = pneg %p465
        $region86: #{tpu_custom_call.1} parent=51 // pred_check_branch
          %468 = sbr.rel (%p466) target = $region88
        $region87: #{tpu_custom_call.1} parent=51 // pred_region
          %v469 = vld [vmem:[%s390] sm:$0xff]
          %v470 = vld [vmem:[%s390 + $0x8] sm:$0xff]
          %v471 = vld [vmem:[%s390 + $0x10] sm:$0xff]
          %v472 = vld [vmem:[%s390 + $0x18] sm:$0xff]
          %v473 = vld [vmem:[%s390 + $0x20] sm:$0xff]
          %v474 = vld [vmem:[%s390 + $0x28] sm:$0xff]
          %v475 = vld [vmem:[%s390 + $0x30] sm:$0xff]
          %v476 = vld [vmem:[%s390 + $0x38] sm:$0xff]
          %v477 = vld [vmem:[%s390 + $0x40] sm:$0xff]
          %v478 = vld [vmem:[%s390 + $0x48] sm:$0xff]
          %v479 = vld [vmem:[%s390 + $0x50] sm:$0xff]
          %v480 = vld [vmem:[%s390 + $0x58] sm:$0xff]
          %v481 = vld [vmem:[%s390 + $0x60] sm:$0xff]
          %v482 = vld [vmem:[%s390 + $0x68] sm:$0xff]
          %v483 = vld [vmem:[%s390 + $0x70] sm:$0xff]
          %v484 = vld [vmem:[%s390 + $0x78] sm:$0xff]
          %v485 = vld [vmem:[%s390 + $0x80] sm:$0xff]
          %v486 = vld [vmem:[%s390 + $0x88] sm:$0xff]
          %v487 = vld [vmem:[%s390 + $0x90] sm:$0xff]
          %v488 = vld [vmem:[%s390 + $0x98] sm:$0xff]
          %v489 = vld [vmem:[%s390 + $0xa0] sm:$0xff]
          %v490 = vld [vmem:[%s390 + $0xa8] sm:$0xff]
          %v491 = vld [vmem:[%s390 + $0xb0] sm:$0xff]
          %v492 = vld [vmem:[%s390 + $0xb8] sm:$0xff]
          %v493 = vld [vmem:[%s390 + $0xc0] sm:$0xff]
          %v494 = vld [vmem:[%s390 + $0xc8] sm:$0xff]
          %v495 = vld [vmem:[%s390 + $0xd0] sm:$0xff]
          %v496 = vld [vmem:[%s390 + $0xd8] sm:$0xff]
          %v497 = vld [vmem:[%s390 + $0xe0] sm:$0xff]
          %v498 = vld [vmem:[%s390 + $0xe8] sm:$0xff]
          %v499 = vld [vmem:[%s390 + $0xf0] sm:$0xff]
          %v500 = vld [vmem:[%s390 + $0xf8] sm:$0xff]
          %v501 = vld [vmem:[#allocation6] sm:$0xff]
          %v502 = vld [vmem:[#allocation6 + $0x8] sm:$0xff]
          %v503 = vld [vmem:[#allocation6 + $0x10] sm:$0xff]
          %v504 = vld [vmem:[#allocation6 + $0x18] sm:$0xff]
          %v505 = vld [vmem:[#allocation6 + $0x20] sm:$0xff]
          %v506 = vld [vmem:[#allocation6 + $0x28] sm:$0xff]
          %v507 = vld [vmem:[#allocation6 + $0x30] sm:$0xff]
          %v508 = vld [vmem:[#allocation6 + $0x38] sm:$0xff]
          %v509 = vld [vmem:[#allocation6 + $0x40] sm:$0xff]
          %v510 = vld [vmem:[#allocation6 + $0x48] sm:$0xff]
          %v511 = vld [vmem:[#allocation6 + $0x50] sm:$0xff]
          %v512 = vld [vmem:[#allocation6 + $0x58] sm:$0xff]
          %v513 = vld [vmem:[#allocation6 + $0x60] sm:$0xff]
          %v514 = vld [vmem:[#allocation6 + $0x68] sm:$0xff]
          %v515 = vld [vmem:[#allocation6 + $0x70] sm:$0xff]
          %v516 = vld [vmem:[#allocation6 + $0x78] sm:$0xff]
          %v517 = vld [vmem:[#allocation6 + $0x80] sm:$0xff]
          %v518 = vld [vmem:[#allocation6 + $0x88] sm:$0xff]
          %v519 = vld [vmem:[#allocation6 + $0x90] sm:$0xff]
          %v520 = vld [vmem:[#allocation6 + $0x98] sm:$0xff]
          %v521 = vld [vmem:[#allocation6 + $0xa0] sm:$0xff]
          %v522 = vld [vmem:[#allocation6 + $0xa8] sm:$0xff]
          %v523 = vld [vmem:[#allocation6 + $0xb0] sm:$0xff]
          %v524 = vld [vmem:[#allocation6 + $0xb8] sm:$0xff]
          %v525 = vld [vmem:[#allocation6 + $0xc0] sm:$0xff]
          %v526 = vld [vmem:[#allocation6 + $0xc8] sm:$0xff]
          %v527 = vld [vmem:[#allocation6 + $0xd0] sm:$0xff]
          %v528 = vld [vmem:[#allocation6 + $0xd8] sm:$0xff]
          %v529 = vld [vmem:[#allocation6 + $0xe0] sm:$0xff]
          %v530 = vld [vmem:[#allocation6 + $0xe8] sm:$0xff]
          %v531 = vld [vmem:[#allocation6 + $0xf0] sm:$0xff]
          %v532 = vld [vmem:[#allocation6 + $0xf8] sm:$0xff]
          %v533 = vld [vmem:[#allocation8] sm:$0x3]
          %v535 = vlaneseq
          %v536 = vshrl.u32 %v535, 7
          %v537 = vsub.s32 0, %v536
          %v538 = vrot.slane %v533, %v537
          %v539 = vlaneseq
          %v540 = vshrl.u32 %v539, 7
          %v541 = vsub.s32 1, %v540
          %v542 = vrot.slane %v533, %v541
          %v577 = vunpack.c.l.b16 %v469
          %v578 = vunpack.c.h.b16 %v469
          %v579 = vunpack.c.l.b16 %v470
          %v580 = vunpack.c.h.b16 %v470
          %v581 = vunpack.c.l.b16 %v471
          %v582 = vunpack.c.h.b16 %v471
          %v583 = vunpack.c.l.b16 %v472
          %v584 = vunpack.c.h.b16 %v472
          %v585 = vunpack.c.l.b16 %v473
          %v586 = vunpack.c.h.b16 %v473
          %v587 = vunpack.c.l.b16 %v474
          %v588 = vunpack.c.h.b16 %v474
          %v589 = vunpack.c.l.b16 %v475
          %v590 = vunpack.c.h.b16 %v475
          %v591 = vunpack.c.l.b16 %v476
          %v592 = vunpack.c.h.b16 %v476
          %v593 = vunpack.c.l.b16 %v477
          %v594 = vunpack.c.h.b16 %v477
          %v595 = vunpack.c.l.b16 %v478
          %v596 = vunpack.c.h.b16 %v478
          %v597 = vunpack.c.l.b16 %v479
          %v598 = vunpack.c.h.b16 %v479
          %v599 = vunpack.c.l.b16 %v480
          %v600 = vunpack.c.h.b16 %v480
          %v601 = vunpack.c.l.b16 %v481
          %v602 = vunpack.c.h.b16 %v481
          %v603 = vunpack.c.l.b16 %v482
          %v604 = vunpack.c.h.b16 %v482
          %v605 = vunpack.c.l.b16 %v483
          %v606 = vunpack.c.h.b16 %v483
          %v607 = vunpack.c.l.b16 %v484
          %v608 = vunpack.c.h.b16 %v484
          %v609 = vunpack.c.l.b16 %v485
          %v610 = vunpack.c.h.b16 %v485
          %v611 = vunpack.c.l.b16 %v486
          %v612 = vunpack.c.h.b16 %v486
          %v613 = vunpack.c.l.b16 %v487
          %v614 = vunpack.c.h.b16 %v487
          %v615 = vunpack.c.l.b16 %v488
          %v616 = vunpack.c.h.b16 %v488
          %v617 = vunpack.c.l.b16 %v489
          %v618 = vunpack.c.h.b16 %v489
          %v619 = vunpack.c.l.b16 %v490
          %v620 = vunpack.c.h.b16 %v490
          %v621 = vunpack.c.l.b16 %v491
          %v622 = vunpack.c.h.b16 %v491
          %v623 = vunpack.c.l.b16 %v492
          %v624 = vunpack.c.h.b16 %v492
          %v625 = vunpack.c.l.b16 %v493
          %v626 = vunpack.c.h.b16 %v493
          %v627 = vunpack.c.l.b16 %v494
          %v628 = vunpack.c.h.b16 %v494
          %v629 = vunpack.c.l.b16 %v495
          %v630 = vunpack.c.h.b16 %v495
          %v631 = vunpack.c.l.b16 %v496
          %v632 = vunpack.c.h.b16 %v496
          %v633 = vunpack.c.l.b16 %v497
          %v634 = vunpack.c.h.b16 %v497
          %v635 = vunpack.c.l.b16 %v498
          %v636 = vunpack.c.h.b16 %v498
          %v637 = vunpack.c.l.b16 %v499
          %v638 = vunpack.c.h.b16 %v499
          %v639 = vunpack.c.l.b16 %v500
          %v640 = vunpack.c.h.b16 %v500
          %v641 = vpack.c.b16 %v579, %v577
          %v642 = vpack.c.b16 %v580, %v578
          %v643 = vpack.c.b16 %v583, %v581
          %v644 = vpack.c.b16 %v584, %v582
          %v645 = vpack.c.b16 %v587, %v585
          %v646 = vpack.c.b16 %v588, %v586
          %v647 = vpack.c.b16 %v591, %v589
          %v648 = vpack.c.b16 %v592, %v590
          %v649 = vpack.c.b16 %v595, %v593
          %v650 = vpack.c.b16 %v596, %v594
          %v651 = vpack.c.b16 %v599, %v597
          %v652 = vpack.c.b16 %v600, %v598
          %v653 = vpack.c.b16 %v603, %v601
          %v654 = vpack.c.b16 %v604, %v602
          %v655 = vpack.c.b16 %v607, %v605
          %v656 = vpack.c.b16 %v608, %v606
          %v657 = vpack.c.b16 %v611, %v609
          %v658 = vpack.c.b16 %v612, %v610
          %v659 = vpack.c.b16 %v615, %v613
          %v660 = vpack.c.b16 %v616, %v614
          %v661 = vpack.c.b16 %v619, %v617
          %v662 = vpack.c.b16 %v620, %v618
          %v663 = vpack.c.b16 %v623, %v621
          %v664 = vpack.c.b16 %v624, %v622
          %v665 = vpack.c.b16 %v627, %v625
          %v666 = vpack.c.b16 %v628, %v626
          %v667 = vpack.c.b16 %v631, %v629
          %v668 = vpack.c.b16 %v632, %v630
          %v669 = vpack.c.b16 %v635, %v633
          %v670 = vpack.c.b16 %v636, %v634
          %v671 = vpack.c.b16 %v639, %v637
          %v672 = vpack.c.b16 %v640, %v638
          %v737 = vunpack.c.l.b16 %v501
          %v738 = vunpack.c.h.b16 %v501
          %v739 = vunpack.c.l.b16 %v502
          %v740 = vunpack.c.h.b16 %v502
          %v741 = vunpack.c.l.b16 %v503
          %v742 = vunpack.c.h.b16 %v503
          %v743 = vunpack.c.l.b16 %v504
          %v744 = vunpack.c.h.b16 %v504
          %v745 = vunpack.c.l.b16 %v505
          %v746 = vunpack.c.h.b16 %v505
          %v747 = vunpack.c.l.b16 %v506
          %v748 = vunpack.c.h.b16 %v506
          %v749 = vunpack.c.l.b16 %v507
          %v750 = vunpack.c.h.b16 %v507
          %v751 = vunpack.c.l.b16 %v508
          %v752 = vunpack.c.h.b16 %v508
          %v753 = vunpack.c.l.b16 %v509
          %v754 = vunpack.c.h.b16 %v509
          %v755 = vunpack.c.l.b16 %v510
          %v756 = vunpack.c.h.b16 %v510
          %v757 = vunpack.c.l.b16 %v511
          %v758 = vunpack.c.h.b16 %v511
          %v759 = vunpack.c.l.b16 %v512
          %v760 = vunpack.c.h.b16 %v512
          %v761 = vunpack.c.l.b16 %v513
          %v762 = vunpack.c.h.b16 %v513
          %v763 = vunpack.c.l.b16 %v514
          %v764 = vunpack.c.h.b16 %v514
          %v765 = vunpack.c.l.b16 %v515
          %v766 = vunpack.c.h.b16 %v515
          %v767 = vunpack.c.l.b16 %v516
          %v768 = vunpack.c.h.b16 %v516
          %v769 = vunpack.c.l.b16 %v517
          %v770 = vunpack.c.h.b16 %v517
          %v771 = vunpack.c.l.b16 %v518
          %v772 = vunpack.c.h.b16 %v518
          %v773 = vunpack.c.l.b16 %v519
          %v774 = vunpack.c.h.b16 %v519
          %v775 = vunpack.c.l.b16 %v520
          %v776 = vunpack.c.h.b16 %v520
          %v777 = vunpack.c.l.b16 %v521
          %v778 = vunpack.c.h.b16 %v521
          %v779 = vunpack.c.l.b16 %v522
          %v780 = vunpack.c.h.b16 %v522
          %v781 = vunpack.c.l.b16 %v523
          %v782 = vunpack.c.h.b16 %v523
          %v783 = vunpack.c.l.b16 %v524
          %v784 = vunpack.c.h.b16 %v524
          %v785 = vunpack.c.l.b16 %v525
          %v786 = vunpack.c.h.b16 %v525
          %v787 = vunpack.c.l.b16 %v526
          %v788 = vunpack.c.h.b16 %v526
          %v789 = vunpack.c.l.b16 %v527
          %v790 = vunpack.c.h.b16 %v527
          %v791 = vunpack.c.l.b16 %v528
          %v792 = vunpack.c.h.b16 %v528
          %v793 = vunpack.c.l.b16 %v529
          %v794 = vunpack.c.h.b16 %v529
          %v795 = vunpack.c.l.b16 %v530
          %v796 = vunpack.c.h.b16 %v530
          %v797 = vunpack.c.l.b16 %v531
          %v798 = vunpack.c.h.b16 %v531
          %v799 = vunpack.c.l.b16 %v532
          %v800 = vunpack.c.h.b16 %v532
          %v801 = vpack.c.b16 %v739, %v737
          %v802 = vpack.c.b16 %v740, %v738
          %v803 = vpack.c.b16 %v743, %v741
          %v804 = vpack.c.b16 %v744, %v742
          %v805 = vpack.c.b16 %v747, %v745
          %v806 = vpack.c.b16 %v748, %v746
          %v807 = vpack.c.b16 %v751, %v749
          %v808 = vpack.c.b16 %v752, %v750
          %v809 = vpack.c.b16 %v755, %v753
          %v810 = vpack.c.b16 %v756, %v754
          %v811 = vpack.c.b16 %v759, %v757
          %v812 = vpack.c.b16 %v760, %v758
          %v813 = vpack.c.b16 %v763, %v761
          %v814 = vpack.c.b16 %v764, %v762
          %v815 = vpack.c.b16 %v767, %v765
          %v816 = vpack.c.b16 %v768, %v766
          %v817 = vpack.c.b16 %v771, %v769
          %v818 = vpack.c.b16 %v772, %v770
          %v819 = vpack.c.b16 %v775, %v773
          %v820 = vpack.c.b16 %v776, %v774
          %v821 = vpack.c.b16 %v779, %v777
          %v822 = vpack.c.b16 %v780, %v778
          %v823 = vpack.c.b16 %v783, %v781
          %v824 = vpack.c.b16 %v784, %v782
          %v825 = vpack.c.b16 %v787, %v785
          %v826 = vpack.c.b16 %v788, %v786
          %v827 = vpack.c.b16 %v791, %v789
          %v828 = vpack.c.b16 %v792, %v790
          %v829 = vpack.c.b16 %v795, %v793
          %v830 = vpack.c.b16 %v796, %v794
          %v831 = vpack.c.b16 %v799, %v797
          %v832 = vpack.c.b16 %v800, %v798
          %865 = vmatprep.subr.bf16.mxu0 %v816
          %866 = vmatpush1.bf16.xpose.msra.mxu0 %v815
          %867 = vmatprep.subr.bf16.mxu0 %v814
          %868 = vmatpush1.bf16.xpose.msra.mxu0 %v813
          %869 = vmatprep.subr.bf16.mxu0 %v812
          %870 = vmatpush1.bf16.xpose.msra.mxu0 %v811
          %871 = vmatprep.subr.bf16.mxu0 %v810
          %872 = vmatpush1.bf16.xpose.msra.mxu0 %v809
          %873 = vmatprep.subr.bf16.mxu0 %v808
          %874 = vmatpush1.bf16.xpose.msra.mxu0 %v807
          %875 = vmatprep.subr.bf16.mxu0 %v806
          %876 = vmatpush1.bf16.xpose.msra.mxu0 %v805
          %877 = vmatprep.subr.bf16.mxu0 %v804
          %878 = vmatpush1.bf16.xpose.msra.mxu0 %v803
          %879 = vmatprep.subr.bf16.mxu0 %v802
          %880 = vmatpush1.bf16.xpose.msra.mxu0 %v801
          %881 = vmatprep.subr.bf16.mxu0 %v832
          %882 = vmatpush2.bf16.xpose.msra.mxu0 %v831
          %883 = vmatprep.subr.bf16.mxu0 %v830
          %884 = vmatpush2.bf16.xpose.msra.mxu0 %v829
          %885 = vmatprep.subr.bf16.mxu0 %v828
          %886 = vmatpush2.bf16.xpose.msra.mxu0 %v827
          %887 = vmatprep.subr.bf16.mxu0 %v826
          %888 = vmatpush2.bf16.xpose.msra.mxu0 %v825
          %889 = vmatprep.subr.bf16.mxu0 %v824
          %890 = vmatpush2.bf16.xpose.msra.mxu0 %v823
          %891 = vmatprep.subr.bf16.mxu0 %v822
          %892 = vmatpush2.bf16.xpose.msra.mxu0 %v821
          %893 = vmatprep.subr.bf16.mxu0 %v820
          %894 = vmatpush2.bf16.xpose.msra.mxu0 %v819
          %895 = vmatprep.subr.bf16.mxu0 %v818
          %896 = vmatpush2.bf16.xpose.msra.mxu0 %v817
          %897 = vmatprep.mubr.bf16.mxu0 %v642
          %898 = vmatmul.mubr.bf16.gmra.mxu0 %v641
          %v899 = vpop.f32.mrf.mxu0
          %v900 = vadd.f32 %v538, %v899
          %v901 = vpop.f32.mrf.mxu0
          %v902 = vadd.f32 %v542, %v901
          %v903 = vpop.f32.mrf.mxu0
          %v904 = vadd.f32 %v538, %v903
          %v905 = vpop.f32.mrf.mxu0
          %v906 = vadd.f32 %v542, %v905
          %907 = vmatprep.mubr.bf16.mxu0 %v644
          %908 = vmatmul.mubr.bf16.gmra.mxu0 %v643
          %v909 = vpop.f32.mrf.mxu0
          %v910 = vadd.f32 %v538, %v909
          %v911 = vpop.f32.mrf.mxu0
          %v912 = vadd.f32 %v542, %v911
          %v913 = vpop.f32.mrf.mxu0
          %v914 = vadd.f32 %v538, %v913
          %v915 = vpop.f32.mrf.mxu0
          %v916 = vadd.f32 %v542, %v915
          %917 = vmatprep.mubr.bf16.mxu0 %v646
          %918 = vmatmul.mubr.bf16.gmra.mxu0 %v645
          %v919 = vpop.f32.mrf.mxu0
          %v920 = vadd.f32 %v538, %v919
          %v921 = vpop.f32.mrf.mxu0
          %v922 = vadd.f32 %v542, %v921
          %v923 = vpop.f32.mrf.mxu0
          %v924 = vadd.f32 %v538, %v923
          %v925 = vpop.f32.mrf.mxu0
          %v926 = vadd.f32 %v542, %v925
          %927 = vmatprep.mubr.bf16.mxu0 %v648
          %928 = vmatmul.mubr.bf16.gmra.mxu0 %v647
          %v929 = vpop.f32.mrf.mxu0
          %v930 = vadd.f32 %v538, %v929
          %v931 = vpop.f32.mrf.mxu0
          %v932 = vadd.f32 %v542, %v931
          %v933 = vpop.f32.mrf.mxu0
          %v934 = vadd.f32 %v538, %v933
          %v935 = vpop.f32.mrf.mxu0
          %v936 = vadd.f32 %v542, %v935
          %937 = vmatprep.mubr.bf16.mxu0 %v650
          %938 = vmatmul.mubr.bf16.gmra.mxu0 %v649
          %v939 = vpop.f32.mrf.mxu0
          %v940 = vadd.f32 %v538, %v939
          %v941 = vpop.f32.mrf.mxu0
          %v942 = vadd.f32 %v542, %v941
          %v943 = vpop.f32.mrf.mxu0
          %v944 = vadd.f32 %v538, %v943
          %v945 = vpop.f32.mrf.mxu0
          %v946 = vadd.f32 %v542, %v945
          %947 = vmatprep.mubr.bf16.mxu0 %v652
          %948 = vmatmul.mubr.bf16.gmra.mxu0 %v651
          %v949 = vpop.f32.mrf.mxu0
          %v950 = vadd.f32 %v538, %v949
          %v951 = vpop.f32.mrf.mxu0
          %v952 = vadd.f32 %v542, %v951
          %v953 = vpop.f32.mrf.mxu0
          %v954 = vadd.f32 %v538, %v953
          %v955 = vpop.f32.mrf.mxu0
          %v956 = vadd.f32 %v542, %v955
          %957 = vmatprep.mubr.bf16.mxu0 %v654
          %958 = vmatmul.mubr.bf16.gmra.mxu0 %v653
          %v959 = vpop.f32.mrf.mxu0
          %v960 = vadd.f32 %v538, %v959
          %v961 = vpop.f32.mrf.mxu0
          %v962 = vadd.f32 %v542, %v961
          %v963 = vpop.f32.mrf.mxu0
          %v964 = vadd.f32 %v538, %v963
          %v965 = vpop.f32.mrf.mxu0
          %v966 = vadd.f32 %v542, %v965
          %967 = vmatprep.mubr.bf16.mxu0 %v656
          %968 = vmatmul.mubr.bf16.gmra.mxu0 %v655
          %v969 = vpop.f32.mrf.mxu0
          %v970 = vadd.f32 %v538, %v969
          %v971 = vpop.f32.mrf.mxu0
          %v972 = vadd.f32 %v542, %v971
          %v973 = vpop.f32.mrf.mxu0
          %v974 = vadd.f32 %v538, %v973
          %v975 = vpop.f32.mrf.mxu0
          %v976 = vadd.f32 %v542, %v975
          %977 = vmatprep.mubr.bf16.mxu0 %v658
          %978 = vmatmul.mubr.bf16.gmra.mxu0 %v657
          %v979 = vpop.f32.mrf.mxu0
          %v980 = vadd.f32 %v538, %v979
          %v981 = vpop.f32.mrf.mxu0
          %v982 = vadd.f32 %v542, %v981
          %v983 = vpop.f32.mrf.mxu0
          %v984 = vadd.f32 %v538, %v983
          %v985 = vpop.f32.mrf.mxu0
          %v986 = vadd.f32 %v542, %v985
          %987 = vmatprep.mubr.bf16.mxu0 %v660
          %988 = vmatmul.mubr.bf16.gmra.mxu0 %v659
          %v989 = vpop.f32.mrf.mxu0
          %v990 = vadd.f32 %v538, %v989
          %v991 = vpop.f32.mrf.mxu0
          %v992 = vadd.f32 %v542, %v991
          %v993 = vpop.f32.mrf.mxu0
          %v994 = vadd.f32 %v538, %v993
          %v995 = vpop.f32.mrf.mxu0
          %v996 = vadd.f32 %v542, %v995
          %997 = vmatprep.mubr.bf16.mxu0 %v662
          %998 = vmatmul.mubr.bf16.gmra.mxu0 %v661
          %v999 = vpop.f32.mrf.mxu0
          %v1000 = vadd.f32 %v538, %v999
          %v1001 = vpop.f32.mrf.mxu0
          %v1002 = vadd.f32 %v542, %v1001
          %v1003 = vpop.f32.mrf.mxu0
          %v1004 = vadd.f32 %v538, %v1003
          %v1005 = vpop.f32.mrf.mxu0
          %v1006 = vadd.f32 %v542, %v1005
          %1007 = vmatprep.mubr.bf16.mxu0 %v664
          %1008 = vmatmul.mubr.bf16.gmra.mxu0 %v663
          %v1009 = vpop.f32.mrf.mxu0
          %v1010 = vadd.f32 %v538, %v1009
          %v1011 = vpop.f32.mrf.mxu0
          %v1012 = vadd.f32 %v542, %v1011
          %v1013 = vpop.f32.mrf.mxu0
          %v1014 = vadd.f32 %v538, %v1013
          %v1015 = vpop.f32.mrf.mxu0
          %v1016 = vadd.f32 %v542, %v1015
          %1017 = vmatprep.mubr.bf16.mxu0 %v666
          %1018 = vmatmul.mubr.bf16.gmra.mxu0 %v665
          %v1019 = vpop.f32.mrf.mxu0
          %v1020 = vadd.f32 %v538, %v1019
          %v1021 = vpop.f32.mrf.mxu0
          %v1022 = vadd.f32 %v542, %v1021
          %v1023 = vpop.f32.mrf.mxu0
          %v1024 = vadd.f32 %v538, %v1023
          %v1025 = vpop.f32.mrf.mxu0
          %v1026 = vadd.f32 %v542, %v1025
          %1027 = vmatprep.mubr.bf16.mxu0 %v668
          %1028 = vmatmul.mubr.bf16.gmra.mxu0 %v667
          %v1029 = vpop.f32.mrf.mxu0
          %v1030 = vadd.f32 %v538, %v1029
          %v1031 = vpop.f32.mrf.mxu0
          %v1032 = vadd.f32 %v542, %v1031
          %v1033 = vpop.f32.mrf.mxu0
          %v1034 = vadd.f32 %v538, %v1033
          %v1035 = vpop.f32.mrf.mxu0
          %v1036 = vadd.f32 %v542, %v1035
          %1037 = vmatprep.mubr.bf16.mxu0 %v670
          %1038 = vmatmul.mubr.bf16.gmra.mxu0 %v669
          %v1039 = vpop.f32.mrf.mxu0
          %v1040 = vadd.f32 %v538, %v1039
          %v1041 = vpop.f32.mrf.mxu0
          %v1042 = vadd.f32 %v542, %v1041
          %v1043 = vpop.f32.mrf.mxu0
          %v1044 = vadd.f32 %v538, %v1043
          %v1045 = vpop.f32.mrf.mxu0
          %v1046 = vadd.f32 %v542, %v1045
          %1047 = vmatprep.mubr.bf16.mxu0 %v672
          %1048 = vmatmul.mubr.bf16.gmra.mxu0 %v671
          %v1049 = vpop.f32.mrf.mxu0
          %v1050 = vadd.f32 %v538, %v1049
          %v1051 = vpop.f32.mrf.mxu0
          %v1052 = vadd.f32 %v542, %v1051
          %v1053 = vpop.f32.mrf.mxu0
          %v1054 = vadd.f32 %v538, %v1053
          %v1055 = vpop.f32.mrf.mxu0
          %v1056 = vadd.f32 %v542, %v1055
          %1057 = vdwg.mxu0
          %v1058 = vmul.f32 %v900, 0.5
          %v1059 = vmul.f32 %v902, 0.5
          %v1060 = vmul.f32 %v904, 0.5
          %v1061 = vmul.f32 %v906, 0.5
          %v1062 = vmul.f32 %v910, 0.5
          %v1063 = vmul.f32 %v912, 0.5
          %v1064 = vmul.f32 %v914, 0.5
          %v1065 = vmul.f32 %v916, 0.5
          %v1066 = vmul.f32 %v920, 0.5
          %v1067 = vmul.f32 %v922, 0.5
          %v1068 = vmul.f32 %v924, 0.5
          %v1069 = vmul.f32 %v926, 0.5
          %v1070 = vmul.f32 %v930, 0.5
          %v1071 = vmul.f32 %v932, 0.5
          %v1072 = vmul.f32 %v934, 0.5
          %v1073 = vmul.f32 %v936, 0.5
          %v1074 = vmul.f32 %v940, 0.5
          %v1075 = vmul.f32 %v942, 0.5
          %v1076 = vmul.f32 %v944, 0.5
          %v1077 = vmul.f32 %v946, 0.5
          %v1078 = vmul.f32 %v950, 0.5
          %v1079 = vmul.f32 %v952, 0.5
          %v1080 = vmul.f32 %v954, 0.5
          %v1081 = vmul.f32 %v956, 0.5
          %v1082 = vmul.f32 %v960, 0.5
          %v1083 = vmul.f32 %v962, 0.5
          %v1084 = vmul.f32 %v964, 0.5
          %v1085 = vmul.f32 %v966, 0.5
          %v1086 = vmul.f32 %v970, 0.5
          %v1087 = vmul.f32 %v972, 0.5
          %v1088 = vmul.f32 %v974, 0.5
          %v1089 = vmul.f32 %v976, 0.5
          %v1090 = vmul.f32 %v980, 0.5
          %v1091 = vmul.f32 %v982, 0.5
          %v1092 = vmul.f32 %v984, 0.5
          %v1093 = vmul.f32 %v986, 0.5
          %v1094 = vmul.f32 %v990, 0.5
          %v1095 = vmul.f32 %v992, 0.5
          %v1096 = vmul.f32 %v994, 0.5
          %v1097 = vmul.f32 %v996, 0.5
          %v1098 = vmul.f32 %v1000, 0.5
          %v1099 = vmul.f32 %v1002, 0.5
          %v1100 = vmul.f32 %v1004, 0.5
          %v1101 = vmul.f32 %v1006, 0.5
          %v1102 = vmul.f32 %v1010, 0.5
          %v1103 = vmul.f32 %v1012, 0.5
          %v1104 = vmul.f32 %v1014, 0.5
          %v1105 = vmul.f32 %v1016, 0.5
          %v1106 = vmul.f32 %v1020, 0.5
          %v1107 = vmul.f32 %v1022, 0.5
          %v1108 = vmul.f32 %v1024, 0.5
          %v1109 = vmul.f32 %v1026, 0.5
          %v1110 = vmul.f32 %v1030, 0.5
          %v1111 = vmul.f32 %v1032, 0.5
          %v1112 = vmul.f32 %v1034, 0.5
          %v1113 = vmul.f32 %v1036, 0.5
          %v1114 = vmul.f32 %v1040, 0.5
          %v1115 = vmul.f32 %v1042, 0.5
          %v1116 = vmul.f32 %v1044, 0.5
          %v1117 = vmul.f32 %v1046, 0.5
          %v1118 = vmul.f32 %v1050, 0.5
          %v1119 = vmul.f32 %v1052, 0.5
          %v1120 = vmul.f32 %v1054, 0.5
          %v1121 = vmul.f32 %v1056, 0.5
          %v1122 = vmul.f32 %v900, 0.70710677
          %v1123 = vmul.f32 %v902, 0.70710677
          %v1124 = vmul.f32 %v904, 0.70710677
          %v1125 = vmul.f32 %v906, 0.70710677
          %v1126 = vmul.f32 %v910, 0.70710677
          %v1127 = vmul.f32 %v912, 0.70710677
          %v1128 = vmul.f32 %v914, 0.70710677
          %v1129 = vmul.f32 %v916, 0.70710677
          %v1130 = vmul.f32 %v920, 0.70710677
          %v1131 = vmul.f32 %v922, 0.70710677
          %v1132 = vmul.f32 %v924, 0.70710677
          %v1133 = vmul.f32 %v926, 0.70710677
          %v1134 = vmul.f32 %v930, 0.70710677
          %v1135 = vmul.f32 %v932, 0.70710677
          %v1136 = vmul.f32 %v934, 0.70710677
          %v1137 = vmul.f32 %v936, 0.70710677
          %v1138 = vmul.f32 %v940, 0.70710677
          %v1139 = vmul.f32 %v942, 0.70710677
          %v1140 = vmul.f32 %v944, 0.70710677
          %v1141 = vmul.f32 %v946, 0.70710677
          %v1142 = vmul.f32 %v950, 0.70710677
          %v1143 = vmul.f32 %v952, 0.70710677
          %v1144 = vmul.f32 %v954, 0.70710677
          %v1145 = vmul.f32 %v956, 0.70710677
          %v1146 = vmul.f32 %v960, 0.70710677
          %v1147 = vmul.f32 %v962, 0.70710677
          %v1148 = vmul.f32 %v964, 0.70710677
          %v1149 = vmul.f32 %v966, 0.70710677
          %v1150 = vmul.f32 %v970, 0.70710677
          %v1151 = vmul.f32 %v972, 0.70710677
          %v1152 = vmul.f32 %v974, 0.70710677
          %v1153 = vmul.f32 %v976, 0.70710677
          %v1154 = vmul.f32 %v980, 0.70710677
          %v1155 = vmul.f32 %v982, 0.70710677
          %v1156 = vmul.f32 %v984, 0.70710677
          %v1157 = vmul.f32 %v986, 0.70710677
          %v1158 = vmul.f32 %v990, 0.70710677
          %v1159 = vmul.f32 %v992, 0.70710677
          %v1160 = vmul.f32 %v994, 0.70710677
          %v1161 = vmul.f32 %v996, 0.70710677
          %v1162 = vmul.f32 %v1000, 0.70710677
          %v1163 = vmul.f32 %v1002, 0.70710677
          %v1164 = vmul.f32 %v1004, 0.70710677
          %v1165 = vmul.f32 %v1006, 0.70710677
          %v1166 = vmul.f32 %v1010, 0.70710677
          %v1167 = vmul.f32 %v1012, 0.70710677
          %v1168 = vmul.f32 %v1014, 0.70710677
          %v1169 = vmul.f32 %v1016, 0.70710677
          %v1170 = vmul.f32 %v1020, 0.70710677
          %v1171 = vmul.f32 %v1022, 0.70710677
          %v1172 = vmul.f32 %v1024, 0.70710677
          %v1173 = vmul.f32 %v1026, 0.70710677
          %v1174 = vmul.f32 %v1030, 0.70710677
          %v1175 = vmul.f32 %v1032, 0.70710677
          %v1176 = vmul.f32 %v1034, 0.70710677
          %v1177 = vmul.f32 %v1036, 0.70710677
          %v1178 = vmul.f32 %v1040, 0.70710677
          %v1179 = vmul.f32 %v1042, 0.70710677
          %v1180 = vmul.f32 %v1044, 0.70710677
          %v1181 = vmul.f32 %v1046, 0.70710677
          %v1182 = vmul.f32 %v1050, 0.70710677
          %v1183 = vmul.f32 %v1052, 0.70710677
          %v1184 = vmul.f32 %v1054, 0.70710677
          %v1185 = vmul.f32 %v1056, 0.70710677
          %v1186 = verf.f32.pop %v1122
          %v1187 = verf.f32.pop %v1123
          %v1188 = verf.f32.pop %v1124
          %v1189 = verf.f32.pop %v1125
          %v1190 = verf.f32.pop %v1126
          %v1191 = verf.f32.pop %v1127
          %v1192 = verf.f32.pop %v1128
          %v1193 = verf.f32.pop %v1129
          %v1194 = verf.f32.pop %v1130
          %v1195 = verf.f32.pop %v1131
          %v1196 = verf.f32.pop %v1132
          %v1197 = verf.f32.pop %v1133
          %v1198 = verf.f32.pop %v1134
          %v1199 = verf.f32.pop %v1135
          %v1200 = verf.f32.pop %v1136
          %v1201 = verf.f32.pop %v1137
          %v1202 = verf.f32.pop %v1138
          %v1203 = verf.f32.pop %v1139
          %v1204 = verf.f32.pop %v1140
          %v1205 = verf.f32.pop %v1141
          %v1206 = verf.f32.pop %v1142
          %v1207 = verf.f32.pop %v1143
          %v1208 = verf.f32.pop %v1144
          %v1209 = verf.f32.pop %v1145
          %v1210 = verf.f32.pop %v1146
          %v1211 = verf.f32.pop %v1147
          %v1212 = verf.f32.pop %v1148
          %v1213 = verf.f32.pop %v1149
          %v1214 = verf.f32.pop %v1150
          %v1215 = verf.f32.pop %v1151
          %v1216 = verf.f32.pop %v1152
          %v1217 = verf.f32.pop %v1153
          %v1218 = verf.f32.pop %v1154
          %v1219 = verf.f32.pop %v1155
          %v1220 = verf.f32.pop %v1156
          %v1221 = verf.f32.pop %v1157
          %v1222 = verf.f32.pop %v1158
          %v1223 = verf.f32.pop %v1159
          %v1224 = verf.f32.pop %v1160
          %v1225 = verf.f32.pop %v1161
          %v1226 = verf.f32.pop %v1162
          %v1227 = verf.f32.pop %v1163
          %v1228 = verf.f32.pop %v1164
          %v1229 = verf.f32.pop %v1165
          %v1230 = verf.f32.pop %v1166
          %v1231 = verf.f32.pop %v1167
          %v1232 = verf.f32.pop %v1168
          %v1233 = verf.f32.pop %v1169
          %v1234 = verf.f32.pop %v1170
          %v1235 = verf.f32.pop %v1171
          %v1236 = verf.f32.pop %v1172
          %v1237 = verf.f32.pop %v1173
          %v1238 = verf.f32.pop %v1174
          %v1239 = verf.f32.pop %v1175
          %v1240 = verf.f32.pop %v1176
          %v1241 = verf.f32.pop %v1177
          %v1242 = verf.f32.pop %v1178
          %v1243 = verf.f32.pop %v1179
          %v1244 = verf.f32.pop %v1180
          %v1245 = verf.f32.pop %v1181
          %v1246 = verf.f32.pop %v1182
          %v1247 = verf.f32.pop %v1183
          %v1248 = verf.f32.pop %v1184
          %v1249 = verf.f32.pop %v1185
          %v1250 = vadd.f32 %v1186, 1.0
          %v1251 = vadd.f32 %v1187, 1.0
          %v1252 = vadd.f32 %v1188, 1.0
          %v1253 = vadd.f32 %v1189, 1.0
          %v1254 = vadd.f32 %v1190, 1.0
          %v1255 = vadd.f32 %v1191, 1.0
          %v1256 = vadd.f32 %v1192, 1.0
          %v1257 = vadd.f32 %v1193, 1.0
          %v1258 = vadd.f32 %v1194, 1.0
          %v1259 = vadd.f32 %v1195, 1.0
          %v1260 = vadd.f32 %v1196, 1.0
          %v1261 = vadd.f32 %v1197, 1.0
          %v1262 = vadd.f32 %v1198, 1.0
          %v1263 = vadd.f32 %v1199, 1.0
          %v1264 = vadd.f32 %v1200, 1.0
          %v1265 = vadd.f32 %v1201, 1.0
          %v1266 = vadd.f32 %v1202, 1.0
          %v1267 = vadd.f32 %v1203, 1.0
          %v1268 = vadd.f32 %v1204, 1.0
          %v1269 = vadd.f32 %v1205, 1.0
          %v1270 = vadd.f32 %v1206, 1.0
          %v1271 = vadd.f32 %v1207, 1.0
          %v1272 = vadd.f32 %v1208, 1.0
          %v1273 = vadd.f32 %v1209, 1.0
          %v1274 = vadd.f32 %v1210, 1.0
          %v1275 = vadd.f32 %v1211, 1.0
          %v1276 = vadd.f32 %v1212, 1.0
          %v1277 = vadd.f32 %v1213, 1.0
          %v1278 = vadd.f32 %v1214, 1.0
          %v1279 = vadd.f32 %v1215, 1.0
          %v1280 = vadd.f32 %v1216, 1.0
          %v1281 = vadd.f32 %v1217, 1.0
          %v1282 = vadd.f32 %v1218, 1.0
          %v1283 = vadd.f32 %v1219, 1.0
          %v1284 = vadd.f32 %v1220, 1.0
          %v1285 = vadd.f32 %v1221, 1.0
          %v1286 = vadd.f32 %v1222, 1.0
          %v1287 = vadd.f32 %v1223, 1.0
          %v1288 = vadd.f32 %v1224, 1.0
          %v1289 = vadd.f32 %v1225, 1.0
          %v1290 = vadd.f32 %v1226, 1.0
          %v1291 = vadd.f32 %v1227, 1.0
          %v1292 = vadd.f32 %v1228, 1.0
          %v1293 = vadd.f32 %v1229, 1.0
          %v1294 = vadd.f32 %v1230, 1.0
          %v1295 = vadd.f32 %v1231, 1.0
          %v1296 = vadd.f32 %v1232, 1.0
          %v1297 = vadd.f32 %v1233, 1.0
          %v1298 = vadd.f32 %v1234, 1.0
          %v1299 = vadd.f32 %v1235, 1.0
          %v1300 = vadd.f32 %v1236, 1.0
          %v1301 = vadd.f32 %v1237, 1.0
          %v1302 = vadd.f32 %v1238, 1.0
          %v1303 = vadd.f32 %v1239, 1.0
          %v1304 = vadd.f32 %v1240, 1.0
          %v1305 = vadd.f32 %v1241, 1.0
          %v1306 = vadd.f32 %v1242, 1.0
          %v1307 = vadd.f32 %v1243, 1.0
          %v1308 = vadd.f32 %v1244, 1.0
          %v1309 = vadd.f32 %v1245, 1.0
          %v1310 = vadd.f32 %v1246, 1.0
          %v1311 = vadd.f32 %v1247, 1.0
          %v1312 = vadd.f32 %v1248, 1.0
          %v1313 = vadd.f32 %v1249, 1.0
          %v1314 = vmul.f32 %v1058, %v1250
          %v1315 = vmul.f32 %v1059, %v1251
          %v1316 = vmul.f32 %v1060, %v1252
          %v1317 = vmul.f32 %v1061, %v1253
          %v1318 = vmul.f32 %v1062, %v1254
          %v1319 = vmul.f32 %v1063, %v1255
          %v1320 = vmul.f32 %v1064, %v1256
          %v1321 = vmul.f32 %v1065, %v1257
          %v1322 = vmul.f32 %v1066, %v1258
          %v1323 = vmul.f32 %v1067, %v1259
          %v1324 = vmul.f32 %v1068, %v1260
          %v1325 = vmul.f32 %v1069, %v1261
          %v1326 = vmul.f32 %v1070, %v1262
          %v1327 = vmul.f32 %v1071, %v1263
          %v1328 = vmul.f32 %v1072, %v1264
          %v1329 = vmul.f32 %v1073, %v1265
          %v1330 = vmul.f32 %v1074, %v1266
          %v1331 = vmul.f32 %v1075, %v1267
          %v1332 = vmul.f32 %v1076, %v1268
          %v1333 = vmul.f32 %v1077, %v1269
          %v1334 = vmul.f32 %v1078, %v1270
          %v1335 = vmul.f32 %v1079, %v1271
          %v1336 = vmul.f32 %v1080, %v1272
          %v1337 = vmul.f32 %v1081, %v1273
          %v1338 = vmul.f32 %v1082, %v1274
          %v1339 = vmul.f32 %v1083, %v1275
          %v1340 = vmul.f32 %v1084, %v1276
          %v1341 = vmul.f32 %v1085, %v1277
          %v1342 = vmul.f32 %v1086, %v1278
          %v1343 = vmul.f32 %v1087, %v1279
          %v1344 = vmul.f32 %v1088, %v1280
          %v1345 = vmul.f32 %v1089, %v1281
          %v1346 = vmul.f32 %v1090, %v1282
          %v1347 = vmul.f32 %v1091, %v1283
          %v1348 = vmul.f32 %v1092, %v1284
          %v1349 = vmul.f32 %v1093, %v1285
          %v1350 = vmul.f32 %v1094, %v1286
          %v1351 = vmul.f32 %v1095, %v1287
          %v1352 = vmul.f32 %v1096, %v1288
          %v1353 = vmul.f32 %v1097, %v1289
          %v1354 = vmul.f32 %v1098, %v1290
          %v1355 = vmul.f32 %v1099, %v1291
          %v1356 = vmul.f32 %v1100, %v1292
          %v1357 = vmul.f32 %v1101, %v1293
          %v1358 = vmul.f32 %v1102, %v1294
          %v1359 = vmul.f32 %v1103, %v1295
          %v1360 = vmul.f32 %v1104, %v1296
          %v1361 = vmul.f32 %v1105, %v1297
          %v1362 = vmul.f32 %v1106, %v1298
          %v1363 = vmul.f32 %v1107, %v1299
          %v1364 = vmul.f32 %v1108, %v1300
          %v1365 = vmul.f32 %v1109, %v1301
          %v1366 = vmul.f32 %v1110, %v1302
          %v1367 = vmul.f32 %v1111, %v1303
          %v1368 = vmul.f32 %v1112, %v1304
          %v1369 = vmul.f32 %v1113, %v1305
          %v1370 = vmul.f32 %v1114, %v1306
          %v1371 = vmul.f32 %v1115, %v1307
          %v1372 = vmul.f32 %v1116, %v1308
          %v1373 = vmul.f32 %v1117, %v1309
          %v1374 = vmul.f32 %v1118, %v1310
          %v1375 = vmul.f32 %v1119, %v1311
          %v1376 = vmul.f32 %v1120, %v1312
          %v1377 = vmul.f32 %v1121, %v1313
          %v1378 = vld [vmem:[#allocation9] sm:$0xff]
          %v1379 = vld [vmem:[#allocation9 + $0x8] sm:$0xff]
          %v1380 = vld [vmem:[#allocation9 + $0x10] sm:$0xff]
          %v1381 = vld [vmem:[#allocation9 + $0x18] sm:$0xff]
          %v1382 = vld [vmem:[#allocation9 + $0x20] sm:$0xff]
          %v1383 = vld [vmem:[#allocation9 + $0x28] sm:$0xff]
          %v1384 = vld [vmem:[#allocation9 + $0x30] sm:$0xff]
          %v1385 = vld [vmem:[#allocation9 + $0x38] sm:$0xff]
          %v1386 = vld [vmem:[#allocation9 + $0x40] sm:$0xff]
          %v1387 = vld [vmem:[#allocation9 + $0x48] sm:$0xff]
          %v1388 = vld [vmem:[#allocation9 + $0x50] sm:$0xff]
          %v1389 = vld [vmem:[#allocation9 + $0x58] sm:$0xff]
          %v1390 = vld [vmem:[#allocation9 + $0x60] sm:$0xff]
          %v1391 = vld [vmem:[#allocation9 + $0x68] sm:$0xff]
          %v1392 = vld [vmem:[#allocation9 + $0x70] sm:$0xff]
          %v1393 = vld [vmem:[#allocation9 + $0x78] sm:$0xff]
          %v1394 = vld [vmem:[#allocation9 + $0x80] sm:$0xff]
          %v1395 = vld [vmem:[#allocation9 + $0x88] sm:$0xff]
          %v1396 = vld [vmem:[#allocation9 + $0x90] sm:$0xff]
          %v1397 = vld [vmem:[#allocation9 + $0x98] sm:$0xff]
          %v1398 = vld [vmem:[#allocation9 + $0xa0] sm:$0xff]
          %v1399 = vld [vmem:[#allocation9 + $0xa8] sm:$0xff]
          %v1400 = vld [vmem:[#allocation9 + $0xb0] sm:$0xff]
          %v1401 = vld [vmem:[#allocation9 + $0xb8] sm:$0xff]
          %v1402 = vld [vmem:[#allocation9 + $0xc0] sm:$0xff]
          %v1403 = vld [vmem:[#allocation9 + $0xc8] sm:$0xff]
          %v1404 = vld [vmem:[#allocation9 + $0xd0] sm:$0xff]
          %v1405 = vld [vmem:[#allocation9 + $0xd8] sm:$0xff]
          %v1406 = vld [vmem:[#allocation9 + $0xe0] sm:$0xff]
          %v1407 = vld [vmem:[#allocation9 + $0xe8] sm:$0xff]
          %v1408 = vld [vmem:[#allocation9 + $0xf0] sm:$0xff]
          %v1409 = vld [vmem:[#allocation9 + $0xf8] sm:$0xff]
          %v1410 = vpack.c.bf16 %v1316, %v1314
          %v1411 = vpack.c.bf16 %v1317, %v1315
          %v1412 = vpack.c.bf16 %v1320, %v1318
          %v1413 = vpack.c.bf16 %v1321, %v1319
          %v1414 = vpack.c.bf16 %v1324, %v1322
          %v1415 = vpack.c.bf16 %v1325, %v1323
          %v1416 = vpack.c.bf16 %v1328, %v1326
          %v1417 = vpack.c.bf16 %v1329, %v1327
          %v1418 = vpack.c.bf16 %v1332, %v1330
          %v1419 = vpack.c.bf16 %v1333, %v1331
          %v1420 = vpack.c.bf16 %v1336, %v1334
          %v1421 = vpack.c.bf16 %v1337, %v1335
          %v1422 = vpack.c.bf16 %v1340, %v1338
          %v1423 = vpack.c.bf16 %v1341, %v1339
          %v1424 = vpack.c.bf16 %v1344, %v1342
          %v1425 = vpack.c.bf16 %v1345, %v1343
          %v1426 = vpack.c.bf16 %v1348, %v1346
          %v1427 = vpack.c.bf16 %v1349, %v1347
          %v1428 = vpack.c.bf16 %v1352, %v1350
          %v1429 = vpack.c.bf16 %v1353, %v1351
          %v1430 = vpack.c.bf16 %v1356, %v1354
          %v1431 = vpack.c.bf16 %v1357, %v1355
          %v1432 = vpack.c.bf16 %v1360, %v1358
          %v1433 = vpack.c.bf16 %v1361, %v1359
          %v1434 = vpack.c.bf16 %v1364, %v1362
          %v1435 = vpack.c.bf16 %v1365, %v1363
          %v1436 = vpack.c.bf16 %v1368, %v1366
          %v1437 = vpack.c.bf16 %v1369, %v1367
          %v1438 = vpack.c.bf16 %v1372, %v1370
          %v1439 = vpack.c.bf16 %v1373, %v1371
          %v1440 = vpack.c.bf16 %v1376, %v1374
          %v1441 = vpack.c.bf16 %v1377, %v1375
          %v1442 = vld [vmem:[#allocation11] sm:$0x3]
          %v1444 = vlaneseq
          %v1445 = vshrl.u32 %v1444, 7
          %v1446 = vsub.s32 0, %v1445
          %v1447 = vrot.slane %v1442, %v1446
          %v1448 = vlaneseq
          %v1449 = vshrl.u32 %v1448, 7
          %v1450 = vsub.s32 1, %v1449
          %v1451 = vrot.slane %v1442, %v1450
          %v1486 = vunpack.c.l.b16 %v1378
          %v1487 = vunpack.c.h.b16 %v1378
          %v1488 = vunpack.c.l.b16 %v1379
          %v1489 = vunpack.c.h.b16 %v1379
          %v1490 = vunpack.c.l.b16 %v1380
          %v1491 = vunpack.c.h.b16 %v1380
          %v1492 = vunpack.c.l.b16 %v1381
          %v1493 = vunpack.c.h.b16 %v1381
          %v1494 = vunpack.c.l.b16 %v1382
          %v1495 = vunpack.c.h.b16 %v1382
          %v1496 = vunpack.c.l.b16 %v1383
          %v1497 = vunpack.c.h.b16 %v1383
          %v1498 = vunpack.c.l.b16 %v1384
          %v1499 = vunpack.c.h.b16 %v1384
          %v1500 = vunpack.c.l.b16 %v1385
          %v1501 = vunpack.c.h.b16 %v1385
          %v1502 = vunpack.c.l.b16 %v1386
          %v1503 = vunpack.c.h.b16 %v1386
          %v1504 = vunpack.c.l.b16 %v1387
          %v1505 = vunpack.c.h.b16 %v1387
          %v1506 = vunpack.c.l.b16 %v1388
          %v1507 = vunpack.c.h.b16 %v1388
          %v1508 = vunpack.c.l.b16 %v1389
          %v1509 = vunpack.c.h.b16 %v1389
          %v1510 = vunpack.c.l.b16 %v1390
          %v1511 = vunpack.c.h.b16 %v1390
          %v1512 = vunpack.c.l.b16 %v1391
          %v1513 = vunpack.c.h.b16 %v1391
          %v1514 = vunpack.c.l.b16 %v1392
          %v1515 = vunpack.c.h.b16 %v1392
          %v1516 = vunpack.c.l.b16 %v1393
          %v1517 = vunpack.c.h.b16 %v1393
          %v1518 = vunpack.c.l.b16 %v1394
          %v1519 = vunpack.c.h.b16 %v1394
          %v1520 = vunpack.c.l.b16 %v1395
          %v1521 = vunpack.c.h.b16 %v1395
          %v1522 = vunpack.c.l.b16 %v1396
          %v1523 = vunpack.c.h.b16 %v1396
          %v1524 = vunpack.c.l.b16 %v1397
          %v1525 = vunpack.c.h.b16 %v1397
          %v1526 = vunpack.c.l.b16 %v1398
          %v1527 = vunpack.c.h.b16 %v1398
          %v1528 = vunpack.c.l.b16 %v1399
          %v1529 = vunpack.c.h.b16 %v1399
          %v1530 = vunpack.c.l.b16 %v1400
          %v1531 = vunpack.c.h.b16 %v1400
          %v1532 = vunpack.c.l.b16 %v1401
          %v1533 = vunpack.c.h.b16 %v1401
          %v1534 = vunpack.c.l.b16 %v1402
          %v1535 = vunpack.c.h.b16 %v1402
          %v1536 = vunpack.c.l.b16 %v1403
          %v1537 = vunpack.c.h.b16 %v1403
          %v1538 = vunpack.c.l.b16 %v1404
          %v1539 = vunpack.c.h.b16 %v1404
          %v1540 = vunpack.c.l.b16 %v1405
          %v1541 = vunpack.c.h.b16 %v1405
          %v1542 = vunpack.c.l.b16 %v1406
          %v1543 = vunpack.c.h.b16 %v1406
          %v1544 = vunpack.c.l.b16 %v1407
          %v1545 = vunpack.c.h.b16 %v1407
          %v1546 = vunpack.c.l.b16 %v1408
          %v1547 = vunpack.c.h.b16 %v1408
          %v1548 = vunpack.c.l.b16 %v1409
          %v1549 = vunpack.c.h.b16 %v1409
          %v1550 = vpack.c.b16 %v1488, %v1486
          %v1551 = vpack.c.b16 %v1489, %v1487
          %v1552 = vpack.c.b16 %v1492, %v1490
          %v1553 = vpack.c.b16 %v1493, %v1491
          %v1554 = vpack.c.b16 %v1496, %v1494
          %v1555 = vpack.c.b16 %v1497, %v1495
          %v1556 = vpack.c.b16 %v1500, %v1498
          %v1557 = vpack.c.b16 %v1501, %v1499
          %v1558 = vpack.c.b16 %v1504, %v1502
          %v1559 = vpack.c.b16 %v1505, %v1503
          %v1560 = vpack.c.b16 %v1508, %v1506
          %v1561 = vpack.c.b16 %v1509, %v1507
          %v1562 = vpack.c.b16 %v1512, %v1510
          %v1563 = vpack.c.b16 %v1513, %v1511
          %v1564 = vpack.c.b16 %v1516, %v1514
          %v1565 = vpack.c.b16 %v1517, %v1515
          %v1566 = vpack.c.b16 %v1520, %v1518
          %v1567 = vpack.c.b16 %v1521, %v1519
          %v1568 = vpack.c.b16 %v1524, %v1522
          %v1569 = vpack.c.b16 %v1525, %v1523
          %v1570 = vpack.c.b16 %v1528, %v1526
          %v1571 = vpack.c.b16 %v1529, %v1527
          %v1572 = vpack.c.b16 %v1532, %v1530
          %v1573 = vpack.c.b16 %v1533, %v1531
          %v1574 = vpack.c.b16 %v1536, %v1534
          %v1575 = vpack.c.b16 %v1537, %v1535
          %v1576 = vpack.c.b16 %v1540, %v1538
          %v1577 = vpack.c.b16 %v1541, %v1539
          %v1578 = vpack.c.b16 %v1544, %v1542
          %v1579 = vpack.c.b16 %v1545, %v1543
          %v1580 = vpack.c.b16 %v1548, %v1546
          %v1581 = vpack.c.b16 %v1549, %v1547
          %1614 = vmatprep.subr.bf16.mxu0 %v1565
          %1615 = vmatpush1.bf16.xpose.msra.mxu0 %v1564
          %1616 = vmatprep.subr.bf16.mxu0 %v1563
          %1617 = vmatpush1.bf16.xpose.msra.mxu0 %v1562
          %1618 = vmatprep.subr.bf16.mxu0 %v1561
          %1619 = vmatpush1.bf16.xpose.msra.mxu0 %v1560
          %1620 = vmatprep.subr.bf16.mxu0 %v1559
          %1621 = vmatpush1.bf16.xpose.msra.mxu0 %v1558
          %1622 = vmatprep.subr.bf16.mxu0 %v1557
          %1623 = vmatpush1.bf16.xpose.msra.mxu0 %v1556
          %1624 = vmatprep.subr.bf16.mxu0 %v1555
          %1625 = vmatpush1.bf16.xpose.msra.mxu0 %v1554
          %1626 = vmatprep.subr.bf16.mxu0 %v1553
          %1627 = vmatpush1.bf16.xpose.msra.mxu0 %v1552
          %1628 = vmatprep.subr.bf16.mxu0 %v1551
          %1629 = vmatpush1.bf16.xpose.msra.mxu0 %v1550
          %1630 = vmatprep.subr.bf16.mxu0 %v1581
          %1631 = vmatpush2.bf16.xpose.msra.mxu0 %v1580
          %1632 = vmatprep.subr.bf16.mxu0 %v1579
          %1633 = vmatpush2.bf16.xpose.msra.mxu0 %v1578
          %1634 = vmatprep.subr.bf16.mxu0 %v1577
          %1635 = vmatpush2.bf16.xpose.msra.mxu0 %v1576
          %1636 = vmatprep.subr.bf16.mxu0 %v1575
          %1637 = vmatpush2.bf16.xpose.msra.mxu0 %v1574
          %1638 = vmatprep.subr.bf16.mxu0 %v1573
          %1639 = vmatpush2.bf16.xpose.msra.mxu0 %v1572
          %1640 = vmatprep.subr.bf16.mxu0 %v1571
          %1641 = vmatpush2.bf16.xpose.msra.mxu0 %v1570
          %1642 = vmatprep.subr.bf16.mxu0 %v1569
          %1643 = vmatpush2.bf16.xpose.msra.mxu0 %v1568
          %1644 = vmatprep.subr.bf16.mxu0 %v1567
          %1645 = vmatpush2.bf16.xpose.msra.mxu0 %v1566
          %1646 = vmatprep.mubr.bf16.mxu0 %v1411
          %1647 = vmatmul.mubr.bf16.gmra.mxu0 %v1410
          %v1648 = vpop.f32.mrf.mxu0
          %v1649 = vadd.f32 %v1447, %v1648
          %v1650 = vpop.f32.mrf.mxu0
          %v1651 = vadd.f32 %v1451, %v1650
          %v1652 = vpop.f32.mrf.mxu0
          %v1653 = vadd.f32 %v1447, %v1652
          %v1654 = vpop.f32.mrf.mxu0
          %v1655 = vadd.f32 %v1451, %v1654
          %1656 = vmatprep.mubr.bf16.mxu0 %v1413
          %1657 = vmatmul.mubr.bf16.gmra.mxu0 %v1412
          %v1658 = vpop.f32.mrf.mxu0
          %v1659 = vadd.f32 %v1447, %v1658
          %v1660 = vpop.f32.mrf.mxu0
          %v1661 = vadd.f32 %v1451, %v1660
          %v1662 = vpop.f32.mrf.mxu0
          %v1663 = vadd.f32 %v1447, %v1662
          %v1664 = vpop.f32.mrf.mxu0
          %v1665 = vadd.f32 %v1451, %v1664
          %1666 = vmatprep.mubr.bf16.mxu0 %v1415
          %1667 = vmatmul.mubr.bf16.gmra.mxu0 %v1414
          %v1668 = vpop.f32.mrf.mxu0
          %v1669 = vadd.f32 %v1447, %v1668
          %v1670 = vpop.f32.mrf.mxu0
          %v1671 = vadd.f32 %v1451, %v1670
          %v1672 = vpop.f32.mrf.mxu0
          %v1673 = vadd.f32 %v1447, %v1672
          %v1674 = vpop.f32.mrf.mxu0
          %v1675 = vadd.f32 %v1451, %v1674
          %1676 = vmatprep.mubr.bf16.mxu0 %v1417
          %1677 = vmatmul.mubr.bf16.gmra.mxu0 %v1416
          %v1678 = vpop.f32.mrf.mxu0
          %v1679 = vadd.f32 %v1447, %v1678
          %v1680 = vpop.f32.mrf.mxu0
          %v1681 = vadd.f32 %v1451, %v1680
          %v1682 = vpop.f32.mrf.mxu0
          %v1683 = vadd.f32 %v1447, %v1682
          %v1684 = vpop.f32.mrf.mxu0
          %v1685 = vadd.f32 %v1451, %v1684
          %1686 = vmatprep.mubr.bf16.mxu0 %v1419
          %1687 = vmatmul.mubr.bf16.gmra.mxu0 %v1418
          %v1688 = vpop.f32.mrf.mxu0
          %v1689 = vadd.f32 %v1447, %v1688
          %v1690 = vpop.f32.mrf.mxu0
          %v1691 = vadd.f32 %v1451, %v1690
          %v1692 = vpop.f32.mrf.mxu0
          %v1693 = vadd.f32 %v1447, %v1692
          %v1694 = vpop.f32.mrf.mxu0
          %v1695 = vadd.f32 %v1451, %v1694
          %1696 = vmatprep.mubr.bf16.mxu0 %v1421
          %1697 = vmatmul.mubr.bf16.gmra.mxu0 %v1420
          %v1698 = vpop.f32.mrf.mxu0
          %v1699 = vadd.f32 %v1447, %v1698
          %v1700 = vpop.f32.mrf.mxu0
          %v1701 = vadd.f32 %v1451, %v1700
          %v1702 = vpop.f32.mrf.mxu0
          %v1703 = vadd.f32 %v1447, %v1702
          %v1704 = vpop.f32.mrf.mxu0
          %v1705 = vadd.f32 %v1451, %v1704
          %1706 = vmatprep.mubr.bf16.mxu0 %v1423
          %1707 = vmatmul.mubr.bf16.gmra.mxu0 %v1422
          %v1708 = vpop.f32.mrf.mxu0
          %v1709 = vadd.f32 %v1447, %v1708
          %v1710 = vpop.f32.mrf.mxu0
          %v1711 = vadd.f32 %v1451, %v1710
          %v1712 = vpop.f32.mrf.mxu0
          %v1713 = vadd.f32 %v1447, %v1712
          %v1714 = vpop.f32.mrf.mxu0
          %v1715 = vadd.f32 %v1451, %v1714
          %1716 = vmatprep.mubr.bf16.mxu0 %v1425
          %1717 = vmatmul.mubr.bf16.gmra.mxu0 %v1424
          %v1718 = vpop.f32.mrf.mxu0
          %v1719 = vadd.f32 %v1447, %v1718
          %v1720 = vpop.f32.mrf.mxu0
          %v1721 = vadd.f32 %v1451, %v1720
          %v1722 = vpop.f32.mrf.mxu0
          %v1723 = vadd.f32 %v1447, %v1722
          %v1724 = vpop.f32.mrf.mxu0
          %v1725 = vadd.f32 %v1451, %v1724
          %1726 = vmatprep.mubr.bf16.mxu0 %v1427
          %1727 = vmatmul.mubr.bf16.gmra.mxu0 %v1426
          %v1728 = vpop.f32.mrf.mxu0
          %v1729 = vadd.f32 %v1447, %v1728
          %v1730 = vpop.f32.mrf.mxu0
          %v1731 = vadd.f32 %v1451, %v1730
          %v1732 = vpop.f32.mrf.mxu0
          %v1733 = vadd.f32 %v1447, %v1732
          %v1734 = vpop.f32.mrf.mxu0
          %v1735 = vadd.f32 %v1451, %v1734
          %1736 = vmatprep.mubr.bf16.mxu0 %v1429
          %1737 = vmatmul.mubr.bf16.gmra.mxu0 %v1428
          %v1738 = vpop.f32.mrf.mxu0
          %v1739 = vadd.f32 %v1447, %v1738
          %v1740 = vpop.f32.mrf.mxu0
          %v1741 = vadd.f32 %v1451, %v1740
          %v1742 = vpop.f32.mrf.mxu0
          %v1743 = vadd.f32 %v1447, %v1742
          %v1744 = vpop.f32.mrf.mxu0
          %v1745 = vadd.f32 %v1451, %v1744
          %1746 = vmatprep.mubr.bf16.mxu0 %v1431
          %1747 = vmatmul.mubr.bf16.gmra.mxu0 %v1430
          %v1748 = vpop.f32.mrf.mxu0
          %v1749 = vadd.f32 %v1447, %v1748
          %v1750 = vpop.f32.mrf.mxu0
          %v1751 = vadd.f32 %v1451, %v1750
          %v1752 = vpop.f32.mrf.mxu0
          %v1753 = vadd.f32 %v1447, %v1752
          %v1754 = vpop.f32.mrf.mxu0
          %v1755 = vadd.f32 %v1451, %v1754
          %1756 = vmatprep.mubr.bf16.mxu0 %v1433
          %1757 = vmatmul.mubr.bf16.gmra.mxu0 %v1432
          %v1758 = vpop.f32.mrf.mxu0
          %v1759 = vadd.f32 %v1447, %v1758
          %v1760 = vpop.f32.mrf.mxu0
          %v1761 = vadd.f32 %v1451, %v1760
          %v1762 = vpop.f32.mrf.mxu0
          %v1763 = vadd.f32 %v1447, %v1762
          %v1764 = vpop.f32.mrf.mxu0
          %v1765 = vadd.f32 %v1451, %v1764
          %1766 = vmatprep.mubr.bf16.mxu0 %v1435
          %1767 = vmatmul.mubr.bf16.gmra.mxu0 %v1434
          %v1768 = vpop.f32.mrf.mxu0
          %v1769 = vadd.f32 %v1447, %v1768
          %v1770 = vpop.f32.mrf.mxu0
          %v1771 = vadd.f32 %v1451, %v1770
          %v1772 = vpop.f32.mrf.mxu0
          %v1773 = vadd.f32 %v1447, %v1772
          %v1774 = vpop.f32.mrf.mxu0
          %v1775 = vadd.f32 %v1451, %v1774
          %1776 = vmatprep.mubr.bf16.mxu0 %v1437
          %1777 = vmatmul.mubr.bf16.gmra.mxu0 %v1436
          %v1778 = vpop.f32.mrf.mxu0
          %v1779 = vadd.f32 %v1447, %v1778
          %v1780 = vpop.f32.mrf.mxu0
          %v1781 = vadd.f32 %v1451, %v1780
          %v1782 = vpop.f32.mrf.mxu0
          %v1783 = vadd.f32 %v1447, %v1782
          %v1784 = vpop.f32.mrf.mxu0
          %v1785 = vadd.f32 %v1451, %v1784
          %1786 = vmatprep.mubr.bf16.mxu0 %v1439
          %1787 = vmatmul.mubr.bf16.gmra.mxu0 %v1438
          %v1788 = vpop.f32.mrf.mxu0
          %v1789 = vadd.f32 %v1447, %v1788
          %v1790 = vpop.f32.mrf.mxu0
          %v1791 = vadd.f32 %v1451, %v1790
          %v1792 = vpop.f32.mrf.mxu0
          %v1793 = vadd.f32 %v1447, %v1792
          %v1794 = vpop.f32.mrf.mxu0
          %v1795 = vadd.f32 %v1451, %v1794
          %1796 = vmatprep.mubr.bf16.mxu0 %v1441
          %1797 = vmatmul.mubr.bf16.gmra.mxu0 %v1440
          %v1798 = vpop.f32.mrf.mxu0
          %v1799 = vadd.f32 %v1447, %v1798
          %v1800 = vpop.f32.mrf.mxu0
          %v1801 = vadd.f32 %v1451, %v1800
          %v1802 = vpop.f32.mrf.mxu0
          %v1803 = vadd.f32 %v1447, %v1802
          %v1804 = vpop.f32.mrf.mxu0
          %v1805 = vadd.f32 %v1451, %v1804
          %1806 = vdwg.mxu0
          %v1807 = vmul.f32 %v1649, 0.5
          %v1808 = vmul.f32 %v1651, 0.5
          %v1809 = vmul.f32 %v1653, 0.5
          %v1810 = vmul.f32 %v1655, 0.5
          %v1811 = vmul.f32 %v1659, 0.5
          %v1812 = vmul.f32 %v1661, 0.5
          %v1813 = vmul.f32 %v1663, 0.5
          %v1814 = vmul.f32 %v1665, 0.5
          %v1815 = vmul.f32 %v1669, 0.5
          %v1816 = vmul.f32 %v1671, 0.5
          %v1817 = vmul.f32 %v1673, 0.5
          %v1818 = vmul.f32 %v1675, 0.5
          %v1819 = vmul.f32 %v1679, 0.5
          %v1820 = vmul.f32 %v1681, 0.5
          %v1821 = vmul.f32 %v1683, 0.5
          %v1822 = vmul.f32 %v1685, 0.5
          %v1823 = vmul.f32 %v1689, 0.5
          %v1824 = vmul.f32 %v1691, 0.5
          %v1825 = vmul.f32 %v1693, 0.5
          %v1826 = vmul.f32 %v1695, 0.5
          %v1827 = vmul.f32 %v1699, 0.5
          %v1828 = vmul.f32 %v1701, 0.5
          %v1829 = vmul.f32 %v1703, 0.5
          %v1830 = vmul.f32 %v1705, 0.5
          %v1831 = vmul.f32 %v1709, 0.5
          %v1832 = vmul.f32 %v1711, 0.5
          %v1833 = vmul.f32 %v1713, 0.5
          %v1834 = vmul.f32 %v1715, 0.5
          %v1835 = vmul.f32 %v1719, 0.5
          %v1836 = vmul.f32 %v1721, 0.5
          %v1837 = vmul.f32 %v1723, 0.5
          %v1838 = vmul.f32 %v1725, 0.5
          %v1839 = vmul.f32 %v1729, 0.5
          %v1840 = vmul.f32 %v1731, 0.5
          %v1841 = vmul.f32 %v1733, 0.5
          %v1842 = vmul.f32 %v1735, 0.5
          %v1843 = vmul.f32 %v1739, 0.5
          %v1844 = vmul.f32 %v1741, 0.5
          %v1845 = vmul.f32 %v1743, 0.5
          %v1846 = vmul.f32 %v1745, 0.5
          %v1847 = vmul.f32 %v1749, 0.5
          %v1848 = vmul.f32 %v1751, 0.5
          %v1849 = vmul.f32 %v1753, 0.5
          %v1850 = vmul.f32 %v1755, 0.5
          %v1851 = vmul.f32 %v1759, 0.5
          %v1852 = vmul.f32 %v1761, 0.5
          %v1853 = vmul.f32 %v1763, 0.5
          %v1854 = vmul.f32 %v1765, 0.5
          %v1855 = vmul.f32 %v1769, 0.5
          %v1856 = vmul.f32 %v1771, 0.5
          %v1857 = vmul.f32 %v1773, 0.5
          %v1858 = vmul.f32 %v1775, 0.5
          %v1859 = vmul.f32 %v1779, 0.5
          %v1860 = vmul.f32 %v1781, 0.5
          %v1861 = vmul.f32 %v1783, 0.5
          %v1862 = vmul.f32 %v1785, 0.5
          %v1863 = vmul.f32 %v1789, 0.5
          %v1864 = vmul.f32 %v1791, 0.5
          %v1865 = vmul.f32 %v1793, 0.5
          %v1866 = vmul.f32 %v1795, 0.5
          %v1867 = vmul.f32 %v1799, 0.5
          %v1868 = vmul.f32 %v1801, 0.5
          %v1869 = vmul.f32 %v1803, 0.5
          %v1870 = vmul.f32 %v1805, 0.5
          %v1871 = vmul.f32 %v1649, 0.70710677
          %v1872 = vmul.f32 %v1651, 0.70710677
          %v1873 = vmul.f32 %v1653, 0.70710677
          %v1874 = vmul.f32 %v1655, 0.70710677
          %v1875 = vmul.f32 %v1659, 0.70710677
          %v1876 = vmul.f32 %v1661, 0.70710677
          %v1877 = vmul.f32 %v1663, 0.70710677
          %v1878 = vmul.f32 %v1665, 0.70710677
          %v1879 = vmul.f32 %v1669, 0.70710677
          %v1880 = vmul.f32 %v1671, 0.70710677
          %v1881 = vmul.f32 %v1673, 0.70710677
          %v1882 = vmul.f32 %v1675, 0.70710677
          %v1883 = vmul.f32 %v1679, 0.70710677
          %v1884 = vmul.f32 %v1681, 0.70710677
          %v1885 = vmul.f32 %v1683, 0.70710677
          %v1886 = vmul.f32 %v1685, 0.70710677
          %v1887 = vmul.f32 %v1689, 0.70710677
          %v1888 = vmul.f32 %v1691, 0.70710677
          %v1889 = vmul.f32 %v1693, 0.70710677
          %v1890 = vmul.f32 %v1695, 0.70710677
          %v1891 = vmul.f32 %v1699, 0.70710677
          %v1892 = vmul.f32 %v1701, 0.70710677
          %v1893 = vmul.f32 %v1703, 0.70710677
          %v1894 = vmul.f32 %v1705, 0.70710677
          %v1895 = vmul.f32 %v1709, 0.70710677
          %v1896 = vmul.f32 %v1711, 0.70710677
          %v1897 = vmul.f32 %v1713, 0.70710677
          %v1898 = vmul.f32 %v1715, 0.70710677
          %v1899 = vmul.f32 %v1719, 0.70710677
          %v1900 = vmul.f32 %v1721, 0.70710677
          %v1901 = vmul.f32 %v1723, 0.70710677
          %v1902 = vmul.f32 %v1725, 0.70710677
          %v1903 = vmul.f32 %v1729, 0.70710677
          %v1904 = vmul.f32 %v1731, 0.70710677
          %v1905 = vmul.f32 %v1733, 0.70710677
          %v1906 = vmul.f32 %v1735, 0.70710677
          %v1907 = vmul.f32 %v1739, 0.70710677
          %v1908 = vmul.f32 %v1741, 0.70710677
          %v1909 = vmul.f32 %v1743, 0.70710677
          %v1910 = vmul.f32 %v1745, 0.70710677
          %v1911 = vmul.f32 %v1749, 0.70710677
          %v1912 = vmul.f32 %v1751, 0.70710677
          %v1913 = vmul.f32 %v1753, 0.70710677
          %v1914 = vmul.f32 %v1755, 0.70710677
          %v1915 = vmul.f32 %v1759, 0.70710677
          %v1916 = vmul.f32 %v1761, 0.70710677
          %v1917 = vmul.f32 %v1763, 0.70710677
          %v1918 = vmul.f32 %v1765, 0.70710677
          %v1919 = vmul.f32 %v1769, 0.70710677
          %v1920 = vmul.f32 %v1771, 0.70710677
          %v1921 = vmul.f32 %v1773, 0.70710677
          %v1922 = vmul.f32 %v1775, 0.70710677
          %v1923 = vmul.f32 %v1779, 0.70710677
          %v1924 = vmul.f32 %v1781, 0.70710677
          %v1925 = vmul.f32 %v1783, 0.70710677
          %v1926 = vmul.f32 %v1785, 0.70710677
          %v1927 = vmul.f32 %v1789, 0.70710677
          %v1928 = vmul.f32 %v1791, 0.70710677
          %v1929 = vmul.f32 %v1793, 0.70710677
          %v1930 = vmul.f32 %v1795, 0.70710677
          %v1931 = vmul.f32 %v1799, 0.70710677
          %v1932 = vmul.f32 %v1801, 0.70710677
          %v1933 = vmul.f32 %v1803, 0.70710677
          %v1934 = vmul.f32 %v1805, 0.70710677
          %v1935 = verf.f32.pop %v1871
          %v1936 = verf.f32.pop %v1872
          %v1937 = verf.f32.pop %v1873
          %v1938 = verf.f32.pop %v1874
          %v1939 = verf.f32.pop %v1875
          %v1940 = verf.f32.pop %v1876
          %v1941 = verf.f32.pop %v1877
          %v1942 = verf.f32.pop %v1878
          %v1943 = verf.f32.pop %v1879
          %v1944 = verf.f32.pop %v1880
          %v1945 = verf.f32.pop %v1881
          %v1946 = verf.f32.pop %v1882
          %v1947 = verf.f32.pop %v1883
          %v1948 = verf.f32.pop %v1884
          %v1949 = verf.f32.pop %v1885
          %v1950 = verf.f32.pop %v1886
          %v1951 = verf.f32.pop %v1887
          %v1952 = verf.f32.pop %v1888
          %v1953 = verf.f32.pop %v1889
          %v1954 = verf.f32.pop %v1890
          %v1955 = verf.f32.pop %v1891
          %v1956 = verf.f32.pop %v1892
          %v1957 = verf.f32.pop %v1893
          %v1958 = verf.f32.pop %v1894
          %v1959 = verf.f32.pop %v1895
          %v1960 = verf.f32.pop %v1896
          %v1961 = verf.f32.pop %v1897
          %v1962 = verf.f32.pop %v1898
          %v1963 = verf.f32.pop %v1899
          %v1964 = verf.f32.pop %v1900
          %v1965 = verf.f32.pop %v1901
          %v1966 = verf.f32.pop %v1902
          %v1967 = verf.f32.pop %v1903
          %v1968 = verf.f32.pop %v1904
          %v1969 = verf.f32.pop %v1905
          %v1970 = verf.f32.pop %v1906
          %v1971 = verf.f32.pop %v1907
          %v1972 = verf.f32.pop %v1908
          %v1973 = verf.f32.pop %v1909
          %v1974 = verf.f32.pop %v1910
          %v1975 = verf.f32.pop %v1911
          %v1976 = verf.f32.pop %v1912
          %v1977 = verf.f32.pop %v1913
          %v1978 = verf.f32.pop %v1914
          %v1979 = verf.f32.pop %v1915
          %v1980 = verf.f32.pop %v1916
          %v1981 = verf.f32.pop %v1917
          %v1982 = verf.f32.pop %v1918
          %v1983 = verf.f32.pop %v1919
          %v1984 = verf.f32.pop %v1920
          %v1985 = verf.f32.pop %v1921
          %v1986 = verf.f32.pop %v1922
          %v1987 = verf.f32.pop %v1923
          %v1988 = verf.f32.pop %v1924
          %v1989 = verf.f32.pop %v1925
          %v1990 = verf.f32.pop %v1926
          %v1991 = verf.f32.pop %v1927
          %v1992 = verf.f32.pop %v1928
          %v1993 = verf.f32.pop %v1929
          %v1994 = verf.f32.pop %v1930
          %v1995 = verf.f32.pop %v1931
          %v1996 = verf.f32.pop %v1932
          %v1997 = verf.f32.pop %v1933
          %v1998 = verf.f32.pop %v1934
          %v1999 = vadd.f32 %v1935, 1.0
          %v2000 = vadd.f32 %v1936, 1.0
          %v2001 = vadd.f32 %v1937, 1.0
          %v2002 = vadd.f32 %v1938, 1.0
          %v2003 = vadd.f32 %v1939, 1.0
          %v2004 = vadd.f32 %v1940, 1.0
          %v2005 = vadd.f32 %v1941, 1.0
          %v2006 = vadd.f32 %v1942, 1.0
          %v2007 = vadd.f32 %v1943, 1.0
          %v2008 = vadd.f32 %v1944, 1.0
          %v2009 = vadd.f32 %v1945, 1.0
          %v2010 = vadd.f32 %v1946, 1.0
          %v2011 = vadd.f32 %v1947, 1.0
          %v2012 = vadd.f32 %v1948, 1.0
          %v2013 = vadd.f32 %v1949, 1.0
          %v2014 = vadd.f32 %v1950, 1.0
          %v2015 = vadd.f32 %v1951, 1.0
          %v2016 = vadd.f32 %v1952, 1.0
          %v2017 = vadd.f32 %v1953, 1.0
          %v2018 = vadd.f32 %v1954, 1.0
          %v2019 = vadd.f32 %v1955, 1.0
          %v2020 = vadd.f32 %v1956, 1.0
          %v2021 = vadd.f32 %v1957, 1.0
          %v2022 = vadd.f32 %v1958, 1.0
          %v2023 = vadd.f32 %v1959, 1.0
          %v2024 = vadd.f32 %v1960, 1.0
          %v2025 = vadd.f32 %v1961, 1.0
          %v2026 = vadd.f32 %v1962, 1.0
          %v2027 = vadd.f32 %v1963, 1.0
          %v2028 = vadd.f32 %v1964, 1.0
          %v2029 = vadd.f32 %v1965, 1.0
          %v2030 = vadd.f32 %v1966, 1.0
          %v2031 = vadd.f32 %v1967, 1.0
          %v2032 = vadd.f32 %v1968, 1.0
          %v2033 = vadd.f32 %v1969, 1.0
          %v2034 = vadd.f32 %v1970, 1.0
          %v2035 = vadd.f32 %v1971, 1.0
          %v2036 = vadd.f32 %v1972, 1.0
          %v2037 = vadd.f32 %v1973, 1.0
          %v2038 = vadd.f32 %v1974, 1.0
          %v2039 = vadd.f32 %v1975, 1.0
          %v2040 = vadd.f32 %v1976, 1.0
          %v2041 = vadd.f32 %v1977, 1.0
          %v2042 = vadd.f32 %v1978, 1.0
          %v2043 = vadd.f32 %v1979, 1.0
          %v2044 = vadd.f32 %v1980, 1.0
          %v2045 = vadd.f32 %v1981, 1.0
          %v2046 = vadd.f32 %v1982, 1.0
          %v2047 = vadd.f32 %v1983, 1.0
          %v2048 = vadd.f32 %v1984, 1.0
          %v2049 = vadd.f32 %v1985, 1.0
          %v2050 = vadd.f32 %v1986, 1.0
          %v2051 = vadd.f32 %v1987, 1.0
          %v2052 = vadd.f32 %v1988, 1.0
          %v2053 = vadd.f32 %v1989, 1.0
          %v2054 = vadd.f32 %v1990, 1.0
          %v2055 = vadd.f32 %v1991, 1.0
          %v2056 = vadd.f32 %v1992, 1.0
          %v2057 = vadd.f32 %v1993, 1.0
          %v2058 = vadd.f32 %v1994, 1.0
          %v2059 = vadd.f32 %v1995, 1.0
          %v2060 = vadd.f32 %v1996, 1.0
          %v2061 = vadd.f32 %v1997, 1.0
          %v2062 = vadd.f32 %v1998, 1.0
          %v2063 = vmul.f32 %v1807, %v1999
          %v2064 = vmul.f32 %v1808, %v2000
          %v2065 = vmul.f32 %v1809, %v2001
          %v2066 = vmul.f32 %v1810, %v2002
          %v2067 = vmul.f32 %v1811, %v2003
          %v2068 = vmul.f32 %v1812, %v2004
          %v2069 = vmul.f32 %v1813, %v2005
          %v2070 = vmul.f32 %v1814, %v2006
          %v2071 = vmul.f32 %v1815, %v2007
          %v2072 = vmul.f32 %v1816, %v2008
          %v2073 = vmul.f32 %v1817, %v2009
          %v2074 = vmul.f32 %v1818, %v2010
          %v2075 = vmul.f32 %v1819, %v2011
          %v2076 = vmul.f32 %v1820, %v2012
          %v2077 = vmul.f32 %v1821, %v2013
          %v2078 = vmul.f32 %v1822, %v2014
          %v2079 = vmul.f32 %v1823, %v2015
          %v2080 = vmul.f32 %v1824, %v2016
          %v2081 = vmul.f32 %v1825, %v2017
          %v2082 = vmul.f32 %v1826, %v2018
          %v2083 = vmul.f32 %v1827, %v2019
          %v2084 = vmul.f32 %v1828, %v2020
          %v2085 = vmul.f32 %v1829, %v2021
          %v2086 = vmul.f32 %v1830, %v2022
          %v2087 = vmul.f32 %v1831, %v2023
          %v2088 = vmul.f32 %v1832, %v2024
          %v2089 = vmul.f32 %v1833, %v2025
          %v2090 = vmul.f32 %v1834, %v2026
          %v2091 = vmul.f32 %v1835, %v2027
          %v2092 = vmul.f32 %v1836, %v2028
          %v2093 = vmul.f32 %v1837, %v2029
          %v2094 = vmul.f32 %v1838, %v2030
          %v2095 = vmul.f32 %v1839, %v2031
          %v2096 = vmul.f32 %v1840, %v2032
          %v2097 = vmul.f32 %v1841, %v2033
          %v2098 = vmul.f32 %v1842, %v2034
          %v2099 = vmul.f32 %v1843, %v2035
          %v2100 = vmul.f32 %v1844, %v2036
          %v2101 = vmul.f32 %v1845, %v2037
          %v2102 = vmul.f32 %v1846, %v2038
          %v2103 = vmul.f32 %v1847, %v2039
          %v2104 = vmul.f32 %v1848, %v2040
          %v2105 = vmul.f32 %v1849, %v2041
          %v2106 = vmul.f32 %v1850, %v2042
          %v2107 = vmul.f32 %v1851, %v2043
          %v2108 = vmul.f32 %v1852, %v2044
          %v2109 = vmul.f32 %v1853, %v2045
          %v2110 = vmul.f32 %v1854, %v2046
          %v2111 = vmul.f32 %v1855, %v2047
          %v2112 = vmul.f32 %v1856, %v2048
          %v2113 = vmul.f32 %v1857, %v2049
          %v2114 = vmul.f32 %v1858, %v2050
          %v2115 = vmul.f32 %v1859, %v2051
          %v2116 = vmul.f32 %v1860, %v2052
          %v2117 = vmul.f32 %v1861, %v2053
          %v2118 = vmul.f32 %v1862, %v2054
          %v2119 = vmul.f32 %v1863, %v2055
          %v2120 = vmul.f32 %v1864, %v2056
          %v2121 = vmul.f32 %v1865, %v2057
          %v2122 = vmul.f32 %v1866, %v2058
          %v2123 = vmul.f32 %v1867, %v2059
          %v2124 = vmul.f32 %v1868, %v2060
          %v2125 = vmul.f32 %v1869, %v2061
          %v2126 = vmul.f32 %v1870, %v2062
          %v2127 = vld [vmem:[#allocation12] sm:$0xff]
          %v2128 = vld [vmem:[#allocation12 + $0x8] sm:$0xff]
          %v2129 = vld [vmem:[#allocation12 + $0x10] sm:$0xff]
          %v2130 = vld [vmem:[#allocation12 + $0x18] sm:$0xff]
          %v2131 = vld [vmem:[#allocation12 + $0x20] sm:$0xff]
          %v2132 = vld [vmem:[#allocation12 + $0x28] sm:$0xff]
          %v2133 = vld [vmem:[#allocation12 + $0x30] sm:$0xff]
          %v2134 = vld [vmem:[#allocation12 + $0x38] sm:$0xff]
          %v2135 = vld [vmem:[#allocation12 + $0x40] sm:$0xff]
          %v2136 = vld [vmem:[#allocation12 + $0x48] sm:$0xff]
          %v2137 = vld [vmem:[#allocation12 + $0x50] sm:$0xff]
          %v2138 = vld [vmem:[#allocation12 + $0x58] sm:$0xff]
          %v2139 = vld [vmem:[#allocation12 + $0x60] sm:$0xff]
          %v2140 = vld [vmem:[#allocation12 + $0x68] sm:$0xff]
          %v2141 = vld [vmem:[#allocation12 + $0x70] sm:$0xff]
          %v2142 = vld [vmem:[#allocation12 + $0x78] sm:$0xff]
          %v2143 = vld [vmem:[#allocation12 + $0x80] sm:$0xff]
          %v2144 = vld [vmem:[#allocation12 + $0x88] sm:$0xff]
          %v2145 = vld [vmem:[#allocation12 + $0x90] sm:$0xff]
          %v2146 = vld [vmem:[#allocation12 + $0x98] sm:$0xff]
          %v2147 = vld [vmem:[#allocation12 + $0xa0] sm:$0xff]
          %v2148 = vld [vmem:[#allocation12 + $0xa8] sm:$0xff]
          %v2149 = vld [vmem:[#allocation12 + $0xb0] sm:$0xff]
          %v2150 = vld [vmem:[#allocation12 + $0xb8] sm:$0xff]
          %v2151 = vld [vmem:[#allocation12 + $0xc0] sm:$0xff]
          %v2152 = vld [vmem:[#allocation12 + $0xc8] sm:$0xff]
          %v2153 = vld [vmem:[#allocation12 + $0xd0] sm:$0xff]
          %v2154 = vld [vmem:[#allocation12 + $0xd8] sm:$0xff]
          %v2155 = vld [vmem:[#allocation12 + $0xe0] sm:$0xff]
          %v2156 = vld [vmem:[#allocation12 + $0xe8] sm:$0xff]
          %v2157 = vld [vmem:[#allocation12 + $0xf0] sm:$0xff]
          %v2158 = vld [vmem:[#allocation12 + $0xf8] sm:$0xff]
          %v2159 = vpack.c.bf16 %v2065, %v2063
          %v2160 = vpack.c.bf16 %v2066, %v2064
          %v2161 = vpack.c.bf16 %v2069, %v2067
          %v2162 = vpack.c.bf16 %v2070, %v2068
          %v2163 = vpack.c.bf16 %v2073, %v2071
          %v2164 = vpack.c.bf16 %v2074, %v2072
          %v2165 = vpack.c.bf16 %v2077, %v2075
          %v2166 = vpack.c.bf16 %v2078, %v2076
          %v2167 = vpack.c.bf16 %v2081, %v2079
          %v2168 = vpack.c.bf16 %v2082, %v2080
          %v2169 = vpack.c.bf16 %v2085, %v2083
          %v2170 = vpack.c.bf16 %v2086, %v2084
          %v2171 = vpack.c.bf16 %v2089, %v2087
          %v2172 = vpack.c.bf16 %v2090, %v2088
          %v2173 = vpack.c.bf16 %v2093, %v2091
          %v2174 = vpack.c.bf16 %v2094, %v2092
          %v2175 = vpack.c.bf16 %v2097, %v2095
          %v2176 = vpack.c.bf16 %v2098, %v2096
          %v2177 = vpack.c.bf16 %v2101, %v2099
          %v2178 = vpack.c.bf16 %v2102, %v2100
          %v2179 = vpack.c.bf16 %v2105, %v2103
          %v2180 = vpack.c.bf16 %v2106, %v2104
          %v2181 = vpack.c.bf16 %v2109, %v2107
          %v2182 = vpack.c.bf16 %v2110, %v2108
          %v2183 = vpack.c.bf16 %v2113, %v2111
          %v2184 = vpack.c.bf16 %v2114, %v2112
          %v2185 = vpack.c.bf16 %v2117, %v2115
          %v2186 = vpack.c.bf16 %v2118, %v2116
          %v2187 = vpack.c.bf16 %v2121, %v2119
          %v2188 = vpack.c.bf16 %v2122, %v2120
          %v2189 = vpack.c.bf16 %v2125, %v2123
          %v2190 = vpack.c.bf16 %v2126, %v2124
          %v2191 = vld [vmem:[#allocation14] sm:$0x3]
          %v2193 = vlaneseq
          %v2194 = vshrl.u32 %v2193, 7
          %v2195 = vsub.s32 0, %v2194
          %v2196 = vrot.slane %v2191, %v2195
          %v2197 = vlaneseq
          %v2198 = vshrl.u32 %v2197, 7
          %v2199 = vsub.s32 1, %v2198
          %v2200 = vrot.slane %v2191, %v2199
          %v2235 = vunpack.c.l.b16 %v2127
          %v2236 = vunpack.c.h.b16 %v2127
          %v2237 = vunpack.c.l.b16 %v2128
          %v2238 = vunpack.c.h.b16 %v2128
          %v2239 = vunpack.c.l.b16 %v2129
          %v2240 = vunpack.c.h.b16 %v2129
          %v2241 = vunpack.c.l.b16 %v2130
          %v2242 = vunpack.c.h.b16 %v2130
          %v2243 = vunpack.c.l.b16 %v2131
          %v2244 = vunpack.c.h.b16 %v2131
          %v2245 = vunpack.c.l.b16 %v2132
          %v2246 = vunpack.c.h.b16 %v2132
          %v2247 = vunpack.c.l.b16 %v2133
          %v2248 = vunpack.c.h.b16 %v2133
          %v2249 = vunpack.c.l.b16 %v2134
          %v2250 = vunpack.c.h.b16 %v2134
          %v2251 = vunpack.c.l.b16 %v2135
          %v2252 = vunpack.c.h.b16 %v2135
          %v2253 = vunpack.c.l.b16 %v2136
          %v2254 = vunpack.c.h.b16 %v2136
          %v2255 = vunpack.c.l.b16 %v2137
          %v2256 = vunpack.c.h.b16 %v2137
          %v2257 = vunpack.c.l.b16 %v2138
          %v2258 = vunpack.c.h.b16 %v2138
          %v2259 = vunpack.c.l.b16 %v2139
          %v2260 = vunpack.c.h.b16 %v2139
          %v2261 = vunpack.c.l.b16 %v2140
          %v2262 = vunpack.c.h.b16 %v2140
          %v2263 = vunpack.c.l.b16 %v2141
          %v2264 = vunpack.c.h.b16 %v2141
          %v2265 = vunpack.c.l.b16 %v2142
          %v2266 = vunpack.c.h.b16 %v2142
          %v2267 = vunpack.c.l.b16 %v2143
          %v2268 = vunpack.c.h.b16 %v2143
          %v2269 = vunpack.c.l.b16 %v2144
          %v2270 = vunpack.c.h.b16 %v2144
          %v2271 = vunpack.c.l.b16 %v2145
          %v2272 = vunpack.c.h.b16 %v2145
          %v2273 = vunpack.c.l.b16 %v2146
          %v2274 = vunpack.c.h.b16 %v2146
          %v2275 = vunpack.c.l.b16 %v2147
          %v2276 = vunpack.c.h.b16 %v2147
          %v2277 = vunpack.c.l.b16 %v2148
          %v2278 = vunpack.c.h.b16 %v2148
          %v2279 = vunpack.c.l.b16 %v2149
          %v2280 = vunpack.c.h.b16 %v2149
          %v2281 = vunpack.c.l.b16 %v2150
          %v2282 = vunpack.c.h.b16 %v2150
          %v2283 = vunpack.c.l.b16 %v2151
          %v2284 = vunpack.c.h.b16 %v2151
          %v2285 = vunpack.c.l.b16 %v2152
          %v2286 = vunpack.c.h.b16 %v2152
          %v2287 = vunpack.c.l.b16 %v2153
          %v2288 = vunpack.c.h.b16 %v2153
          %v2289 = vunpack.c.l.b16 %v2154
          %v2290 = vunpack.c.h.b16 %v2154
          %v2291 = vunpack.c.l.b16 %v2155
          %v2292 = vunpack.c.h.b16 %v2155
          %v2293 = vunpack.c.l.b16 %v2156
          %v2294 = vunpack.c.h.b16 %v2156
          %v2295 = vunpack.c.l.b16 %v2157
          %v2296 = vunpack.c.h.b16 %v2157
          %v2297 = vunpack.c.l.b16 %v2158
          %v2298 = vunpack.c.h.b16 %v2158
          %v2299 = vpack.c.b16 %v2237, %v2235
          %v2300 = vpack.c.b16 %v2238, %v2236
          %v2301 = vpack.c.b16 %v2241, %v2239
          %v2302 = vpack.c.b16 %v2242, %v2240
          %v2303 = vpack.c.b16 %v2245, %v2243
          %v2304 = vpack.c.b16 %v2246, %v2244
          %v2305 = vpack.c.b16 %v2249, %v2247
          %v2306 = vpack.c.b16 %v2250, %v2248
          %v2307 = vpack.c.b16 %v2253, %v2251
          %v2308 = vpack.c.b16 %v2254, %v2252
          %v2309 = vpack.c.b16 %v2257, %v2255
          %v2310 = vpack.c.b16 %v2258, %v2256
          %v2311 = vpack.c.b16 %v2261, %v2259
          %v2312 = vpack.c.b16 %v2262, %v2260
          %v2313 = vpack.c.b16 %v2265, %v2263
          %v2314 = vpack.c.b16 %v2266, %v2264
          %v2315 = vpack.c.b16 %v2269, %v2267
          %v2316 = vpack.c.b16 %v2270, %v2268
          %v2317 = vpack.c.b16 %v2273, %v2271
          %v2318 = vpack.c.b16 %v2274, %v2272
          %v2319 = vpack.c.b16 %v2277, %v2275
          %v2320 = vpack.c.b16 %v2278, %v2276
          %v2321 = vpack.c.b16 %v2281, %v2279
          %v2322 = vpack.c.b16 %v2282, %v2280
          %v2323 = vpack.c.b16 %v2285, %v2283
          %v2324 = vpack.c.b16 %v2286, %v2284
          %v2325 = vpack.c.b16 %v2289, %v2287
          %v2326 = vpack.c.b16 %v2290, %v2288
          %v2327 = vpack.c.b16 %v2293, %v2291
          %v2328 = vpack.c.b16 %v2294, %v2292
          %v2329 = vpack.c.b16 %v2297, %v2295
          %v2330 = vpack.c.b16 %v2298, %v2296
          %2363 = vmatprep.subr.bf16.mxu0 %v2314
          %2364 = vmatpush1.bf16.xpose.msra.mxu0 %v2313
          %2365 = vmatprep.subr.bf16.mxu0 %v2312
          %2366 = vmatpush1.bf16.xpose.msra.mxu0 %v2311
          %2367 = vmatprep.subr.bf16.mxu0 %v2310
          %2368 = vmatpush1.bf16.xpose.msra.mxu0 %v2309
          %2369 = vmatprep.subr.bf16.mxu0 %v2308
          %2370 = vmatpush1.bf16.xpose.msra.mxu0 %v2307
          %2371 = vmatprep.subr.bf16.mxu0 %v2306
          %2372 = vmatpush1.bf16.xpose.msra.mxu0 %v2305
          %2373 = vmatprep.subr.bf16.mxu0 %v2304
          %2374 = vmatpush1.bf16.xpose.msra.mxu0 %v2303
          %2375 = vmatprep.subr.bf16.mxu0 %v2302
          %2376 = vmatpush1.bf16.xpose.msra.mxu0 %v2301
          %2377 = vmatprep.subr.bf16.mxu0 %v2300
          %2378 = vmatpush1.bf16.xpose.msra.mxu0 %v2299
          %2379 = vmatprep.subr.bf16.mxu0 %v2330
          %2380 = vmatpush2.bf16.xpose.msra.mxu0 %v2329
          %2381 = vmatprep.subr.bf16.mxu0 %v2328
          %2382 = vmatpush2.bf16.xpose.msra.mxu0 %v2327
          %2383 = vmatprep.subr.bf16.mxu0 %v2326
          %2384 = vmatpush2.bf16.xpose.msra.mxu0 %v2325
          %2385 = vmatprep.subr.bf16.mxu0 %v2324
          %2386 = vmatpush2.bf16.xpose.msra.mxu0 %v2323
          %2387 = vmatprep.subr.bf16.mxu0 %v2322
          %2388 = vmatpush2.bf16.xpose.msra.mxu0 %v2321
          %2389 = vmatprep.subr.bf16.mxu0 %v2320
          %2390 = vmatpush2.bf16.xpose.msra.mxu0 %v2319
          %2391 = vmatprep.subr.bf16.mxu0 %v2318
          %2392 = vmatpush2.bf16.xpose.msra.mxu0 %v2317
          %2393 = vmatprep.subr.bf16.mxu0 %v2316
          %2394 = vmatpush2.bf16.xpose.msra.mxu0 %v2315
          %2395 = vmatprep.mubr.bf16.mxu0 %v2160
          %2396 = vmatmul.mubr.bf16.gmra.mxu0 %v2159
          %v2397 = vpop.f32.mrf.mxu0
          %v2398 = vadd.f32 %v2196, %v2397
          %v2399 = vpop.f32.mrf.mxu0
          %v2400 = vadd.f32 %v2200, %v2399
          %v2401 = vpop.f32.mrf.mxu0
          %v2402 = vadd.f32 %v2196, %v2401
          %v2403 = vpop.f32.mrf.mxu0
          %v2404 = vadd.f32 %v2200, %v2403
          %2405 = vmatprep.mubr.bf16.mxu0 %v2162
          %2406 = vmatmul.mubr.bf16.gmra.mxu0 %v2161
          %v2407 = vpop.f32.mrf.mxu0
          %v2408 = vadd.f32 %v2196, %v2407
          %v2409 = vpop.f32.mrf.mxu0
          %v2410 = vadd.f32 %v2200, %v2409
          %v2411 = vpop.f32.mrf.mxu0
          %v2412 = vadd.f32 %v2196, %v2411
          %v2413 = vpop.f32.mrf.mxu0
          %v2414 = vadd.f32 %v2200, %v2413
          %2415 = vmatprep.mubr.bf16.mxu0 %v2164
          %2416 = vmatmul.mubr.bf16.gmra.mxu0 %v2163
          %v2417 = vpop.f32.mrf.mxu0
          %v2418 = vadd.f32 %v2196, %v2417
          %v2419 = vpop.f32.mrf.mxu0
          %v2420 = vadd.f32 %v2200, %v2419
          %v2421 = vpop.f32.mrf.mxu0
          %v2422 = vadd.f32 %v2196, %v2421
          %v2423 = vpop.f32.mrf.mxu0
          %v2424 = vadd.f32 %v2200, %v2423
          %2425 = vmatprep.mubr.bf16.mxu0 %v2166
          %2426 = vmatmul.mubr.bf16.gmra.mxu0 %v2165
          %v2427 = vpop.f32.mrf.mxu0
          %v2428 = vadd.f32 %v2196, %v2427
          %v2429 = vpop.f32.mrf.mxu0
          %v2430 = vadd.f32 %v2200, %v2429
          %v2431 = vpop.f32.mrf.mxu0
          %v2432 = vadd.f32 %v2196, %v2431
          %v2433 = vpop.f32.mrf.mxu0
          %v2434 = vadd.f32 %v2200, %v2433
          %2435 = vmatprep.mubr.bf16.mxu0 %v2168
          %2436 = vmatmul.mubr.bf16.gmra.mxu0 %v2167
          %v2437 = vpop.f32.mrf.mxu0
          %v2438 = vadd.f32 %v2196, %v2437
          %v2439 = vpop.f32.mrf.mxu0
          %v2440 = vadd.f32 %v2200, %v2439
          %v2441 = vpop.f32.mrf.mxu0
          %v2442 = vadd.f32 %v2196, %v2441
          %v2443 = vpop.f32.mrf.mxu0
          %v2444 = vadd.f32 %v2200, %v2443
          %2445 = vmatprep.mubr.bf16.mxu0 %v2170
          %2446 = vmatmul.mubr.bf16.gmra.mxu0 %v2169
          %v2447 = vpop.f32.mrf.mxu0
          %v2448 = vadd.f32 %v2196, %v2447
          %v2449 = vpop.f32.mrf.mxu0
          %v2450 = vadd.f32 %v2200, %v2449
          %v2451 = vpop.f32.mrf.mxu0
          %v2452 = vadd.f32 %v2196, %v2451
          %v2453 = vpop.f32.mrf.mxu0
          %v2454 = vadd.f32 %v2200, %v2453
          %2455 = vmatprep.mubr.bf16.mxu0 %v2172
          %2456 = vmatmul.mubr.bf16.gmra.mxu0 %v2171
          %v2457 = vpop.f32.mrf.mxu0
          %v2458 = vadd.f32 %v2196, %v2457
          %v2459 = vpop.f32.mrf.mxu0
          %v2460 = vadd.f32 %v2200, %v2459
          %v2461 = vpop.f32.mrf.mxu0
          %v2462 = vadd.f32 %v2196, %v2461
          %v2463 = vpop.f32.mrf.mxu0
          %v2464 = vadd.f32 %v2200, %v2463
          %2465 = vmatprep.mubr.bf16.mxu0 %v2174
          %2466 = vmatmul.mubr.bf16.gmra.mxu0 %v2173
          %v2467 = vpop.f32.mrf.mxu0
          %v2468 = vadd.f32 %v2196, %v2467
          %v2469 = vpop.f32.mrf.mxu0
          %v2470 = vadd.f32 %v2200, %v2469
          %v2471 = vpop.f32.mrf.mxu0
          %v2472 = vadd.f32 %v2196, %v2471
          %v2473 = vpop.f32.mrf.mxu0
          %v2474 = vadd.f32 %v2200, %v2473
          %2475 = vmatprep.mubr.bf16.mxu0 %v2176
          %2476 = vmatmul.mubr.bf16.gmra.mxu0 %v2175
          %v2477 = vpop.f32.mrf.mxu0
          %v2478 = vadd.f32 %v2196, %v2477
          %v2479 = vpop.f32.mrf.mxu0
          %v2480 = vadd.f32 %v2200, %v2479
          %v2481 = vpop.f32.mrf.mxu0
          %v2482 = vadd.f32 %v2196, %v2481
          %v2483 = vpop.f32.mrf.mxu0
          %v2484 = vadd.f32 %v2200, %v2483
          %2485 = vmatprep.mubr.bf16.mxu0 %v2178
          %2486 = vmatmul.mubr.bf16.gmra.mxu0 %v2177
          %v2487 = vpop.f32.mrf.mxu0
          %v2488 = vadd.f32 %v2196, %v2487
          %v2489 = vpop.f32.mrf.mxu0
          %v2490 = vadd.f32 %v2200, %v2489
          %v2491 = vpop.f32.mrf.mxu0
          %v2492 = vadd.f32 %v2196, %v2491
          %v2493 = vpop.f32.mrf.mxu0
          %v2494 = vadd.f32 %v2200, %v2493
          %2495 = vmatprep.mubr.bf16.mxu0 %v2180
          %2496 = vmatmul.mubr.bf16.gmra.mxu0 %v2179
          %v2497 = vpop.f32.mrf.mxu0
          %v2498 = vadd.f32 %v2196, %v2497
          %v2499 = vpop.f32.mrf.mxu0
          %v2500 = vadd.f32 %v2200, %v2499
          %v2501 = vpop.f32.mrf.mxu0
          %v2502 = vadd.f32 %v2196, %v2501
          %v2503 = vpop.f32.mrf.mxu0
          %v2504 = vadd.f32 %v2200, %v2503
          %2505 = vmatprep.mubr.bf16.mxu0 %v2182
          %2506 = vmatmul.mubr.bf16.gmra.mxu0 %v2181
          %v2507 = vpop.f32.mrf.mxu0
          %v2508 = vadd.f32 %v2196, %v2507
          %v2509 = vpop.f32.mrf.mxu0
          %v2510 = vadd.f32 %v2200, %v2509
          %v2511 = vpop.f32.mrf.mxu0
          %v2512 = vadd.f32 %v2196, %v2511
          %v2513 = vpop.f32.mrf.mxu0
          %v2514 = vadd.f32 %v2200, %v2513
          %2515 = vmatprep.mubr.bf16.mxu0 %v2184
          %2516 = vmatmul.mubr.bf16.gmra.mxu0 %v2183
          %v2517 = vpop.f32.mrf.mxu0
          %v2518 = vadd.f32 %v2196, %v2517
          %v2519 = vpop.f32.mrf.mxu0
          %v2520 = vadd.f32 %v2200, %v2519
          %v2521 = vpop.f32.mrf.mxu0
          %v2522 = vadd.f32 %v2196, %v2521
          %v2523 = vpop.f32.mrf.mxu0
          %v2524 = vadd.f32 %v2200, %v2523
          %2525 = vmatprep.mubr.bf16.mxu0 %v2186
          %2526 = vmatmul.mubr.bf16.gmra.mxu0 %v2185
          %v2527 = vpop.f32.mrf.mxu0
          %v2528 = vadd.f32 %v2196, %v2527
          %v2529 = vpop.f32.mrf.mxu0
          %v2530 = vadd.f32 %v2200, %v2529
          %v2531 = vpop.f32.mrf.mxu0
          %v2532 = vadd.f32 %v2196, %v2531
          %v2533 = vpop.f32.mrf.mxu0
          %v2534 = vadd.f32 %v2200, %v2533
          %2535 = vmatprep.mubr.bf16.mxu0 %v2188
          %2536 = vmatmul.mubr.bf16.gmra.mxu0 %v2187
          %v2537 = vpop.f32.mrf.mxu0
          %v2538 = vadd.f32 %v2196, %v2537
          %v2539 = vpop.f32.mrf.mxu0
          %v2540 = vadd.f32 %v2200, %v2539
          %v2541 = vpop.f32.mrf.mxu0
          %v2542 = vadd.f32 %v2196, %v2541
          %v2543 = vpop.f32.mrf.mxu0
          %v2544 = vadd.f32 %v2200, %v2543
          %2545 = vmatprep.mubr.bf16.mxu0 %v2190
          %2546 = vmatmul.mubr.bf16.gmra.mxu0 %v2189
          %v2547 = vpop.f32.mrf.mxu0
          %v2548 = vadd.f32 %v2196, %v2547
          %v2549 = vpop.f32.mrf.mxu0
          %v2550 = vadd.f32 %v2200, %v2549
          %v2551 = vpop.f32.mrf.mxu0
          %v2552 = vadd.f32 %v2196, %v2551
          %v2553 = vpop.f32.mrf.mxu0
          %v2554 = vadd.f32 %v2200, %v2553
          %2555 = vdwg.mxu0
          %v2556 = vmul.f32 %v2398, %v2398
          %v2557 = vmul.f32 %v2400, %v2400
          %v2558 = vmul.f32 %v2402, %v2402
          %v2559 = vmul.f32 %v2404, %v2404
          %v2560 = vmul.f32 %v2408, %v2408
          %v2561 = vmul.f32 %v2410, %v2410
          %v2562 = vmul.f32 %v2412, %v2412
          %v2563 = vmul.f32 %v2414, %v2414
          %v2564 = vmul.f32 %v2418, %v2418
          %v2565 = vmul.f32 %v2420, %v2420
          %v2566 = vmul.f32 %v2422, %v2422
          %v2567 = vmul.f32 %v2424, %v2424
          %v2568 = vmul.f32 %v2428, %v2428
          %v2569 = vmul.f32 %v2430, %v2430
          %v2570 = vmul.f32 %v2432, %v2432
          %v2571 = vmul.f32 %v2434, %v2434
          %v2572 = vmul.f32 %v2438, %v2438
          %v2573 = vmul.f32 %v2440, %v2440
          %v2574 = vmul.f32 %v2442, %v2442
          %v2575 = vmul.f32 %v2444, %v2444
          %v2576 = vmul.f32 %v2448, %v2448
          %v2577 = vmul.f32 %v2450, %v2450
          %v2578 = vmul.f32 %v2452, %v2452
          %v2579 = vmul.f32 %v2454, %v2454
          %v2580 = vmul.f32 %v2458, %v2458
          %v2581 = vmul.f32 %v2460, %v2460
          %v2582 = vmul.f32 %v2462, %v2462
          %v2583 = vmul.f32 %v2464, %v2464
          %v2584 = vmul.f32 %v2468, %v2468
          %v2585 = vmul.f32 %v2470, %v2470
          %v2586 = vmul.f32 %v2472, %v2472
          %v2587 = vmul.f32 %v2474, %v2474
          %v2588 = vmul.f32 %v2478, %v2478
          %v2589 = vmul.f32 %v2480, %v2480
          %v2590 = vmul.f32 %v2482, %v2482
          %v2591 = vmul.f32 %v2484, %v2484
          %v2592 = vmul.f32 %v2488, %v2488
          %v2593 = vmul.f32 %v2490, %v2490
          %v2594 = vmul.f32 %v2492, %v2492
          %v2595 = vmul.f32 %v2494, %v2494
          %v2596 = vmul.f32 %v2498, %v2498
          %v2597 = vmul.f32 %v2500, %v2500
          %v2598 = vmul.f32 %v2502, %v2502
          %v2599 = vmul.f32 %v2504, %v2504
          %v2600 = vmul.f32 %v2508, %v2508
          %v2601 = vmul.f32 %v2510, %v2510
          %v2602 = vmul.f32 %v2512, %v2512
          %v2603 = vmul.f32 %v2514, %v2514
          %v2604 = vmul.f32 %v2518, %v2518
          %v2605 = vmul.f32 %v2520, %v2520
          %v2606 = vmul.f32 %v2522, %v2522
          %v2607 = vmul.f32 %v2524, %v2524
          %v2608 = vmul.f32 %v2528, %v2528
          %v2609 = vmul.f32 %v2530, %v2530
          %v2610 = vmul.f32 %v2532, %v2532
          %v2611 = vmul.f32 %v2534, %v2534
          %v2612 = vmul.f32 %v2538, %v2538
          %v2613 = vmul.f32 %v2540, %v2540
          %v2614 = vmul.f32 %v2542, %v2542
          %v2615 = vmul.f32 %v2544, %v2544
          %v2616 = vmul.f32 %v2548, %v2548
          %v2617 = vmul.f32 %v2550, %v2550
          %v2618 = vmul.f32 %v2552, %v2552
          %v2619 = vmul.f32 %v2554, %v2554
          %v2620 = vadd.f32 %v2556, %v2557
          %2621 = vadd.xlane.f32.xlu0 %v2620
          %v2622 = vpop.xlane.xlu0 %2621
          %v2623 = vadd.f32 %v2558, %v2559
          %2624 = vadd.xlane.f32.xlu0 %v2623
          %v2625 = vpop.xlane.xlu0 %2624
          %v2626 = vadd.f32 %v2560, %v2561
          %2627 = vadd.xlane.f32.xlu0 %v2626
          %v2628 = vpop.xlane.xlu0 %2627
          %v2629 = vadd.f32 %v2562, %v2563
          %2630 = vadd.xlane.f32.xlu0 %v2629
          %v2631 = vpop.xlane.xlu0 %2630
          %v2632 = vadd.f32 %v2564, %v2565
          %2633 = vadd.xlane.f32.xlu0 %v2632
          %v2634 = vpop.xlane.xlu0 %2633
          %v2635 = vadd.f32 %v2566, %v2567
          %2636 = vadd.xlane.f32.xlu0 %v2635
          %v2637 = vpop.xlane.xlu0 %2636
          %v2638 = vadd.f32 %v2568, %v2569
          %2639 = vadd.xlane.f32.xlu0 %v2638
          %v2640 = vpop.xlane.xlu0 %2639
          %v2641 = vadd.f32 %v2570, %v2571
          %2642 = vadd.xlane.f32.xlu0 %v2641
          %v2643 = vpop.xlane.xlu0 %2642
          %v2644 = vadd.f32 %v2572, %v2573
          %2645 = vadd.xlane.f32.xlu0 %v2644
          %v2646 = vpop.xlane.xlu0 %2645
          %v2647 = vadd.f32 %v2574, %v2575
          %2648 = vadd.xlane.f32.xlu0 %v2647
          %v2649 = vpop.xlane.xlu0 %2648
          %v2650 = vadd.f32 %v2576, %v2577
          %2651 = vadd.xlane.f32.xlu0 %v2650
          %v2652 = vpop.xlane.xlu0 %2651
          %v2653 = vadd.f32 %v2578, %v2579
          %2654 = vadd.xlane.f32.xlu0 %v2653
          %v2655 = vpop.xlane.xlu0 %2654
          %v2656 = vadd.f32 %v2580, %v2581
          %2657 = vadd.xlane.f32.xlu0 %v2656
          %v2658 = vpop.xlane.xlu0 %2657
          %v2659 = vadd.f32 %v2582, %v2583
          %2660 = vadd.xlane.f32.xlu0 %v2659
          %v2661 = vpop.xlane.xlu0 %2660
          %v2662 = vadd.f32 %v2584, %v2585
          %2663 = vadd.xlane.f32.xlu0 %v2662
          %v2664 = vpop.xlane.xlu0 %2663
          %v2665 = vadd.f32 %v2586, %v2587
          %2666 = vadd.xlane.f32.xlu0 %v2665
          %v2667 = vpop.xlane.xlu0 %2666
          %v2668 = vadd.f32 %v2588, %v2589
          %2669 = vadd.xlane.f32.xlu0 %v2668
          %v2670 = vpop.xlane.xlu0 %2669
          %v2671 = vadd.f32 %v2590, %v2591
          %2672 = vadd.xlane.f32.xlu0 %v2671
          %v2673 = vpop.xlane.xlu0 %2672
          %v2674 = vadd.f32 %v2592, %v2593
          %2675 = vadd.xlane.f32.xlu0 %v2674
          %v2676 = vpop.xlane.xlu0 %2675
          %v2677 = vadd.f32 %v2594, %v2595
          %2678 = vadd.xlane.f32.xlu0 %v2677
          %v2679 = vpop.xlane.xlu0 %2678
          %v2680 = vadd.f32 %v2596, %v2597
          %2681 = vadd.xlane.f32.xlu0 %v2680
          %v2682 = vpop.xlane.xlu0 %2681
          %v2683 = vadd.f32 %v2598, %v2599
          %2684 = vadd.xlane.f32.xlu0 %v2683
          %v2685 = vpop.xlane.xlu0 %2684
          %v2686 = vadd.f32 %v2600, %v2601
          %2687 = vadd.xlane.f32.xlu0 %v2686
          %v2688 = vpop.xlane.xlu0 %2687
          %v2689 = vadd.f32 %v2602, %v2603
          %2690 = vadd.xlane.f32.xlu0 %v2689
          %v2691 = vpop.xlane.xlu0 %2690
          %v2692 = vadd.f32 %v2604, %v2605
          %2693 = vadd.xlane.f32.xlu0 %v2692
          %v2694 = vpop.xlane.xlu0 %2693
          %v2695 = vadd.f32 %v2606, %v2607
          %2696 = vadd.xlane.f32.xlu0 %v2695
          %v2697 = vpop.xlane.xlu0 %2696
          %v2698 = vadd.f32 %v2608, %v2609
          %2699 = vadd.xlane.f32.xlu0 %v2698
          %v2700 = vpop.xlane.xlu0 %2699
          %v2701 = vadd.f32 %v2610, %v2611
          %2702 = vadd.xlane.f32.xlu0 %v2701
          %v2703 = vpop.xlane.xlu0 %2702
          %v2704 = vadd.f32 %v2612, %v2613
          %2705 = vadd.xlane.f32.xlu0 %v2704
          %v2706 = vpop.xlane.xlu0 %2705
          %v2707 = vadd.f32 %v2614, %v2615
          %2708 = vadd.xlane.f32.xlu0 %v2707
          %v2709 = vpop.xlane.xlu0 %2708
          %v2710 = vadd.f32 %v2616, %v2617
          %2711 = vadd.xlane.f32.xlu0 %v2710
          %v2712 = vpop.xlane.xlu0 %2711
          %v2713 = vadd.f32 %v2618, %v2619
          %2714 = vadd.xlane.f32.xlu0 %v2713
          %v2715 = vpop.xlane.xlu0 %2714
          %v2716 = vmax.f32 %v2622, 1e-24
          %v2717 = vmax.f32 %v2625, 1e-24
          %v2718 = vmax.f32 %v2628, 1e-24
          %v2719 = vmax.f32 %v2631, 1e-24
          %v2720 = vmax.f32 %v2634, 1e-24
          %v2721 = vmax.f32 %v2637, 1e-24
          %v2722 = vmax.f32 %v2640, 1e-24
          %v2723 = vmax.f32 %v2643, 1e-24
          %v2724 = vmax.f32 %v2646, 1e-24
          %v2725 = vmax.f32 %v2649, 1e-24
          %v2726 = vmax.f32 %v2652, 1e-24
          %v2727 = vmax.f32 %v2655, 1e-24
          %v2728 = vmax.f32 %v2658, 1e-24
          %v2729 = vmax.f32 %v2661, 1e-24
          %v2730 = vmax.f32 %v2664, 1e-24
          %v2731 = vmax.f32 %v2667, 1e-24
          %v2732 = vmax.f32 %v2670, 1e-24
          %v2733 = vmax.f32 %v2673, 1e-24
          %v2734 = vmax.f32 %v2676, 1e-24
          %v2735 = vmax.f32 %v2679, 1e-24
          %v2736 = vmax.f32 %v2682, 1e-24
          %v2737 = vmax.f32 %v2685, 1e-24
          %v2738 = vmax.f32 %v2688, 1e-24
          %v2739 = vmax.f32 %v2691, 1e-24
          %v2740 = vmax.f32 %v2694, 1e-24
          %v2741 = vmax.f32 %v2697, 1e-24
          %v2742 = vmax.f32 %v2700, 1e-24
          %v2743 = vmax.f32 %v2703, 1e-24
          %v2744 = vmax.f32 %v2706, 1e-24
          %v2745 = vmax.f32 %v2709, 1e-24
          %v2746 = vmax.f32 %v2712, 1e-24
          %v2747 = vmax.f32 %v2715, 1e-24
          %v2748 = vrsqrt.pop %v2716
          %v2749 = vrsqrt.pop %v2717
          %v2750 = vrsqrt.pop %v2718
          %v2751 = vrsqrt.pop %v2719
          %v2752 = vrsqrt.pop %v2720
          %v2753 = vrsqrt.pop %v2721
          %v2754 = vrsqrt.pop %v2722
          %v2755 = vrsqrt.pop %v2723
          %v2756 = vrsqrt.pop %v2724
          %v2757 = vrsqrt.pop %v2725
          %v2758 = vrsqrt.pop %v2726
          %v2759 = vrsqrt.pop %v2727
          %v2760 = vrsqrt.pop %v2728
          %v2761 = vrsqrt.pop %v2729
          %v2762 = vrsqrt.pop %v2730
          %v2763 = vrsqrt.pop %v2731
          %v2764 = vrsqrt.pop %v2732
          %v2765 = vrsqrt.pop %v2733
          %v2766 = vrsqrt.pop %v2734
          %v2767 = vrsqrt.pop %v2735
          %v2768 = vrsqrt.pop %v2736
          %v2769 = vrsqrt.pop %v2737
          %v2770 = vrsqrt.pop %v2738
          %v2771 = vrsqrt.pop %v2739
          %v2772 = vrsqrt.pop %v2740
          %v2773 = vrsqrt.pop %v2741
          %v2774 = vrsqrt.pop %v2742
          %v2775 = vrsqrt.pop %v2743
          %v2776 = vrsqrt.pop %v2744
          %v2777 = vrsqrt.pop %v2745
          %v2778 = vrsqrt.pop %v2746
          %v2779 = vrsqrt.pop %v2747
          %v2780 = vmul.f32 %v2398, %v2748
          %v2781 = vmul.f32 %v2400, %v2748
          %v2782 = vmul.f32 %v2402, %v2749
          %v2783 = vmul.f32 %v2404, %v2749
          %v2784 = vmul.f32 %v2408, %v2750
          %v2785 = vmul.f32 %v2410, %v2750
          %v2786 = vmul.f32 %v2412, %v2751
          %v2787 = vmul.f32 %v2414, %v2751
          %v2788 = vmul.f32 %v2418, %v2752
          %v2789 = vmul.f32 %v2420, %v2752
          %v2790 = vmul.f32 %v2422, %v2753
          %v2791 = vmul.f32 %v2424, %v2753
          %v2792 = vmul.f32 %v2428, %v2754
          %v2793 = vmul.f32 %v2430, %v2754
          %v2794 = vmul.f32 %v2432, %v2755
          %v2795 = vmul.f32 %v2434, %v2755
          %v2796 = vmul.f32 %v2438, %v2756
          %v2797 = vmul.f32 %v2440, %v2756
          %v2798 = vmul.f32 %v2442, %v2757
          %v2799 = vmul.f32 %v2444, %v2757
          %v2800 = vmul.f32 %v2448, %v2758
          %v2801 = vmul.f32 %v2450, %v2758
          %v2802 = vmul.f32 %v2452, %v2759
          %v2803 = vmul.f32 %v2454, %v2759
          %v2804 = vmul.f32 %v2458, %v2760
          %v2805 = vmul.f32 %v2460, %v2760
          %v2806 = vmul.f32 %v2462, %v2761
          %v2807 = vmul.f32 %v2464, %v2761
          %v2808 = vmul.f32 %v2468, %v2762
          %v2809 = vmul.f32 %v2470, %v2762
          %v2810 = vmul.f32 %v2472, %v2763
          %v2811 = vmul.f32 %v2474, %v2763
          %v2812 = vmul.f32 %v2478, %v2764
          %v2813 = vmul.f32 %v2480, %v2764
          %v2814 = vmul.f32 %v2482, %v2765
          %v2815 = vmul.f32 %v2484, %v2765
          %v2816 = vmul.f32 %v2488, %v2766
          %v2817 = vmul.f32 %v2490, %v2766
          %v2818 = vmul.f32 %v2492, %v2767
          %v2819 = vmul.f32 %v2494, %v2767
          %v2820 = vmul.f32 %v2498, %v2768
          %v2821 = vmul.f32 %v2500, %v2768
          %v2822 = vmul.f32 %v2502, %v2769
          %v2823 = vmul.f32 %v2504, %v2769
          %v2824 = vmul.f32 %v2508, %v2770
          %v2825 = vmul.f32 %v2510, %v2770
          %v2826 = vmul.f32 %v2512, %v2771
          %v2827 = vmul.f32 %v2514, %v2771
          %v2828 = vmul.f32 %v2518, %v2772
          %v2829 = vmul.f32 %v2520, %v2772
          %v2830 = vmul.f32 %v2522, %v2773
          %v2831 = vmul.f32 %v2524, %v2773
          %v2832 = vmul.f32 %v2528, %v2774
          %v2833 = vmul.f32 %v2530, %v2774
          %v2834 = vmul.f32 %v2532, %v2775
          %v2835 = vmul.f32 %v2534, %v2775
          %v2836 = vmul.f32 %v2538, %v2776
          %v2837 = vmul.f32 %v2540, %v2776
          %v2838 = vmul.f32 %v2542, %v2777
          %v2839 = vmul.f32 %v2544, %v2777
          %v2840 = vmul.f32 %v2548, %v2778
          %v2841 = vmul.f32 %v2550, %v2778
          %v2842 = vmul.f32 %v2552, %v2779
          %v2843 = vmul.f32 %v2554, %v2779
          %v2844 = vpack.c.bf16 %v2782, %v2780
          %v2845 = vpack.c.bf16 %v2783, %v2781
          %v2846 = vpack.c.bf16 %v2786, %v2784
          %v2847 = vpack.c.bf16 %v2787, %v2785
          %v2848 = vpack.c.bf16 %v2790, %v2788
          %v2849 = vpack.c.bf16 %v2791, %v2789
          %v2850 = vpack.c.bf16 %v2794, %v2792
          %v2851 = vpack.c.bf16 %v2795, %v2793
          %v2852 = vpack.c.bf16 %v2798, %v2796
          %v2853 = vpack.c.bf16 %v2799, %v2797
          %v2854 = vpack.c.bf16 %v2802, %v2800
          %v2855 = vpack.c.bf16 %v2803, %v2801
          %v2856 = vpack.c.bf16 %v2806, %v2804
          %v2857 = vpack.c.bf16 %v2807, %v2805
          %v2858 = vpack.c.bf16 %v2810, %v2808
          %v2859 = vpack.c.bf16 %v2811, %v2809
          %v2860 = vpack.c.bf16 %v2814, %v2812
          %v2861 = vpack.c.bf16 %v2815, %v2813
          %v2862 = vpack.c.bf16 %v2818, %v2816
          %v2863 = vpack.c.bf16 %v2819, %v2817
          %v2864 = vpack.c.bf16 %v2822, %v2820
          %v2865 = vpack.c.bf16 %v2823, %v2821
          %v2866 = vpack.c.bf16 %v2826, %v2824
          %v2867 = vpack.c.bf16 %v2827, %v2825
          %v2868 = vpack.c.bf16 %v2830, %v2828
          %v2869 = vpack.c.bf16 %v2831, %v2829
          %v2870 = vpack.c.bf16 %v2834, %v2832
          %v2871 = vpack.c.bf16 %v2835, %v2833
          %v2872 = vpack.c.bf16 %v2838, %v2836
          %v2873 = vpack.c.bf16 %v2839, %v2837
          %v2874 = vpack.c.bf16 %v2842, %v2840
          %v2875 = vpack.c.bf16 %v2843, %v2841
          %v2908 = vunpack.c.l.b16 %v2844
          %v2909 = vunpack.c.l.b16 %v2845
          %v2910 = vunpack.c.h.b16 %v2844
          %v2911 = vunpack.c.h.b16 %v2845
          %v2912 = vunpack.c.l.b16 %v2846
          %v2913 = vunpack.c.l.b16 %v2847
          %v2914 = vunpack.c.h.b16 %v2846
          %v2915 = vunpack.c.h.b16 %v2847
          %v2916 = vunpack.c.l.b16 %v2848
          %v2917 = vunpack.c.l.b16 %v2849
          %v2918 = vunpack.c.h.b16 %v2848
          %v2919 = vunpack.c.h.b16 %v2849
          %v2920 = vunpack.c.l.b16 %v2850
          %v2921 = vunpack.c.l.b16 %v2851
          %v2922 = vunpack.c.h.b16 %v2850
          %v2923 = vunpack.c.h.b16 %v2851
          %v2924 = vunpack.c.l.b16 %v2852
          %v2925 = vunpack.c.l.b16 %v2853
          %v2926 = vunpack.c.h.b16 %v2852
          %v2927 = vunpack.c.h.b16 %v2853
          %v2928 = vunpack.c.l.b16 %v2854
          %v2929 = vunpack.c.l.b16 %v2855
          %v2930 = vunpack.c.h.b16 %v2854
          %v2931 = vunpack.c.h.b16 %v2855
          %v2932 = vunpack.c.l.b16 %v2856
          %v2933 = vunpack.c.l.b16 %v2857
          %v2934 = vunpack.c.h.b16 %v2856
          %v2935 = vunpack.c.h.b16 %v2857
          %v2936 = vunpack.c.l.b16 %v2858
          %v2937 = vunpack.c.l.b16 %v2859
          %v2938 = vunpack.c.h.b16 %v2858
          %v2939 = vunpack.c.h.b16 %v2859
          %v2940 = vunpack.c.l.b16 %v2860
          %v2941 = vunpack.c.l.b16 %v2861
          %v2942 = vunpack.c.h.b16 %v2860
          %v2943 = vunpack.c.h.b16 %v2861
          %v2944 = vunpack.c.l.b16 %v2862
          %v2945 = vunpack.c.l.b16 %v2863
          %v2946 = vunpack.c.h.b16 %v2862
          %v2947 = vunpack.c.h.b16 %v2863
          %v2948 = vunpack.c.l.b16 %v2864
          %v2949 = vunpack.c.l.b16 %v2865
          %v2950 = vunpack.c.h.b16 %v2864
          %v2951 = vunpack.c.h.b16 %v2865
          %v2952 = vunpack.c.l.b16 %v2866
          %v2953 = vunpack.c.l.b16 %v2867
          %v2954 = vunpack.c.h.b16 %v2866
          %v2955 = vunpack.c.h.b16 %v2867
          %v2956 = vunpack.c.l.b16 %v2868
          %v2957 = vunpack.c.l.b16 %v2869
          %v2958 = vunpack.c.h.b16 %v2868
          %v2959 = vunpack.c.h.b16 %v2869
          %v2960 = vunpack.c.l.b16 %v2870
          %v2961 = vunpack.c.l.b16 %v2871
          %v2962 = vunpack.c.h.b16 %v2870
          %v2963 = vunpack.c.h.b16 %v2871
          %v2964 = vunpack.c.l.b16 %v2872
          %v2965 = vunpack.c.l.b16 %v2873
          %v2966 = vunpack.c.h.b16 %v2872
          %v2967 = vunpack.c.h.b16 %v2873
          %v2968 = vunpack.c.l.b16 %v2874
          %v2969 = vunpack.c.l.b16 %v2875
          %v2970 = vunpack.c.h.b16 %v2874
          %v2971 = vunpack.c.h.b16 %v2875
          %v2972 = vpack.c.b16 %v2909, %v2908
          %v2973 = vpack.c.b16 %v2911, %v2910
          %v2974 = vpack.c.b16 %v2913, %v2912
          %v2975 = vpack.c.b16 %v2915, %v2914
          %v2976 = vpack.c.b16 %v2917, %v2916
          %v2977 = vpack.c.b16 %v2919, %v2918
          %v2978 = vpack.c.b16 %v2921, %v2920
          %v2979 = vpack.c.b16 %v2923, %v2922
          %v2980 = vpack.c.b16 %v2925, %v2924
          %v2981 = vpack.c.b16 %v2927, %v2926
          %v2982 = vpack.c.b16 %v2929, %v2928
          %v2983 = vpack.c.b16 %v2931, %v2930
          %v2984 = vpack.c.b16 %v2933, %v2932
          %v2985 = vpack.c.b16 %v2935, %v2934
          %v2986 = vpack.c.b16 %v2937, %v2936
          %v2987 = vpack.c.b16 %v2939, %v2938
          %v2988 = vpack.c.b16 %v2941, %v2940
          %v2989 = vpack.c.b16 %v2943, %v2942
          %v2990 = vpack.c.b16 %v2945, %v2944
          %v2991 = vpack.c.b16 %v2947, %v2946
          %v2992 = vpack.c.b16 %v2949, %v2948
          %v2993 = vpack.c.b16 %v2951, %v2950
          %v2994 = vpack.c.b16 %v2953, %v2952
          %v2995 = vpack.c.b16 %v2955, %v2954
          %v2996 = vpack.c.b16 %v2957, %v2956
          %v2997 = vpack.c.b16 %v2959, %v2958
          %v2998 = vpack.c.b16 %v2961, %v2960
          %v2999 = vpack.c.b16 %v2963, %v2962
          %v3000 = vpack.c.b16 %v2965, %v2964
          %v3001 = vpack.c.b16 %v2967, %v2966
          %v3002 = vpack.c.b16 %v2969, %v2968
          %v3003 = vpack.c.b16 %v2971, %v2970
          %3036 = vst [vmem:[#allocation2] sm:$0xff] %v2972
          %3037 = vst [vmem:[#allocation2 + $0x8] sm:$0xff] %v2973
          %3038 = vst [vmem:[#allocation2 + $0x10] sm:$0xff] %v2974
          %3039 = vst [vmem:[#allocation2 + $0x18] sm:$0xff] %v2975
          %3040 = vst [vmem:[#allocation2 + $0x20] sm:$0xff] %v2976
          %3041 = vst [vmem:[#allocation2 + $0x28] sm:$0xff] %v2977
          %3042 = vst [vmem:[#allocation2 + $0x30] sm:$0xff] %v2978
          %3043 = vst [vmem:[#allocation2 + $0x38] sm:$0xff] %v2979
          %3044 = vst [vmem:[#allocation2 + $0x40] sm:$0xff] %v2980
          %3045 = vst [vmem:[#allocation2 + $0x48] sm:$0xff] %v2981
          %3046 = vst [vmem:[#allocation2 + $0x50] sm:$0xff] %v2982
          %3047 = vst [vmem:[#allocation2 + $0x58] sm:$0xff] %v2983
          %3048 = vst [vmem:[#allocation2 + $0x60] sm:$0xff] %v2984
          %3049 = vst [vmem:[#allocation2 + $0x68] sm:$0xff] %v2985
          %3050 = vst [vmem:[#allocation2 + $0x70] sm:$0xff] %v2986
          %3051 = vst [vmem:[#allocation2 + $0x78] sm:$0xff] %v2987
          %3052 = vst [vmem:[#allocation2 + $0x80] sm:$0xff] %v2988
          %3053 = vst [vmem:[#allocation2 + $0x88] sm:$0xff] %v2989
          %3054 = vst [vmem:[#allocation2 + $0x90] sm:$0xff] %v2990
          %3055 = vst [vmem:[#allocation2 + $0x98] sm:$0xff] %v2991
          %3056 = vst [vmem:[#allocation2 + $0xa0] sm:$0xff] %v2992
          %3057 = vst [vmem:[#allocation2 + $0xa8] sm:$0xff] %v2993
          %3058 = vst [vmem:[#allocation2 + $0xb0] sm:$0xff] %v2994
          %3059 = vst [vmem:[#allocation2 + $0xb8] sm:$0xff] %v2995
          %3060 = vst [vmem:[#allocation2 + $0xc0] sm:$0xff] %v2996
          %3061 = vst [vmem:[#allocation2 + $0xc8] sm:$0xff] %v2997
          %3062 = vst [vmem:[#allocation2 + $0xd0] sm:$0xff] %v2998
          %3063 = vst [vmem:[#allocation2 + $0xd8] sm:$0xff] %v2999
          %3064 = vst [vmem:[#allocation2 + $0xe0] sm:$0xff] %v3000
          %3065 = vst [vmem:[#allocation2 + $0xe8] sm:$0xff] %v3001
          %3066 = vst [vmem:[#allocation2 + $0xf0] sm:$0xff] %v3002
          %3067 = vst [vmem:[#allocation2 + $0xf8] sm:$0xff] %v3003
        $region88: #{tpu_custom_call.1} parent=51 // pred_fallthru
          _
        %v3068 = vld [vmem:[#allocation2] sm:$0xff]
        %v3069 = vld [vmem:[#allocation2 + $0x8] sm:$0xff]
        %v3070 = vld [vmem:[#allocation2 + $0x10] sm:$0xff]
        %v3071 = vld [vmem:[#allocation2 + $0x18] sm:$0xff]
        %v3072 = vld [vmem:[#allocation2 + $0x20] sm:$0xff]
        %v3073 = vld [vmem:[#allocation2 + $0x28] sm:$0xff]
        %v3074 = vld [vmem:[#allocation2 + $0x30] sm:$0xff]
        %v3075 = vld [vmem:[#allocation2 + $0x38] sm:$0xff]
        %v3076 = vld [vmem:[#allocation2 + $0x40] sm:$0xff]
        %v3077 = vld [vmem:[#allocation2 + $0x48] sm:$0xff]
        %v3078 = vld [vmem:[#allocation2 + $0x50] sm:$0xff]
        %v3079 = vld [vmem:[#allocation2 + $0x58] sm:$0xff]
        %v3080 = vld [vmem:[#allocation2 + $0x60] sm:$0xff]
        %v3081 = vld [vmem:[#allocation2 + $0x68] sm:$0xff]
        %v3082 = vld [vmem:[#allocation2 + $0x70] sm:$0xff]
        %v3083 = vld [vmem:[#allocation2 + $0x78] sm:$0xff]
        %v3084 = vld [vmem:[#allocation2 + $0x80] sm:$0xff]
        %v3085 = vld [vmem:[#allocation2 + $0x88] sm:$0xff]
        %v3086 = vld [vmem:[#allocation2 + $0x90] sm:$0xff]
        %v3087 = vld [vmem:[#allocation2 + $0x98] sm:$0xff]
        %v3088 = vld [vmem:[#allocation2 + $0xa0] sm:$0xff]
        %v3089 = vld [vmem:[#allocation2 + $0xa8] sm:$0xff]
        %v3090 = vld [vmem:[#allocation2 + $0xb0] sm:$0xff]
        %v3091 = vld [vmem:[#allocation2 + $0xb8] sm:$0xff]
        %v3092 = vld [vmem:[#allocation2 + $0xc0] sm:$0xff]
        %v3093 = vld [vmem:[#allocation2 + $0xc8] sm:$0xff]
        %v3094 = vld [vmem:[#allocation2 + $0xd0] sm:$0xff]
        %v3095 = vld [vmem:[#allocation2 + $0xd8] sm:$0xff]
        %v3096 = vld [vmem:[#allocation2 + $0xe0] sm:$0xff]
        %v3097 = vld [vmem:[#allocation2 + $0xe8] sm:$0xff]
        %v3098 = vld [vmem:[#allocation2 + $0xf0] sm:$0xff]
        %v3099 = vld [vmem:[#allocation2 + $0xf8] sm:$0xff]
        %v3100 = vld [vmem:[%s423] sm:$0xff]
        %v3101 = vld [vmem:[%s423 + $0x8] sm:$0xff]
        %v3102 = vld [vmem:[%s423 + $0x10] sm:$0xff]
        %v3103 = vld [vmem:[%s423 + $0x18] sm:$0xff]
        %v3104 = vld [vmem:[%s423 + $0x20] sm:$0xff]
        %v3105 = vld [vmem:[%s423 + $0x28] sm:$0xff]
        %v3106 = vld [vmem:[%s423 + $0x30] sm:$0xff]
        %v3107 = vld [vmem:[%s423 + $0x38] sm:$0xff]
        %v3108 = vld [vmem:[%s423 + $0x40] sm:$0xff]
        %v3109 = vld [vmem:[%s423 + $0x48] sm:$0xff]
        %v3110 = vld [vmem:[%s423 + $0x50] sm:$0xff]
        %v3111 = vld [vmem:[%s423 + $0x58] sm:$0xff]
        %v3112 = vld [vmem:[%s423 + $0x60] sm:$0xff]
        %v3113 = vld [vmem:[%s423 + $0x68] sm:$0xff]
        %v3114 = vld [vmem:[%s423 + $0x70] sm:$0xff]
        %v3115 = vld [vmem:[%s423 + $0x78] sm:$0xff]
        %v3116 = vld [vmem:[%s423 + $0x80] sm:$0xff]
        %v3117 = vld [vmem:[%s423 + $0x88] sm:$0xff]
        %v3118 = vld [vmem:[%s423 + $0x90] sm:$0xff]
        %v3119 = vld [vmem:[%s423 + $0x98] sm:$0xff]
        %v3120 = vld [vmem:[%s423 + $0xa0] sm:$0xff]
        %v3121 = vld [vmem:[%s423 + $0xa8] sm:$0xff]
        %v3122 = vld [vmem:[%s423 + $0xb0] sm:$0xff]
        %v3123 = vld [vmem:[%s423 + $0xb8] sm:$0xff]
        %v3124 = vld [vmem:[%s423 + $0xc0] sm:$0xff]
        %v3125 = vld [vmem:[%s423 + $0xc8] sm:$0xff]
        %v3126 = vld [vmem:[%s423 + $0xd0] sm:$0xff]
        %v3127 = vld [vmem:[%s423 + $0xd8] sm:$0xff]
        %v3128 = vld [vmem:[%s423 + $0xe0] sm:$0xff]
        %v3129 = vld [vmem:[%s423 + $0xe8] sm:$0xff]
        %v3130 = vld [vmem:[%s423 + $0xf0] sm:$0xff]
        %v3131 = vld [vmem:[%s423 + $0xf8] sm:$0xff]
        %v3132 = vld [vmem:[%s423 + $0x100] sm:$0xff]
        %v3133 = vld [vmem:[%s423 + $0x108] sm:$0xff]
        %v3134 = vld [vmem:[%s423 + $0x110] sm:$0xff]
        %v3135 = vld [vmem:[%s423 + $0x118] sm:$0xff]
        %v3136 = vld [vmem:[%s423 + $0x120] sm:$0xff]
        %v3137 = vld [vmem:[%s423 + $0x128] sm:$0xff]
        %v3138 = vld [vmem:[%s423 + $0x130] sm:$0xff]
        %v3139 = vld [vmem:[%s423 + $0x138] sm:$0xff]
        %v3140 = vld [vmem:[%s423 + $0x140] sm:$0xff]
        %v3141 = vld [vmem:[%s423 + $0x148] sm:$0xff]
        %v3142 = vld [vmem:[%s423 + $0x150] sm:$0xff]
        %v3143 = vld [vmem:[%s423 + $0x158] sm:$0xff]
        %v3144 = vld [vmem:[%s423 + $0x160] sm:$0xff]
        %v3145 = vld [vmem:[%s423 + $0x168] sm:$0xff]
        %v3146 = vld [vmem:[%s423 + $0x170] sm:$0xff]
        %v3147 = vld [vmem:[%s423 + $0x178] sm:$0xff]
        %v3148 = vld [vmem:[%s423 + $0x180] sm:$0xff]
        %v3149 = vld [vmem:[%s423 + $0x188] sm:$0xff]
        %v3150 = vld [vmem:[%s423 + $0x190] sm:$0xff]
        %v3151 = vld [vmem:[%s423 + $0x198] sm:$0xff]
        %v3152 = vld [vmem:[%s423 + $0x1a0] sm:$0xff]
        %v3153 = vld [vmem:[%s423 + $0x1a8] sm:$0xff]
        %v3154 = vld [vmem:[%s423 + $0x1b0] sm:$0xff]
        %v3155 = vld [vmem:[%s423 + $0x1b8] sm:$0xff]
        %v3156 = vld [vmem:[%s423 + $0x1c0] sm:$0xff]
        %v3157 = vld [vmem:[%s423 + $0x1c8] sm:$0xff]
        %v3158 = vld [vmem:[%s423 + $0x1d0] sm:$0xff]
        %v3159 = vld [vmem:[%s423 + $0x1d8] sm:$0xff]
        %v3160 = vld [vmem:[%s423 + $0x1e0] sm:$0xff]
        %v3161 = vld [vmem:[%s423 + $0x1e8] sm:$0xff]
        %v3162 = vld [vmem:[%s423 + $0x1f0] sm:$0xff]
        %v3163 = vld [vmem:[%s423 + $0x1f8] sm:$0xff]
        %v3164 = vld [vmem:[%s423 + $0x200] sm:$0xff]
        %v3165 = vld [vmem:[%s423 + $0x208] sm:$0xff]
        %v3166 = vld [vmem:[%s423 + $0x210] sm:$0xff]
        %v3167 = vld [vmem:[%s423 + $0x218] sm:$0xff]
        %v3168 = vld [vmem:[%s423 + $0x220] sm:$0xff]
        %v3169 = vld [vmem:[%s423 + $0x228] sm:$0xff]
        %v3170 = vld [vmem:[%s423 + $0x230] sm:$0xff]
        %v3171 = vld [vmem:[%s423 + $0x238] sm:$0xff]
        %v3172 = vld [vmem:[%s423 + $0x240] sm:$0xff]
        %v3173 = vld [vmem:[%s423 + $0x248] sm:$0xff]
        %v3174 = vld [vmem:[%s423 + $0x250] sm:$0xff]
        %v3175 = vld [vmem:[%s423 + $0x258] sm:$0xff]
        %v3176 = vld [vmem:[%s423 + $0x260] sm:$0xff]
        %v3177 = vld [vmem:[%s423 + $0x268] sm:$0xff]
        %v3178 = vld [vmem:[%s423 + $0x270] sm:$0xff]
        %v3179 = vld [vmem:[%s423 + $0x278] sm:$0xff]
        %v3180 = vld [vmem:[%s423 + $0x280] sm:$0xff]
        %v3181 = vld [vmem:[%s423 + $0x288] sm:$0xff]
        %v3182 = vld [vmem:[%s423 + $0x290] sm:$0xff]
        %v3183 = vld [vmem:[%s423 + $0x298] sm:$0xff]
        %v3184 = vld [vmem:[%s423 + $0x2a0] sm:$0xff]
        %v3185 = vld [vmem:[%s423 + $0x2a8] sm:$0xff]
        %v3186 = vld [vmem:[%s423 + $0x2b0] sm:$0xff]
        %v3187 = vld [vmem:[%s423 + $0x2b8] sm:$0xff]
        %v3188 = vld [vmem:[%s423 + $0x2c0] sm:$0xff]
        %v3189 = vld [vmem:[%s423 + $0x2c8] sm:$0xff]
        %v3190 = vld [vmem:[%s423 + $0x2d0] sm:$0xff]
        %v3191 = vld [vmem:[%s423 + $0x2d8] sm:$0xff]
        %v3192 = vld [vmem:[%s423 + $0x2e0] sm:$0xff]
        %v3193 = vld [vmem:[%s423 + $0x2e8] sm:$0xff]
        %v3194 = vld [vmem:[%s423 + $0x2f0] sm:$0xff]
        %v3195 = vld [vmem:[%s423 + $0x2f8] sm:$0xff]
        %v3196 = vld [vmem:[%s423 + $0x300] sm:$0xff]
        %v3197 = vld [vmem:[%s423 + $0x308] sm:$0xff]
        %v3198 = vld [vmem:[%s423 + $0x310] sm:$0xff]
        %v3199 = vld [vmem:[%s423 + $0x318] sm:$0xff]
        %v3200 = vld [vmem:[%s423 + $0x320] sm:$0xff]
        %v3201 = vld [vmem:[%s423 + $0x328] sm:$0xff]
        %v3202 = vld [vmem:[%s423 + $0x330] sm:$0xff]
        %v3203 = vld [vmem:[%s423 + $0x338] sm:$0xff]
        %v3204 = vld [vmem:[%s423 + $0x340] sm:$0xff]
        %v3205 = vld [vmem:[%s423 + $0x348] sm:$0xff]
        %v3206 = vld [vmem:[%s423 + $0x350] sm:$0xff]
        %v3207 = vld [vmem:[%s423 + $0x358] sm:$0xff]
        %v3208 = vld [vmem:[%s423 + $0x360] sm:$0xff]
        %v3209 = vld [vmem:[%s423 + $0x368] sm:$0xff]
        %v3210 = vld [vmem:[%s423 + $0x370] sm:$0xff]
        %v3211 = vld [vmem:[%s423 + $0x378] sm:$0xff]
        %v3212 = vld [vmem:[%s423 + $0x380] sm:$0xff]
        %v3213 = vld [vmem:[%s423 + $0x388] sm:$0xff]
        %v3214 = vld [vmem:[%s423 + $0x390] sm:$0xff]
        %v3215 = vld [vmem:[%s423 + $0x398] sm:$0xff]
        %v3216 = vld [vmem:[%s423 + $0x3a0] sm:$0xff]
        %v3217 = vld [vmem:[%s423 + $0x3a8] sm:$0xff]
        %v3218 = vld [vmem:[%s423 + $0x3b0] sm:$0xff]
        %v3219 = vld [vmem:[%s423 + $0x3b8] sm:$0xff]
        %v3220 = vld [vmem:[%s423 + $0x3c0] sm:$0xff]
        %v3221 = vld [vmem:[%s423 + $0x3c8] sm:$0xff]
        %v3222 = vld [vmem:[%s423 + $0x3d0] sm:$0xff]
        %v3223 = vld [vmem:[%s423 + $0x3d8] sm:$0xff]
        %v3224 = vld [vmem:[%s423 + $0x3e0] sm:$0xff]
        %v3225 = vld [vmem:[%s423 + $0x3e8] sm:$0xff]
        %v3226 = vld [vmem:[%s423 + $0x3f0] sm:$0xff]
        %v3227 = vld [vmem:[%s423 + $0x3f8] sm:$0xff]
        %v3260 = vunpack.c.l.b16 %v3068
        %v3261 = vunpack.c.h.b16 %v3068
        %v3262 = vunpack.c.l.b16 %v3069
        %v3263 = vunpack.c.h.b16 %v3069
        %v3264 = vunpack.c.l.b16 %v3070
        %v3265 = vunpack.c.h.b16 %v3070
        %v3266 = vunpack.c.l.b16 %v3071
        %v3267 = vunpack.c.h.b16 %v3071
        %v3268 = vunpack.c.l.b16 %v3072
        %v3269 = vunpack.c.h.b16 %v3072
        %v3270 = vunpack.c.l.b16 %v3073
        %v3271 = vunpack.c.h.b16 %v3073
        %v3272 = vunpack.c.l.b16 %v3074
        %v3273 = vunpack.c.h.b16 %v3074
        %v3274 = vunpack.c.l.b16 %v3075
        %v3275 = vunpack.c.h.b16 %v3075
        %v3276 = vunpack.c.l.b16 %v3076
        %v3277 = vunpack.c.h.b16 %v3076
        %v3278 = vunpack.c.l.b16 %v3077
        %v3279 = vunpack.c.h.b16 %v3077
        %v3280 = vunpack.c.l.b16 %v3078
        %v3281 = vunpack.c.h.b16 %v3078
        %v3282 = vunpack.c.l.b16 %v3079
        %v3283 = vunpack.c.h.b16 %v3079
        %v3284 = vunpack.c.l.b16 %v3080
        %v3285 = vunpack.c.h.b16 %v3080
        %v3286 = vunpack.c.l.b16 %v3081
        %v3287 = vunpack.c.h.b16 %v3081
        %v3288 = vunpack.c.l.b16 %v3082
        %v3289 = vunpack.c.h.b16 %v3082
        %v3290 = vunpack.c.l.b16 %v3083
        %v3291 = vunpack.c.h.b16 %v3083
        %v3292 = vunpack.c.l.b16 %v3084
        %v3293 = vunpack.c.h.b16 %v3084
        %v3294 = vunpack.c.l.b16 %v3085
        %v3295 = vunpack.c.h.b16 %v3085
        %v3296 = vunpack.c.l.b16 %v3086
        %v3297 = vunpack.c.h.b16 %v3086
        %v3298 = vunpack.c.l.b16 %v3087
        %v3299 = vunpack.c.h.b16 %v3087
        %v3300 = vunpack.c.l.b16 %v3088
        %v3301 = vunpack.c.h.b16 %v3088
        %v3302 = vunpack.c.l.b16 %v3089
        %v3303 = vunpack.c.h.b16 %v3089
        %v3304 = vunpack.c.l.b16 %v3090
        %v3305 = vunpack.c.h.b16 %v3090
        %v3306 = vunpack.c.l.b16 %v3091
        %v3307 = vunpack.c.h.b16 %v3091
        %v3308 = vunpack.c.l.b16 %v3092
        %v3309 = vunpack.c.h.b16 %v3092
        %v3310 = vunpack.c.l.b16 %v3093
        %v3311 = vunpack.c.h.b16 %v3093
        %v3312 = vunpack.c.l.b16 %v3094
        %v3313 = vunpack.c.h.b16 %v3094
        %v3314 = vunpack.c.l.b16 %v3095
        %v3315 = vunpack.c.h.b16 %v3095
        %v3316 = vunpack.c.l.b16 %v3096
        %v3317 = vunpack.c.h.b16 %v3096
        %v3318 = vunpack.c.l.b16 %v3097
        %v3319 = vunpack.c.h.b16 %v3097
        %v3320 = vunpack.c.l.b16 %v3098
        %v3321 = vunpack.c.h.b16 %v3098
        %v3322 = vunpack.c.l.b16 %v3099
        %v3323 = vunpack.c.h.b16 %v3099
        %v3324 = vpack.c.b16 %v3262, %v3260
        %v3325 = vpack.c.b16 %v3263, %v3261
        %v3326 = vpack.c.b16 %v3266, %v3264
        %v3327 = vpack.c.b16 %v3267, %v3265
        %v3328 = vpack.c.b16 %v3270, %v3268
        %v3329 = vpack.c.b16 %v3271, %v3269
        %v3330 = vpack.c.b16 %v3274, %v3272
        %v3331 = vpack.c.b16 %v3275, %v3273
        %v3332 = vpack.c.b16 %v3278, %v3276
        %v3333 = vpack.c.b16 %v3279, %v3277
        %v3334 = vpack.c.b16 %v3282, %v3280
        %v3335 = vpack.c.b16 %v3283, %v3281
        %v3336 = vpack.c.b16 %v3286, %v3284
        %v3337 = vpack.c.b16 %v3287, %v3285
        %v3338 = vpack.c.b16 %v3290, %v3288
        %v3339 = vpack.c.b16 %v3291, %v3289
        %v3340 = vpack.c.b16 %v3294, %v3292
        %v3341 = vpack.c.b16 %v3295, %v3293
        %v3342 = vpack.c.b16 %v3298, %v3296
        %v3343 = vpack.c.b16 %v3299, %v3297
        %v3344 = vpack.c.b16 %v3302, %v3300
        %v3345 = vpack.c.b16 %v3303, %v3301
        %v3346 = vpack.c.b16 %v3306, %v3304
        %v3347 = vpack.c.b16 %v3307, %v3305
        %v3348 = vpack.c.b16 %v3310, %v3308
        %v3349 = vpack.c.b16 %v3311, %v3309
        %v3350 = vpack.c.b16 %v3314, %v3312
        %v3351 = vpack.c.b16 %v3315, %v3313
        %v3352 = vpack.c.b16 %v3318, %v3316
        %v3353 = vpack.c.b16 %v3319, %v3317
        %v3354 = vpack.c.b16 %v3322, %v3320
        %v3355 = vpack.c.b16 %v3323, %v3321
        %v3516 = vunpack.c.l.b16 %v3100
        %v3517 = vunpack.c.h.b16 %v3100
        %v3518 = vunpack.c.l.b16 %v3101
        %v3519 = vunpack.c.h.b16 %v3101
        %v3520 = vunpack.c.l.b16 %v3102
        %v3521 = vunpack.c.h.b16 %v3102
        %v3522 = vunpack.c.l.b16 %v3103
        %v3523 = vunpack.c.h.b16 %v3103
        %v3524 = vunpack.c.l.b16 %v3104
        %v3525 = vunpack.c.h.b16 %v3104
        %v3526 = vunpack.c.l.b16 %v3105
        %v3527 = vunpack.c.h.b16 %v3105
        %v3528 = vunpack.c.l.b16 %v3106
        %v3529 = vunpack.c.h.b16 %v3106
        %v3530 = vunpack.c.l.b16 %v3107
        %v3531 = vunpack.c.h.b16 %v3107
        %v3532 = vunpack.c.l.b16 %v3108
        %v3533 = vunpack.c.h.b16 %v3108
        %v3534 = vunpack.c.l.b16 %v3109
        %v3535 = vunpack.c.h.b16 %v3109
        %v3536 = vunpack.c.l.b16 %v3110
        %v3537 = vunpack.c.h.b16 %v3110
        %v3538 = vunpack.c.l.b16 %v3111
        %v3539 = vunpack.c.h.b16 %v3111
        %v3540 = vunpack.c.l.b16 %v3112
        %v3541 = vunpack.c.h.b16 %v3112
        %v3542 = vunpack.c.l.b16 %v3113
        %v3543 = vunpack.c.h.b16 %v3113
        %v3544 = vunpack.c.l.b16 %v3114
        %v3545 = vunpack.c.h.b16 %v3114
        %v3546 = vunpack.c.l.b16 %v3115
        %v3547 = vunpack.c.h.b16 %v3115
        %v3548 = vunpack.c.l.b16 %v3116
        %v3549 = vunpack.c.h.b16 %v3116
        %v3550 = vunpack.c.l.b16 %v3117
        %v3551 = vunpack.c.h.b16 %v3117
        %v3552 = vunpack.c.l.b16 %v3118
        %v3553 = vunpack.c.h.b16 %v3118
        %v3554 = vunpack.c.l.b16 %v3119
        %v3555 = vunpack.c.h.b16 %v3119
        %v3556 = vunpack.c.l.b16 %v3120
        %v3557 = vunpack.c.h.b16 %v3120
        %v3558 = vunpack.c.l.b16 %v3121
        %v3559 = vunpack.c.h.b16 %v3121
        %v3560 = vunpack.c.l.b16 %v3122
        %v3561 = vunpack.c.h.b16 %v3122
        %v3562 = vunpack.c.l.b16 %v3123
        %v3563 = vunpack.c.h.b16 %v3123
        %v3564 = vunpack.c.l.b16 %v3124
        %v3565 = vunpack.c.h.b16 %v3124
        %v3566 = vunpack.c.l.b16 %v3125
        %v3567 = vunpack.c.h.b16 %v3125
        %v3568 = vunpack.c.l.b16 %v3126
        %v3569 = vunpack.c.h.b16 %v3126
        %v3570 = vunpack.c.l.b16 %v3127
        %v3571 = vunpack.c.h.b16 %v3127
        %v3572 = vunpack.c.l.b16 %v3128
        %v3573 = vunpack.c.h.b16 %v3128
        %v3574 = vunpack.c.l.b16 %v3129
        %v3575 = vunpack.c.h.b16 %v3129
        %v3576 = vunpack.c.l.b16 %v3130
        %v3577 = vunpack.c.h.b16 %v3130
        %v3578 = vunpack.c.l.b16 %v3131
        %v3579 = vunpack.c.h.b16 %v3131
        %v3580 = vunpack.c.l.b16 %v3132
        %v3581 = vunpack.c.h.b16 %v3132
        %v3582 = vunpack.c.l.b16 %v3133
        %v3583 = vunpack.c.h.b16 %v3133
        %v3584 = vunpack.c.l.b16 %v3134
        %v3585 = vunpack.c.h.b16 %v3134
        %v3586 = vunpack.c.l.b16 %v3135
        %v3587 = vunpack.c.h.b16 %v3135
        %v3588 = vunpack.c.l.b16 %v3136
        %v3589 = vunpack.c.h.b16 %v3136
        %v3590 = vunpack.c.l.b16 %v3137
        %v3591 = vunpack.c.h.b16 %v3137
        %v3592 = vunpack.c.l.b16 %v3138
        %v3593 = vunpack.c.h.b16 %v3138
        %v3594 = vunpack.c.l.b16 %v3139
        %v3595 = vunpack.c.h.b16 %v3139
        %v3596 = vunpack.c.l.b16 %v3140
        %v3597 = vunpack.c.h.b16 %v3140
        %v3598 = vunpack.c.l.b16 %v3141
        %v3599 = vunpack.c.h.b16 %v3141
        %v3600 = vunpack.c.l.b16 %v3142
        %v3601 = vunpack.c.h.b16 %v3142
        %v3602 = vunpack.c.l.b16 %v3143
        %v3603 = vunpack.c.h.b16 %v3143
        %v3604 = vunpack.c.l.b16 %v3144
        %v3605 = vunpack.c.h.b16 %v3144
        %v3606 = vunpack.c.l.b16 %v3145
        %v3607 = vunpack.c.h.b16 %v3145
        %v3608 = vunpack.c.l.b16 %v3146
        %v3609 = vunpack.c.h.b16 %v3146
        %v3610 = vunpack.c.l.b16 %v3147
        %v3611 = vunpack.c.h.b16 %v3147
        %v3612 = vunpack.c.l.b16 %v3148
        %v3613 = vunpack.c.h.b16 %v3148
        %v3614 = vunpack.c.l.b16 %v3149
        %v3615 = vunpack.c.h.b16 %v3149
        %v3616 = vunpack.c.l.b16 %v3150
        %v3617 = vunpack.c.h.b16 %v3150
        %v3618 = vunpack.c.l.b16 %v3151
        %v3619 = vunpack.c.h.b16 %v3151
        %v3620 = vunpack.c.l.b16 %v3152
        %v3621 = vunpack.c.h.b16 %v3152
        %v3622 = vunpack.c.l.b16 %v3153
        %v3623 = vunpack.c.h.b16 %v3153
        %v3624 = vunpack.c.l.b16 %v3154
        %v3625 = vunpack.c.h.b16 %v3154
        %v3626 = vunpack.c.l.b16 %v3155
        %v3627 = vunpack.c.h.b16 %v3155
        %v3628 = vunpack.c.l.b16 %v3156
        %v3629 = vunpack.c.h.b16 %v3156
        %v3630 = vunpack.c.l.b16 %v3157
        %v3631 = vunpack.c.h.b16 %v3157
        %v3632 = vunpack.c.l.b16 %v3158
        %v3633 = vunpack.c.h.b16 %v3158
        %v3634 = vunpack.c.l.b16 %v3159
        %v3635 = vunpack.c.h.b16 %v3159
        %v3636 = vunpack.c.l.b16 %v3160
        %v3637 = vunpack.c.h.b16 %v3160
        %v3638 = vunpack.c.l.b16 %v3161
        %v3639 = vunpack.c.h.b16 %v3161
        %v3640 = vunpack.c.l.b16 %v3162
        %v3641 = vunpack.c.h.b16 %v3162
        %v3642 = vunpack.c.l.b16 %v3163
        %v3643 = vunpack.c.h.b16 %v3163
        %v3644 = vunpack.c.l.b16 %v3164
        %v3645 = vunpack.c.h.b16 %v3164
        %v3646 = vunpack.c.l.b16 %v3165
        %v3647 = vunpack.c.h.b16 %v3165
        %v3648 = vunpack.c.l.b16 %v3166
        %v3649 = vunpack.c.h.b16 %v3166
        %v3650 = vunpack.c.l.b16 %v3167
        %v3651 = vunpack.c.h.b16 %v3167
        %v3652 = vunpack.c.l.b16 %v3168
        %v3653 = vunpack.c.h.b16 %v3168
        %v3654 = vunpack.c.l.b16 %v3169
        %v3655 = vunpack.c.h.b16 %v3169
        %v3656 = vunpack.c.l.b16 %v3170
        %v3657 = vunpack.c.h.b16 %v3170
        %v3658 = vunpack.c.l.b16 %v3171
        %v3659 = vunpack.c.h.b16 %v3171
        %v3660 = vunpack.c.l.b16 %v3172
        %v3661 = vunpack.c.h.b16 %v3172
        %v3662 = vunpack.c.l.b16 %v3173
        %v3663 = vunpack.c.h.b16 %v3173
        %v3664 = vunpack.c.l.b16 %v3174
        %v3665 = vunpack.c.h.b16 %v3174
        %v3666 = vunpack.c.l.b16 %v3175
        %v3667 = vunpack.c.h.b16 %v3175
        %v3668 = vunpack.c.l.b16 %v3176
        %v3669 = vunpack.c.h.b16 %v3176
        %v3670 = vunpack.c.l.b16 %v3177
        %v3671 = vunpack.c.h.b16 %v3177
        %v3672 = vunpack.c.l.b16 %v3178
        %v3673 = vunpack.c.h.b16 %v3178
        %v3674 = vunpack.c.l.b16 %v3179
        %v3675 = vunpack.c.h.b16 %v3179
        %v3676 = vunpack.c.l.b16 %v3180
        %v3677 = vunpack.c.h.b16 %v3180
        %v3678 = vunpack.c.l.b16 %v3181
        %v3679 = vunpack.c.h.b16 %v3181
        %v3680 = vunpack.c.l.b16 %v3182
        %v3681 = vunpack.c.h.b16 %v3182
        %v3682 = vunpack.c.l.b16 %v3183
        %v3683 = vunpack.c.h.b16 %v3183
        %v3684 = vunpack.c.l.b16 %v3184
        %v3685 = vunpack.c.h.b16 %v3184
        %v3686 = vunpack.c.l.b16 %v3185
        %v3687 = vunpack.c.h.b16 %v3185
        %v3688 = vunpack.c.l.b16 %v3186
        %v3689 = vunpack.c.h.b16 %v3186
        %v3690 = vunpack.c.l.b16 %v3187
        %v3691 = vunpack.c.h.b16 %v3187
        %v3692 = vunpack.c.l.b16 %v3188
        %v3693 = vunpack.c.h.b16 %v3188
        %v3694 = vunpack.c.l.b16 %v3189
        %v3695 = vunpack.c.h.b16 %v3189
        %v3696 = vunpack.c.l.b16 %v3190
        %v3697 = vunpack.c.h.b16 %v3190
        %v3698 = vunpack.c.l.b16 %v3191
        %v3699 = vunpack.c.h.b16 %v3191
        %v3700 = vunpack.c.l.b16 %v3192
        %v3701 = vunpack.c.h.b16 %v3192
        %v3702 = vunpack.c.l.b16 %v3193
        %v3703 = vunpack.c.h.b16 %v3193
        %v3704 = vunpack.c.l.b16 %v3194
        %v3705 = vunpack.c.h.b16 %v3194
        %v3706 = vunpack.c.l.b16 %v3195
        %v3707 = vunpack.c.h.b16 %v3195
        %v3708 = vunpack.c.l.b16 %v3196
        %v3709 = vunpack.c.h.b16 %v3196
        %v3710 = vunpack.c.l.b16 %v3197
        %v3711 = vunpack.c.h.b16 %v3197
        %v3712 = vunpack.c.l.b16 %v3198
        %v3713 = vunpack.c.h.b16 %v3198
        %v3714 = vunpack.c.l.b16 %v3199
        %v3715 = vunpack.c.h.b16 %v3199
        %v3716 = vunpack.c.l.b16 %v3200
        %v3717 = vunpack.c.h.b16 %v3200
        %v3718 = vunpack.c.l.b16 %v3201
        %v3719 = vunpack.c.h.b16 %v3201
        %v3720 = vunpack.c.l.b16 %v3202
        %v3721 = vunpack.c.h.b16 %v3202
        %v3722 = vunpack.c.l.b16 %v3203
        %v3723 = vunpack.c.h.b16 %v3203
        %v3724 = vunpack.c.l.b16 %v3204
        %v3725 = vunpack.c.h.b16 %v3204
        %v3726 = vunpack.c.l.b16 %v3205
        %v3727 = vunpack.c.h.b16 %v3205
        %v3728 = vunpack.c.l.b16 %v3206
        %v3729 = vunpack.c.h.b16 %v3206
        %v3730 = vunpack.c.l.b16 %v3207
        %v3731 = vunpack.c.h.b16 %v3207
        %v3732 = vunpack.c.l.b16 %v3208
        %v3733 = vunpack.c.h.b16 %v3208
        %v3734 = vunpack.c.l.b16 %v3209
        %v3735 = vunpack.c.h.b16 %v3209
        %v3736 = vunpack.c.l.b16 %v3210
        %v3737 = vunpack.c.h.b16 %v3210
        %v3738 = vunpack.c.l.b16 %v3211
        %v3739 = vunpack.c.h.b16 %v3211
        %v3740 = vunpack.c.l.b16 %v3212
        %v3741 = vunpack.c.h.b16 %v3212
        %v3742 = vunpack.c.l.b16 %v3213
        %v3743 = vunpack.c.h.b16 %v3213
        %v3744 = vunpack.c.l.b16 %v3214
        %v3745 = vunpack.c.h.b16 %v3214
        %v3746 = vunpack.c.l.b16 %v3215
        %v3747 = vunpack.c.h.b16 %v3215
        %v3748 = vunpack.c.l.b16 %v3216
        %v3749 = vunpack.c.h.b16 %v3216
        %v3750 = vunpack.c.l.b16 %v3217
        %v3751 = vunpack.c.h.b16 %v3217
        %v3752 = vunpack.c.l.b16 %v3218
        %v3753 = vunpack.c.h.b16 %v3218
        %v3754 = vunpack.c.l.b16 %v3219
        %v3755 = vunpack.c.h.b16 %v3219
        %v3756 = vunpack.c.l.b16 %v3220
        %v3757 = vunpack.c.h.b16 %v3220
        %v3758 = vunpack.c.l.b16 %v3221
        %v3759 = vunpack.c.h.b16 %v3221
        %v3760 = vunpack.c.l.b16 %v3222
        %v3761 = vunpack.c.h.b16 %v3222
        %v3762 = vunpack.c.l.b16 %v3223
        %v3763 = vunpack.c.h.b16 %v3223
        %v3764 = vunpack.c.l.b16 %v3224
        %v3765 = vunpack.c.h.b16 %v3224
        %v3766 = vunpack.c.l.b16 %v3225
        %v3767 = vunpack.c.h.b16 %v3225
        %v3768 = vunpack.c.l.b16 %v3226
        %v3769 = vunpack.c.h.b16 %v3226
        %v3770 = vunpack.c.l.b16 %v3227
        %v3771 = vunpack.c.h.b16 %v3227
        %v3772 = vpack.c.b16 %v3518, %v3516
        %v3773 = vpack.c.b16 %v3519, %v3517
        %v3774 = vpack.c.b16 %v3522, %v3520
        %v3775 = vpack.c.b16 %v3523, %v3521
        %v3776 = vpack.c.b16 %v3526, %v3524
        %v3777 = vpack.c.b16 %v3527, %v3525
        %v3778 = vpack.c.b16 %v3530, %v3528
        %v3779 = vpack.c.b16 %v3531, %v3529
        %v3780 = vpack.c.b16 %v3534, %v3532
        %v3781 = vpack.c.b16 %v3535, %v3533
        %v3782 = vpack.c.b16 %v3538, %v3536
        %v3783 = vpack.c.b16 %v3539, %v3537
        %v3784 = vpack.c.b16 %v3542, %v3540
        %v3785 = vpack.c.b16 %v3543, %v3541
        %v3786 = vpack.c.b16 %v3546, %v3544
        %v3787 = vpack.c.b16 %v3547, %v3545
        %v3788 = vpack.c.b16 %v3550, %v3548
        %v3789 = vpack.c.b16 %v3551, %v3549
        %v3790 = vpack.c.b16 %v3554, %v3552
        %v3791 = vpack.c.b16 %v3555, %v3553
        %v3792 = vpack.c.b16 %v3558, %v3556
        %v3793 = vpack.c.b16 %v3559, %v3557
        %v3794 = vpack.c.b16 %v3562, %v3560
        %v3795 = vpack.c.b16 %v3563, %v3561
        %v3796 = vpack.c.b16 %v3566, %v3564
        %v3797 = vpack.c.b16 %v3567, %v3565
        %v3798 = vpack.c.b16 %v3570, %v3568
        %v3799 = vpack.c.b16 %v3571, %v3569
        %v3800 = vpack.c.b16 %v3574, %v3572
        %v3801 = vpack.c.b16 %v3575, %v3573
        %v3802 = vpack.c.b16 %v3578, %v3576
        %v3803 = vpack.c.b16 %v3579, %v3577
        %v3804 = vpack.c.b16 %v3582, %v3580
        %v3805 = vpack.c.b16 %v3583, %v3581
        %v3806 = vpack.c.b16 %v3586, %v3584
        %v3807 = vpack.c.b16 %v3587, %v3585
        %v3808 = vpack.c.b16 %v3590, %v3588
        %v3809 = vpack.c.b16 %v3591, %v3589
        %v3810 = vpack.c.b16 %v3594, %v3592
        %v3811 = vpack.c.b16 %v3595, %v3593
        %v3812 = vpack.c.b16 %v3598, %v3596
        %v3813 = vpack.c.b16 %v3599, %v3597
        %v3814 = vpack.c.b16 %v3602, %v3600
        %v3815 = vpack.c.b16 %v3603, %v3601
        %v3816 = vpack.c.b16 %v3606, %v3604
        %v3817 = vpack.c.b16 %v3607, %v3605
        %v3818 = vpack.c.b16 %v3610, %v3608
        %v3819 = vpack.c.b16 %v3611, %v3609
        %v3820 = vpack.c.b16 %v3614, %v3612
        %v3821 = vpack.c.b16 %v3615, %v3613
        %v3822 = vpack.c.b16 %v3618, %v3616
        %v3823 = vpack.c.b16 %v3619, %v3617
        %v3824 = vpack.c.b16 %v3622, %v3620
        %v3825 = vpack.c.b16 %v3623, %v3621
        %v3826 = vpack.c.b16 %v3626, %v3624
        %v3827 = vpack.c.b16 %v3627, %v3625
        %v3828 = vpack.c.b16 %v3630, %v3628
        %v3829 = vpack.c.b16 %v3631, %v3629
        %v3830 = vpack.c.b16 %v3634, %v3632
        %v3831 = vpack.c.b16 %v3635, %v3633
        %v3832 = vpack.c.b16 %v3638, %v3636
        %v3833 = vpack.c.b16 %v3639, %v3637
        %v3834 = vpack.c.b16 %v3642, %v3640
        %v3835 = vpack.c.b16 %v3643, %v3641
        %v3836 = vpack.c.b16 %v3646, %v3644
        %v3837 = vpack.c.b16 %v3647, %v3645
        %v3838 = vpack.c.b16 %v3650, %v3648
        %v3839 = vpack.c.b16 %v3651, %v3649
        %v3840 = vpack.c.b16 %v3654, %v3652
        %v3841 = vpack.c.b16 %v3655, %v3653
        %v3842 = vpack.c.b16 %v3658, %v3656
        %v3843 = vpack.c.b16 %v3659, %v3657
        %v3844 = vpack.c.b16 %v3662, %v3660
        %v3845 = vpack.c.b16 %v3663, %v3661
        %v3846 = vpack.c.b16 %v3666, %v3664
        %v3847 = vpack.c.b16 %v3667, %v3665
        %v3848 = vpack.c.b16 %v3670, %v3668
        %v3849 = vpack.c.b16 %v3671, %v3669
        %v3850 = vpack.c.b16 %v3674, %v3672
        %v3851 = vpack.c.b16 %v3675, %v3673
        %v3852 = vpack.c.b16 %v3678, %v3676
        %v3853 = vpack.c.b16 %v3679, %v3677
        %v3854 = vpack.c.b16 %v3682, %v3680
        %v3855 = vpack.c.b16 %v3683, %v3681
        %v3856 = vpack.c.b16 %v3686, %v3684
        %v3857 = vpack.c.b16 %v3687, %v3685
        %v3858 = vpack.c.b16 %v3690, %v3688
        %v3859 = vpack.c.b16 %v3691, %v3689
        %v3860 = vpack.c.b16 %v3694, %v3692
        %v3861 = vpack.c.b16 %v3695, %v3693
        %v3862 = vpack.c.b16 %v3698, %v3696
        %v3863 = vpack.c.b16 %v3699, %v3697
        %v3864 = vpack.c.b16 %v3702, %v3700
        %v3865 = vpack.c.b16 %v3703, %v3701
        %v3866 = vpack.c.b16 %v3706, %v3704
        %v3867 = vpack.c.b16 %v3707, %v3705
        %v3868 = vpack.c.b16 %v3710, %v3708
        %v3869 = vpack.c.b16 %v3711, %v3709
        %v3870 = vpack.c.b16 %v3714, %v3712
        %v3871 = vpack.c.b16 %v3715, %v3713
        %v3872 = vpack.c.b16 %v3718, %v3716
        %v3873 = vpack.c.b16 %v3719, %v3717
        %v3874 = vpack.c.b16 %v3722, %v3720
        %v3875 = vpack.c.b16 %v3723, %v3721
        %v3876 = vpack.c.b16 %v3726, %v3724
        %v3877 = vpack.c.b16 %v3727, %v3725
        %v3878 = vpack.c.b16 %v3730, %v3728
        %v3879 = vpack.c.b16 %v3731, %v3729
        %v3880 = vpack.c.b16 %v3734, %v3732
        %v3881 = vpack.c.b16 %v3735, %v3733
        %v3882 = vpack.c.b16 %v3738, %v3736
        %v3883 = vpack.c.b16 %v3739, %v3737
        %v3884 = vpack.c.b16 %v3742, %v3740
        %v3885 = vpack.c.b16 %v3743, %v3741
        %v3886 = vpack.c.b16 %v3746, %v3744
        %v3887 = vpack.c.b16 %v3747, %v3745
        %v3888 = vpack.c.b16 %v3750, %v3748
        %v3889 = vpack.c.b16 %v3751, %v3749
        %v3890 = vpack.c.b16 %v3754, %v3752
        %v3891 = vpack.c.b16 %v3755, %v3753
        %v3892 = vpack.c.b16 %v3758, %v3756
        %v3893 = vpack.c.b16 %v3759, %v3757
        %v3894 = vpack.c.b16 %v3762, %v3760
        %v3895 = vpack.c.b16 %v3763, %v3761
        %v3896 = vpack.c.b16 %v3766, %v3764
        %v3897 = vpack.c.b16 %v3767, %v3765
        %v3898 = vpack.c.b16 %v3770, %v3768
        %v3899 = vpack.c.b16 %v3771, %v3769
        %4028 = vmatprep.subr.bf16.mxu0 %v3787
        %4029 = vmatpush1.bf16.xpose.msra.mxu0 %v3786
        %4030 = vmatprep.subr.bf16.mxu0 %v3785
        %4031 = vmatpush1.bf16.xpose.msra.mxu0 %v3784
        %4032 = vmatprep.subr.bf16.mxu0 %v3783
        %4033 = vmatpush1.bf16.xpose.msra.mxu0 %v3782
        %4034 = vmatprep.subr.bf16.mxu0 %v3781
        %4035 = vmatpush1.bf16.xpose.msra.mxu0 %v3780
        %4036 = vmatprep.subr.bf16.mxu0 %v3779
        %4037 = vmatpush1.bf16.xpose.msra.mxu0 %v3778
        %4038 = vmatprep.subr.bf16.mxu0 %v3777
        %4039 = vmatpush1.bf16.xpose.msra.mxu0 %v3776
        %4040 = vmatprep.subr.bf16.mxu0 %v3775
        %4041 = vmatpush1.bf16.xpose.msra.mxu0 %v3774
        %4042 = vmatprep.subr.bf16.mxu0 %v3773
        %4043 = vmatpush1.bf16.xpose.msra.mxu0 %v3772
        %4044 = vmatprep.subr.bf16.mxu0 %v3803
        %4045 = vmatpush2.bf16.xpose.msra.mxu0 %v3802
        %4046 = vmatprep.subr.bf16.mxu0 %v3801
        %4047 = vmatpush2.bf16.xpose.msra.mxu0 %v3800
        %4048 = vmatprep.subr.bf16.mxu0 %v3799
        %4049 = vmatpush2.bf16.xpose.msra.mxu0 %v3798
        %4050 = vmatprep.subr.bf16.mxu0 %v3797
        %4051 = vmatpush2.bf16.xpose.msra.mxu0 %v3796
        %4052 = vmatprep.subr.bf16.mxu0 %v3795
        %4053 = vmatpush2.bf16.xpose.msra.mxu0 %v3794
        %4054 = vmatprep.subr.bf16.mxu0 %v3793
        %4055 = vmatpush2.bf16.xpose.msra.mxu0 %v3792
        %4056 = vmatprep.subr.bf16.mxu0 %v3791
        %4057 = vmatpush2.bf16.xpose.msra.mxu0 %v3790
        %4058 = vmatprep.subr.bf16.mxu0 %v3789
        %4059 = vmatpush2.bf16.xpose.msra.mxu0 %v3788
        %4060 = vmatprep.mubr.bf16.mxu0 %v3325
        %4061 = vmatmul.mubr.bf16.gmra.mxu0 %v3324
        %v4062 = vpop.f32.mrf.mxu0
        %v4063 = vadd.f32 0.0, %v4062
        %v4064 = vpop.f32.mrf.mxu0
        %v4065 = vadd.f32 0.0, %v4064
        %v4066 = vpop.f32.mrf.mxu0
        %v4067 = vadd.f32 0.0, %v4066
        %v4068 = vpop.f32.mrf.mxu0
        %v4069 = vadd.f32 0.0, %v4068
        %4070 = vmatprep.mubr.bf16.mxu0 %v3327
        %4071 = vmatmul.mubr.bf16.gmra.mxu0 %v3326
        %v4072 = vpop.f32.mrf.mxu0
        %v4073 = vadd.f32 0.0, %v4072
        %v4074 = vpop.f32.mrf.mxu0
        %v4075 = vadd.f32 0.0, %v4074
        %v4076 = vpop.f32.mrf.mxu0
        %v4077 = vadd.f32 0.0, %v4076
        %v4078 = vpop.f32.mrf.mxu0
        %v4079 = vadd.f32 0.0, %v4078
        %4080 = vmatprep.mubr.bf16.mxu0 %v3329
        %4081 = vmatmul.mubr.bf16.gmra.mxu0 %v3328
        %v4082 = vpop.f32.mrf.mxu0
        %v4083 = vadd.f32 0.0, %v4082
        %v4084 = vpop.f32.mrf.mxu0
        %v4085 = vadd.f32 0.0, %v4084
        %v4086 = vpop.f32.mrf.mxu0
        %v4087 = vadd.f32 0.0, %v4086
        %v4088 = vpop.f32.mrf.mxu0
        %v4089 = vadd.f32 0.0, %v4088
        %4090 = vmatprep.mubr.bf16.mxu0 %v3331
        %4091 = vmatmul.mubr.bf16.gmra.mxu0 %v3330
        %v4092 = vpop.f32.mrf.mxu0
        %v4093 = vadd.f32 0.0, %v4092
        %v4094 = vpop.f32.mrf.mxu0
        %v4095 = vadd.f32 0.0, %v4094
        %v4096 = vpop.f32.mrf.mxu0
        %v4097 = vadd.f32 0.0, %v4096
        %v4098 = vpop.f32.mrf.mxu0
        %v4099 = vadd.f32 0.0, %v4098
        %4100 = vmatprep.mubr.bf16.mxu0 %v3333
        %4101 = vmatmul.mubr.bf16.gmra.mxu0 %v3332
        %v4102 = vpop.f32.mrf.mxu0
        %v4103 = vadd.f32 0.0, %v4102
        %v4104 = vpop.f32.mrf.mxu0
        %v4105 = vadd.f32 0.0, %v4104
        %v4106 = vpop.f32.mrf.mxu0
        %v4107 = vadd.f32 0.0, %v4106
        %v4108 = vpop.f32.mrf.mxu0
        %v4109 = vadd.f32 0.0, %v4108
        %4110 = vmatprep.mubr.bf16.mxu0 %v3335
        %4111 = vmatmul.mubr.bf16.gmra.mxu0 %v3334
        %v4112 = vpop.f32.mrf.mxu0
        %v4113 = vadd.f32 0.0, %v4112
        %v4114 = vpop.f32.mrf.mxu0
        %v4115 = vadd.f32 0.0, %v4114
        %v4116 = vpop.f32.mrf.mxu0
        %v4117 = vadd.f32 0.0, %v4116
        %v4118 = vpop.f32.mrf.mxu0
        %v4119 = vadd.f32 0.0, %v4118
        %4120 = vmatprep.mubr.bf16.mxu0 %v3337
        %4121 = vmatmul.mubr.bf16.gmra.mxu0 %v3336
        %v4122 = vpop.f32.mrf.mxu0
        %v4123 = vadd.f32 0.0, %v4122
        %v4124 = vpop.f32.mrf.mxu0
        %v4125 = vadd.f32 0.0, %v4124
        %v4126 = vpop.f32.mrf.mxu0
        %v4127 = vadd.f32 0.0, %v4126
        %v4128 = vpop.f32.mrf.mxu0
        %v4129 = vadd.f32 0.0, %v4128
        %4130 = vmatprep.mubr.bf16.mxu0 %v3339
        %4131 = vmatmul.mubr.bf16.gmra.mxu0 %v3338
        %v4132 = vpop.f32.mrf.mxu0
        %v4133 = vadd.f32 0.0, %v4132
        %v4134 = vpop.f32.mrf.mxu0
        %v4135 = vadd.f32 0.0, %v4134
        %v4136 = vpop.f32.mrf.mxu0
        %v4137 = vadd.f32 0.0, %v4136
        %v4138 = vpop.f32.mrf.mxu0
        %v4139 = vadd.f32 0.0, %v4138
        %4140 = vmatprep.mubr.bf16.mxu0 %v3341
        %4141 = vmatmul.mubr.bf16.gmra.mxu0 %v3340
        %v4142 = vpop.f32.mrf.mxu0
        %v4143 = vadd.f32 0.0, %v4142
        %v4144 = vpop.f32.mrf.mxu0
        %v4145 = vadd.f32 0.0, %v4144
        %v4146 = vpop.f32.mrf.mxu0
        %v4147 = vadd.f32 0.0, %v4146
        %v4148 = vpop.f32.mrf.mxu0
        %v4149 = vadd.f32 0.0, %v4148
        %4150 = vmatprep.mubr.bf16.mxu0 %v3343
        %4151 = vmatmul.mubr.bf16.gmra.mxu0 %v3342
        %v4152 = vpop.f32.mrf.mxu0
        %v4153 = vadd.f32 0.0, %v4152
        %v4154 = vpop.f32.mrf.mxu0
        %v4155 = vadd.f32 0.0, %v4154
        %v4156 = vpop.f32.mrf.mxu0
        %v4157 = vadd.f32 0.0, %v4156
        %v4158 = vpop.f32.mrf.mxu0
        %v4159 = vadd.f32 0.0, %v4158
        %4160 = vmatprep.mubr.bf16.mxu0 %v3345
        %4161 = vmatmul.mubr.bf16.gmra.mxu0 %v3344
        %v4162 = vpop.f32.mrf.mxu0
        %v4163 = vadd.f32 0.0, %v4162
        %v4164 = vpop.f32.mrf.mxu0
        %v4165 = vadd.f32 0.0, %v4164
        %v4166 = vpop.f32.mrf.mxu0
        %v4167 = vadd.f32 0.0, %v4166
        %v4168 = vpop.f32.mrf.mxu0
        %v4169 = vadd.f32 0.0, %v4168
        %4170 = vmatprep.mubr.bf16.mxu0 %v3347
        %4171 = vmatmul.mubr.bf16.gmra.mxu0 %v3346
        %v4172 = vpop.f32.mrf.mxu0
        %v4173 = vadd.f32 0.0, %v4172
        %v4174 = vpop.f32.mrf.mxu0
        %v4175 = vadd.f32 0.0, %v4174
        %v4176 = vpop.f32.mrf.mxu0
        %v4177 = vadd.f32 0.0, %v4176
        %v4178 = vpop.f32.mrf.mxu0
        %v4179 = vadd.f32 0.0, %v4178
        %4180 = vmatprep.mubr.bf16.mxu0 %v3349
        %4181 = vmatmul.mubr.bf16.gmra.mxu0 %v3348
        %v4182 = vpop.f32.mrf.mxu0
        %v4183 = vadd.f32 0.0, %v4182
        %v4184 = vpop.f32.mrf.mxu0
        %v4185 = vadd.f32 0.0, %v4184
        %v4186 = vpop.f32.mrf.mxu0
        %v4187 = vadd.f32 0.0, %v4186
        %v4188 = vpop.f32.mrf.mxu0
        %v4189 = vadd.f32 0.0, %v4188
        %4190 = vmatprep.mubr.bf16.mxu0 %v3351
        %4191 = vmatmul.mubr.bf16.gmra.mxu0 %v3350
        %v4192 = vpop.f32.mrf.mxu0
        %v4193 = vadd.f32 0.0, %v4192
        %v4194 = vpop.f32.mrf.mxu0
        %v4195 = vadd.f32 0.0, %v4194
        %v4196 = vpop.f32.mrf.mxu0
        %v4197 = vadd.f32 0.0, %v4196
        %v4198 = vpop.f32.mrf.mxu0
        %v4199 = vadd.f32 0.0, %v4198
        %4200 = vmatprep.mubr.bf16.mxu0 %v3353
        %4201 = vmatmul.mubr.bf16.gmra.mxu0 %v3352
        %v4202 = vpop.f32.mrf.mxu0
        %v4203 = vadd.f32 0.0, %v4202
        %v4204 = vpop.f32.mrf.mxu0
        %v4205 = vadd.f32 0.0, %v4204
        %v4206 = vpop.f32.mrf.mxu0
        %v4207 = vadd.f32 0.0, %v4206
        %v4208 = vpop.f32.mrf.mxu0
        %v4209 = vadd.f32 0.0, %v4208
        %4210 = vmatprep.mubr.bf16.mxu0 %v3355
        %4211 = vmatmul.mubr.bf16.gmra.mxu0 %v3354
        %v4212 = vpop.f32.mrf.mxu0
        %v4213 = vadd.f32 0.0, %v4212
        %v4214 = vpop.f32.mrf.mxu0
        %v4215 = vadd.f32 0.0, %v4214
        %v4216 = vpop.f32.mrf.mxu0
        %v4217 = vadd.f32 0.0, %v4216
        %v4218 = vpop.f32.mrf.mxu0
        %v4219 = vadd.f32 0.0, %v4218
        %4220 = vdwg.mxu0
        %4221 = vmatprep.subr.bf16.mxu0 %v3819
        %4222 = vmatpush1.bf16.xpose.msra.mxu0 %v3818
        %4223 = vmatprep.subr.bf16.mxu0 %v3817
        %4224 = vmatpush1.bf16.xpose.msra.mxu0 %v3816
        %4225 = vmatprep.subr.bf16.mxu0 %v3815
        %4226 = vmatpush1.bf16.xpose.msra.mxu0 %v3814
        %4227 = vmatprep.subr.bf16.mxu0 %v3813
        %4228 = vmatpush1.bf16.xpose.msra.mxu0 %v3812
        %4229 = vmatprep.subr.bf16.mxu0 %v3811
        %4230 = vmatpush1.bf16.xpose.msra.mxu0 %v3810
        %4231 = vmatprep.subr.bf16.mxu0 %v3809
        %4232 = vmatpush1.bf16.xpose.msra.mxu0 %v3808
        %4233 = vmatprep.subr.bf16.mxu0 %v3807
        %4234 = vmatpush1.bf16.xpose.msra.mxu0 %v3806
        %4235 = vmatprep.subr.bf16.mxu0 %v3805
        %4236 = vmatpush1.bf16.xpose.msra.mxu0 %v3804
        %4237 = vmatprep.subr.bf16.mxu0 %v3835
        %4238 = vmatpush2.bf16.xpose.msra.mxu0 %v3834
        %4239 = vmatprep.subr.bf16.mxu0 %v3833
        %4240 = vmatpush2.bf16.xpose.msra.mxu0 %v3832
        %4241 = vmatprep.subr.bf16.mxu0 %v3831
        %4242 = vmatpush2.bf16.xpose.msra.mxu0 %v3830
        %4243 = vmatprep.subr.bf16.mxu0 %v3829
        %4244 = vmatpush2.bf16.xpose.msra.mxu0 %v3828
        %4245 = vmatprep.subr.bf16.mxu0 %v3827
        %4246 = vmatpush2.bf16.xpose.msra.mxu0 %v3826
        %4247 = vmatprep.subr.bf16.mxu0 %v3825
        %4248 = vmatpush2.bf16.xpose.msra.mxu0 %v3824
        %4249 = vmatprep.subr.bf16.mxu0 %v3823
        %4250 = vmatpush2.bf16.xpose.msra.mxu0 %v3822
        %4251 = vmatprep.subr.bf16.mxu0 %v3821
        %4252 = vmatpush2.bf16.xpose.msra.mxu0 %v3820
        %4253 = vmatprep.mubr.bf16.mxu0 %v3325
        %4254 = vmatmul.mubr.bf16.gmra.mxu0 %v3324
        %v4255 = vpop.f32.mrf.mxu0
        %v4256 = vadd.f32 0.0, %v4255
        %v4257 = vpop.f32.mrf.mxu0
        %v4258 = vadd.f32 0.0, %v4257
        %v4259 = vpop.f32.mrf.mxu0
        %v4260 = vadd.f32 0.0, %v4259
        %v4261 = vpop.f32.mrf.mxu0
        %v4262 = vadd.f32 0.0, %v4261
        %4263 = vmatprep.mubr.bf16.mxu0 %v3327
        %4264 = vmatmul.mubr.bf16.gmra.mxu0 %v3326
        %v4265 = vpop.f32.mrf.mxu0
        %v4266 = vadd.f32 0.0, %v4265
        %v4267 = vpop.f32.mrf.mxu0
        %v4268 = vadd.f32 0.0, %v4267
        %v4269 = vpop.f32.mrf.mxu0
        %v4270 = vadd.f32 0.0, %v4269
        %v4271 = vpop.f32.mrf.mxu0
        %v4272 = vadd.f32 0.0, %v4271
        %4273 = vmatprep.mubr.bf16.mxu0 %v3329
        %4274 = vmatmul.mubr.bf16.gmra.mxu0 %v3328
        %v4275 = vpop.f32.mrf.mxu0
        %v4276 = vadd.f32 0.0, %v4275
        %v4277 = vpop.f32.mrf.mxu0
        %v4278 = vadd.f32 0.0, %v4277
        %v4279 = vpop.f32.mrf.mxu0
        %v4280 = vadd.f32 0.0, %v4279
        %v4281 = vpop.f32.mrf.mxu0
        %v4282 = vadd.f32 0.0, %v4281
        %4283 = vmatprep.mubr.bf16.mxu0 %v3331
        %4284 = vmatmul.mubr.bf16.gmra.mxu0 %v3330
        %v4285 = vpop.f32.mrf.mxu0
        %v4286 = vadd.f32 0.0, %v4285
        %v4287 = vpop.f32.mrf.mxu0
        %v4288 = vadd.f32 0.0, %v4287
        %v4289 = vpop.f32.mrf.mxu0
        %v4290 = vadd.f32 0.0, %v4289
        %v4291 = vpop.f32.mrf.mxu0
        %v4292 = vadd.f32 0.0, %v4291
        %4293 = vmatprep.mubr.bf16.mxu0 %v3333
        %4294 = vmatmul.mubr.bf16.gmra.mxu0 %v3332
        %v4295 = vpop.f32.mrf.mxu0
        %v4296 = vadd.f32 0.0, %v4295
        %v4297 = vpop.f32.mrf.mxu0
        %v4298 = vadd.f32 0.0, %v4297
        %v4299 = vpop.f32.mrf.mxu0
        %v4300 = vadd.f32 0.0, %v4299
        %v4301 = vpop.f32.mrf.mxu0
        %v4302 = vadd.f32 0.0, %v4301
        %4303 = vmatprep.mubr.bf16.mxu0 %v3335
        %4304 = vmatmul.mubr.bf16.gmra.mxu0 %v3334
        %v4305 = vpop.f32.mrf.mxu0
        %v4306 = vadd.f32 0.0, %v4305
        %v4307 = vpop.f32.mrf.mxu0
        %v4308 = vadd.f32 0.0, %v4307
        %v4309 = vpop.f32.mrf.mxu0
        %v4310 = vadd.f32 0.0, %v4309
        %v4311 = vpop.f32.mrf.mxu0
        %v4312 = vadd.f32 0.0, %v4311
        %4313 = vmatprep.mubr.bf16.mxu0 %v3337
        %4314 = vmatmul.mubr.bf16.gmra.mxu0 %v3336
        %v4315 = vpop.f32.mrf.mxu0
        %v4316 = vadd.f32 0.0, %v4315
        %v4317 = vpop.f32.mrf.mxu0
        %v4318 = vadd.f32 0.0, %v4317
        %v4319 = vpop.f32.mrf.mxu0
        %v4320 = vadd.f32 0.0, %v4319
        %v4321 = vpop.f32.mrf.mxu0
        %v4322 = vadd.f32 0.0, %v4321
        %4323 = vmatprep.mubr.bf16.mxu0 %v3339
        %4324 = vmatmul.mubr.bf16.gmra.mxu0 %v3338
        %v4325 = vpop.f32.mrf.mxu0
        %v4326 = vadd.f32 0.0, %v4325
        %v4327 = vpop.f32.mrf.mxu0
        %v4328 = vadd.f32 0.0, %v4327
        %v4329 = vpop.f32.mrf.mxu0
        %v4330 = vadd.f32 0.0, %v4329
        %v4331 = vpop.f32.mrf.mxu0
        %v4332 = vadd.f32 0.0, %v4331
        %4333 = vmatprep.mubr.bf16.mxu0 %v3341
        %4334 = vmatmul.mubr.bf16.gmra.mxu0 %v3340
        %v4335 = vpop.f32.mrf.mxu0
        %v4336 = vadd.f32 0.0, %v4335
        %v4337 = vpop.f32.mrf.mxu0
        %v4338 = vadd.f32 0.0, %v4337
        %v4339 = vpop.f32.mrf.mxu0
        %v4340 = vadd.f32 0.0, %v4339
        %v4341 = vpop.f32.mrf.mxu0
        %v4342 = vadd.f32 0.0, %v4341
        %4343 = vmatprep.mubr.bf16.mxu0 %v3343
        %4344 = vmatmul.mubr.bf16.gmra.mxu0 %v3342
        %v4345 = vpop.f32.mrf.mxu0
        %v4346 = vadd.f32 0.0, %v4345
        %v4347 = vpop.f32.mrf.mxu0
        %v4348 = vadd.f32 0.0, %v4347
        %v4349 = vpop.f32.mrf.mxu0
        %v4350 = vadd.f32 0.0, %v4349
        %v4351 = vpop.f32.mrf.mxu0
        %v4352 = vadd.f32 0.0, %v4351
        %4353 = vmatprep.mubr.bf16.mxu0 %v3345
        %4354 = vmatmul.mubr.bf16.gmra.mxu0 %v3344
        %v4355 = vpop.f32.mrf.mxu0
        %v4356 = vadd.f32 0.0, %v4355
        %v4357 = vpop.f32.mrf.mxu0
        %v4358 = vadd.f32 0.0, %v4357
        %v4359 = vpop.f32.mrf.mxu0
        %v4360 = vadd.f32 0.0, %v4359
        %v4361 = vpop.f32.mrf.mxu0
        %v4362 = vadd.f32 0.0, %v4361
        %4363 = vmatprep.mubr.bf16.mxu0 %v3347
        %4364 = vmatmul.mubr.bf16.gmra.mxu0 %v3346
        %v4365 = vpop.f32.mrf.mxu0
        %v4366 = vadd.f32 0.0, %v4365
        %v4367 = vpop.f32.mrf.mxu0
        %v4368 = vadd.f32 0.0, %v4367
        %v4369 = vpop.f32.mrf.mxu0
        %v4370 = vadd.f32 0.0, %v4369
        %v4371 = vpop.f32.mrf.mxu0
        %v4372 = vadd.f32 0.0, %v4371
        %4373 = vmatprep.mubr.bf16.mxu0 %v3349
        %4374 = vmatmul.mubr.bf16.gmra.mxu0 %v3348
        %v4375 = vpop.f32.mrf.mxu0
        %v4376 = vadd.f32 0.0, %v4375
        %v4377 = vpop.f32.mrf.mxu0
        %v4378 = vadd.f32 0.0, %v4377
        %v4379 = vpop.f32.mrf.mxu0
        %v4380 = vadd.f32 0.0, %v4379
        %v4381 = vpop.f32.mrf.mxu0
        %v4382 = vadd.f32 0.0, %v4381
        %4383 = vmatprep.mubr.bf16.mxu0 %v3351
        %4384 = vmatmul.mubr.bf16.gmra.mxu0 %v3350
        %v4385 = vpop.f32.mrf.mxu0
        %v4386 = vadd.f32 0.0, %v4385
        %v4387 = vpop.f32.mrf.mxu0
        %v4388 = vadd.f32 0.0, %v4387
        %v4389 = vpop.f32.mrf.mxu0
        %v4390 = vadd.f32 0.0, %v4389
        %v4391 = vpop.f32.mrf.mxu0
        %v4392 = vadd.f32 0.0, %v4391
        %4393 = vmatprep.mubr.bf16.mxu0 %v3353
        %4394 = vmatmul.mubr.bf16.gmra.mxu0 %v3352
        %v4395 = vpop.f32.mrf.mxu0
        %v4396 = vadd.f32 0.0, %v4395
        %v4397 = vpop.f32.mrf.mxu0
        %v4398 = vadd.f32 0.0, %v4397
        %v4399 = vpop.f32.mrf.mxu0
        %v4400 = vadd.f32 0.0, %v4399
        %v4401 = vpop.f32.mrf.mxu0
        %v4402 = vadd.f32 0.0, %v4401
        %4403 = vmatprep.mubr.bf16.mxu0 %v3355
        %4404 = vmatmul.mubr.bf16.gmra.mxu0 %v3354
        %v4405 = vpop.f32.mrf.mxu0
        %v4406 = vadd.f32 0.0, %v4405
        %v4407 = vpop.f32.mrf.mxu0
        %v4408 = vadd.f32 0.0, %v4407
        %v4409 = vpop.f32.mrf.mxu0
        %v4410 = vadd.f32 0.0, %v4409
        %v4411 = vpop.f32.mrf.mxu0
        %v4412 = vadd.f32 0.0, %v4411
        %4413 = vdwg.mxu0
        %4414 = vmatprep.subr.bf16.mxu0 %v3851
        %4415 = vmatpush1.bf16.xpose.msra.mxu0 %v3850
        %4416 = vmatprep.subr.bf16.mxu0 %v3849
        %4417 = vmatpush1.bf16.xpose.msra.mxu0 %v3848
        %4418 = vmatprep.subr.bf16.mxu0 %v3847
        %4419 = vmatpush1.bf16.xpose.msra.mxu0 %v3846
        %4420 = vmatprep.subr.bf16.mxu0 %v3845
        %4421 = vmatpush1.bf16.xpose.msra.mxu0 %v3844
        %4422 = vmatprep.subr.bf16.mxu0 %v3843
        %4423 = vmatpush1.bf16.xpose.msra.mxu0 %v3842
        %4424 = vmatprep.subr.bf16.mxu0 %v3841
        %4425 = vmatpush1.bf16.xpose.msra.mxu0 %v3840
        %4426 = vmatprep.subr.bf16.mxu0 %v3839
        %4427 = vmatpush1.bf16.xpose.msra.mxu0 %v3838
        %4428 = vmatprep.subr.bf16.mxu0 %v3837
        %4429 = vmatpush1.bf16.xpose.msra.mxu0 %v3836
        %4430 = vmatprep.subr.bf16.mxu0 %v3867
        %4431 = vmatpush2.bf16.xpose.msra.mxu0 %v3866
        %4432 = vmatprep.subr.bf16.mxu0 %v3865
        %4433 = vmatpush2.bf16.xpose.msra.mxu0 %v3864
        %4434 = vmatprep.subr.bf16.mxu0 %v3863
        %4435 = vmatpush2.bf16.xpose.msra.mxu0 %v3862
        %4436 = vmatprep.subr.bf16.mxu0 %v3861
        %4437 = vmatpush2.bf16.xpose.msra.mxu0 %v3860
        %4438 = vmatprep.subr.bf16.mxu0 %v3859
        %4439 = vmatpush2.bf16.xpose.msra.mxu0 %v3858
        %4440 = vmatprep.subr.bf16.mxu0 %v3857
        %4441 = vmatpush2.bf16.xpose.msra.mxu0 %v3856
        %4442 = vmatprep.subr.bf16.mxu0 %v3855
        %4443 = vmatpush2.bf16.xpose.msra.mxu0 %v3854
        %4444 = vmatprep.subr.bf16.mxu0 %v3853
        %4445 = vmatpush2.bf16.xpose.msra.mxu0 %v3852
        %4446 = vmatprep.mubr.bf16.mxu0 %v3325
        %4447 = vmatmul.mubr.bf16.gmra.mxu0 %v3324
        %v4448 = vpop.f32.mrf.mxu0
        %v4449 = vadd.f32 0.0, %v4448
        %v4450 = vpop.f32.mrf.mxu0
        %v4451 = vadd.f32 0.0, %v4450
        %v4452 = vpop.f32.mrf.mxu0
        %v4453 = vadd.f32 0.0, %v4452
        %v4454 = vpop.f32.mrf.mxu0
        %v4455 = vadd.f32 0.0, %v4454
        %4456 = vmatprep.mubr.bf16.mxu0 %v3327
        %4457 = vmatmul.mubr.bf16.gmra.mxu0 %v3326
        %v4458 = vpop.f32.mrf.mxu0
        %v4459 = vadd.f32 0.0, %v4458
        %v4460 = vpop.f32.mrf.mxu0
        %v4461 = vadd.f32 0.0, %v4460
        %v4462 = vpop.f32.mrf.mxu0
        %v4463 = vadd.f32 0.0, %v4462
        %v4464 = vpop.f32.mrf.mxu0
        %v4465 = vadd.f32 0.0, %v4464
        %4466 = vmatprep.mubr.bf16.mxu0 %v3329
        %4467 = vmatmul.mubr.bf16.gmra.mxu0 %v3328
        %v4468 = vpop.f32.mrf.mxu0
        %v4469 = vadd.f32 0.0, %v4468
        %v4470 = vpop.f32.mrf.mxu0
        %v4471 = vadd.f32 0.0, %v4470
        %v4472 = vpop.f32.mrf.mxu0
        %v4473 = vadd.f32 0.0, %v4472
        %v4474 = vpop.f32.mrf.mxu0
        %v4475 = vadd.f32 0.0, %v4474
        %4476 = vmatprep.mubr.bf16.mxu0 %v3331
        %4477 = vmatmul.mubr.bf16.gmra.mxu0 %v3330
        %v4478 = vpop.f32.mrf.mxu0
        %v4479 = vadd.f32 0.0, %v4478
        %v4480 = vpop.f32.mrf.mxu0
        %v4481 = vadd.f32 0.0, %v4480
        %v4482 = vpop.f32.mrf.mxu0
        %v4483 = vadd.f32 0.0, %v4482
        %v4484 = vpop.f32.mrf.mxu0
        %v4485 = vadd.f32 0.0, %v4484
        %4486 = vmatprep.mubr.bf16.mxu0 %v3333
        %4487 = vmatmul.mubr.bf16.gmra.mxu0 %v3332
        %v4488 = vpop.f32.mrf.mxu0
        %v4489 = vadd.f32 0.0, %v4488
        %v4490 = vpop.f32.mrf.mxu0
        %v4491 = vadd.f32 0.0, %v4490
        %v4492 = vpop.f32.mrf.mxu0
        %v4493 = vadd.f32 0.0, %v4492
        %v4494 = vpop.f32.mrf.mxu0
        %v4495 = vadd.f32 0.0, %v4494
        %4496 = vmatprep.mubr.bf16.mxu0 %v3335
        %4497 = vmatmul.mubr.bf16.gmra.mxu0 %v3334
        %v4498 = vpop.f32.mrf.mxu0
        %v4499 = vadd.f32 0.0, %v4498
        %v4500 = vpop.f32.mrf.mxu0
        %v4501 = vadd.f32 0.0, %v4500
        %v4502 = vpop.f32.mrf.mxu0
        %v4503 = vadd.f32 0.0, %v4502
        %v4504 = vpop.f32.mrf.mxu0
        %v4505 = vadd.f32 0.0, %v4504
        %4506 = vmatprep.mubr.bf16.mxu0 %v3337
        %4507 = vmatmul.mubr.bf16.gmra.mxu0 %v3336
        %v4508 = vpop.f32.mrf.mxu0
        %v4509 = vadd.f32 0.0, %v4508
        %v4510 = vpop.f32.mrf.mxu0
        %v4511 = vadd.f32 0.0, %v4510
        %v4512 = vpop.f32.mrf.mxu0
        %v4513 = vadd.f32 0.0, %v4512
        %v4514 = vpop.f32.mrf.mxu0
        %v4515 = vadd.f32 0.0, %v4514
        %4516 = vmatprep.mubr.bf16.mxu0 %v3339
        %4517 = vmatmul.mubr.bf16.gmra.mxu0 %v3338
        %v4518 = vpop.f32.mrf.mxu0
        %v4519 = vadd.f32 0.0, %v4518
        %v4520 = vpop.f32.mrf.mxu0
        %v4521 = vadd.f32 0.0, %v4520
        %v4522 = vpop.f32.mrf.mxu0
        %v4523 = vadd.f32 0.0, %v4522
        %v4524 = vpop.f32.mrf.mxu0
        %v4525 = vadd.f32 0.0, %v4524
        %4526 = vmatprep.mubr.bf16.mxu0 %v3341
        %4527 = vmatmul.mubr.bf16.gmra.mxu0 %v3340
        %v4528 = vpop.f32.mrf.mxu0
        %v4529 = vadd.f32 0.0, %v4528
        %v4530 = vpop.f32.mrf.mxu0
        %v4531 = vadd.f32 0.0, %v4530
        %v4532 = vpop.f32.mrf.mxu0
        %v4533 = vadd.f32 0.0, %v4532
        %v4534 = vpop.f32.mrf.mxu0
        %v4535 = vadd.f32 0.0, %v4534
        %4536 = vmatprep.mubr.bf16.mxu0 %v3343
        %4537 = vmatmul.mubr.bf16.gmra.mxu0 %v3342
        %v4538 = vpop.f32.mrf.mxu0
        %v4539 = vadd.f32 0.0, %v4538
        %v4540 = vpop.f32.mrf.mxu0
        %v4541 = vadd.f32 0.0, %v4540
        %v4542 = vpop.f32.mrf.mxu0
        %v4543 = vadd.f32 0.0, %v4542
        %v4544 = vpop.f32.mrf.mxu0
        %v4545 = vadd.f32 0.0, %v4544
        %4546 = vmatprep.mubr.bf16.mxu0 %v3345
        %4547 = vmatmul.mubr.bf16.gmra.mxu0 %v3344
        %v4548 = vpop.f32.mrf.mxu0
        %v4549 = vadd.f32 0.0, %v4548
        %v4550 = vpop.f32.mrf.mxu0
        %v4551 = vadd.f32 0.0, %v4550
        %v4552 = vpop.f32.mrf.mxu0
        %v4553 = vadd.f32 0.0, %v4552
        %v4554 = vpop.f32.mrf.mxu0
        %v4555 = vadd.f32 0.0, %v4554
        %4556 = vmatprep.mubr.bf16.mxu0 %v3347
        %4557 = vmatmul.mubr.bf16.gmra.mxu0 %v3346
        %v4558 = vpop.f32.mrf.mxu0
        %v4559 = vadd.f32 0.0, %v4558
        %v4560 = vpop.f32.mrf.mxu0
        %v4561 = vadd.f32 0.0, %v4560
        %v4562 = vpop.f32.mrf.mxu0
        %v4563 = vadd.f32 0.0, %v4562
        %v4564 = vpop.f32.mrf.mxu0
        %v4565 = vadd.f32 0.0, %v4564
        %4566 = vmatprep.mubr.bf16.mxu0 %v3349
        %4567 = vmatmul.mubr.bf16.gmra.mxu0 %v3348
        %v4568 = vpop.f32.mrf.mxu0
        %v4569 = vadd.f32 0.0, %v4568
        %v4570 = vpop.f32.mrf.mxu0
        %v4571 = vadd.f32 0.0, %v4570
        %v4572 = vpop.f32.mrf.mxu0
        %v4573 = vadd.f32 0.0, %v4572
        %v4574 = vpop.f32.mrf.mxu0
        %v4575 = vadd.f32 0.0, %v4574
        %4576 = vmatprep.mubr.bf16.mxu0 %v3351
        %4577 = vmatmul.mubr.bf16.gmra.mxu0 %v3350
        %v4578 = vpop.f32.mrf.mxu0
        %v4579 = vadd.f32 0.0, %v4578
        %v4580 = vpop.f32.mrf.mxu0
        %v4581 = vadd.f32 0.0, %v4580
        %v4582 = vpop.f32.mrf.mxu0
        %v4583 = vadd.f32 0.0, %v4582
        %v4584 = vpop.f32.mrf.mxu0
        %v4585 = vadd.f32 0.0, %v4584
        %4586 = vmatprep.mubr.bf16.mxu0 %v3353
        %4587 = vmatmul.mubr.bf16.gmra.mxu0 %v3352
        %v4588 = vpop.f32.mrf.mxu0
        %v4589 = vadd.f32 0.0, %v4588
        %v4590 = vpop.f32.mrf.mxu0
        %v4591 = vadd.f32 0.0, %v4590
        %v4592 = vpop.f32.mrf.mxu0
        %v4593 = vadd.f32 0.0, %v4592
        %v4594 = vpop.f32.mrf.mxu0
        %v4595 = vadd.f32 0.0, %v4594
        %4596 = vmatprep.mubr.bf16.mxu0 %v3355
        %4597 = vmatmul.mubr.bf16.gmra.mxu0 %v3354
        %v4598 = vpop.f32.mrf.mxu0
        %v4599 = vadd.f32 0.0, %v4598
        %v4600 = vpop.f32.mrf.mxu0
        %v4601 = vadd.f32 0.0, %v4600
        %v4602 = vpop.f32.mrf.mxu0
        %v4603 = vadd.f32 0.0, %v4602
        %v4604 = vpop.f32.mrf.mxu0
        %v4605 = vadd.f32 0.0, %v4604
        %4606 = vdwg.mxu0
        %4607 = vmatprep.subr.bf16.mxu0 %v3883
        %4608 = vmatpush1.bf16.xpose.msra.mxu0 %v3882
        %4609 = vmatprep.subr.bf16.mxu0 %v3881
        %4610 = vmatpush1.bf16.xpose.msra.mxu0 %v3880
        %4611 = vmatprep.subr.bf16.mxu0 %v3879
        %4612 = vmatpush1.bf16.xpose.msra.mxu0 %v3878
        %4613 = vmatprep.subr.bf16.mxu0 %v3877
        %4614 = vmatpush1.bf16.xpose.msra.mxu0 %v3876
        %4615 = vmatprep.subr.bf16.mxu0 %v3875
        %4616 = vmatpush1.bf16.xpose.msra.mxu0 %v3874
        %4617 = vmatprep.subr.bf16.mxu0 %v3873
        %4618 = vmatpush1.bf16.xpose.msra.mxu0 %v3872
        %4619 = vmatprep.subr.bf16.mxu0 %v3871
        %4620 = vmatpush1.bf16.xpose.msra.mxu0 %v3870
        %4621 = vmatprep.subr.bf16.mxu0 %v3869
        %4622 = vmatpush1.bf16.xpose.msra.mxu0 %v3868
        %4623 = vmatprep.subr.bf16.mxu0 %v3899
        %4624 = vmatpush2.bf16.xpose.msra.mxu0 %v3898
        %4625 = vmatprep.subr.bf16.mxu0 %v3897
        %4626 = vmatpush2.bf16.xpose.msra.mxu0 %v3896
        %4627 = vmatprep.subr.bf16.mxu0 %v3895
        %4628 = vmatpush2.bf16.xpose.msra.mxu0 %v3894
        %4629 = vmatprep.subr.bf16.mxu0 %v3893
        %4630 = vmatpush2.bf16.xpose.msra.mxu0 %v3892
        %4631 = vmatprep.subr.bf16.mxu0 %v3891
        %4632 = vmatpush2.bf16.xpose.msra.mxu0 %v3890
        %4633 = vmatprep.subr.bf16.mxu0 %v3889
        %4634 = vmatpush2.bf16.xpose.msra.mxu0 %v3888
        %4635 = vmatprep.subr.bf16.mxu0 %v3887
        %4636 = vmatpush2.bf16.xpose.msra.mxu0 %v3886
        %4637 = vmatprep.subr.bf16.mxu0 %v3885
        %4638 = vmatpush2.bf16.xpose.msra.mxu0 %v3884
        %4639 = vmatprep.mubr.bf16.mxu0 %v3325
        %4640 = vmatmul.mubr.bf16.gmra.mxu0 %v3324
        %v4641 = vpop.f32.mrf.mxu0
        %v4642 = vadd.f32 0.0, %v4641
        %v4643 = vpop.f32.mrf.mxu0
        %v4644 = vadd.f32 0.0, %v4643
        %v4645 = vpop.f32.mrf.mxu0
        %v4646 = vadd.f32 0.0, %v4645
        %v4647 = vpop.f32.mrf.mxu0
        %v4648 = vadd.f32 0.0, %v4647
        %4649 = vmatprep.mubr.bf16.mxu0 %v3327
        %4650 = vmatmul.mubr.bf16.gmra.mxu0 %v3326
        %v4651 = vpop.f32.mrf.mxu0
        %v4652 = vadd.f32 0.0, %v4651
        %v4653 = vpop.f32.mrf.mxu0
        %v4654 = vadd.f32 0.0, %v4653
        %v4655 = vpop.f32.mrf.mxu0
        %v4656 = vadd.f32 0.0, %v4655
        %v4657 = vpop.f32.mrf.mxu0
        %v4658 = vadd.f32 0.0, %v4657
        %4659 = vmatprep.mubr.bf16.mxu0 %v3329
        %4660 = vmatmul.mubr.bf16.gmra.mxu0 %v3328
        %v4661 = vpop.f32.mrf.mxu0
        %v4662 = vadd.f32 0.0, %v4661
        %v4663 = vpop.f32.mrf.mxu0
        %v4664 = vadd.f32 0.0, %v4663
        %v4665 = vpop.f32.mrf.mxu0
        %v4666 = vadd.f32 0.0, %v4665
        %v4667 = vpop.f32.mrf.mxu0
        %v4668 = vadd.f32 0.0, %v4667
        %4669 = vmatprep.mubr.bf16.mxu0 %v3331
        %4670 = vmatmul.mubr.bf16.gmra.mxu0 %v3330
        %v4671 = vpop.f32.mrf.mxu0
        %v4672 = vadd.f32 0.0, %v4671
        %v4673 = vpop.f32.mrf.mxu0
        %v4674 = vadd.f32 0.0, %v4673
        %v4675 = vpop.f32.mrf.mxu0
        %v4676 = vadd.f32 0.0, %v4675
        %v4677 = vpop.f32.mrf.mxu0
        %v4678 = vadd.f32 0.0, %v4677
        %4679 = vmatprep.mubr.bf16.mxu0 %v3333
        %4680 = vmatmul.mubr.bf16.gmra.mxu0 %v3332
        %v4681 = vpop.f32.mrf.mxu0
        %v4682 = vadd.f32 0.0, %v4681
        %v4683 = vpop.f32.mrf.mxu0
        %v4684 = vadd.f32 0.0, %v4683
        %v4685 = vpop.f32.mrf.mxu0
        %v4686 = vadd.f32 0.0, %v4685
        %v4687 = vpop.f32.mrf.mxu0
        %v4688 = vadd.f32 0.0, %v4687
        %4689 = vmatprep.mubr.bf16.mxu0 %v3335
        %4690 = vmatmul.mubr.bf16.gmra.mxu0 %v3334
        %v4691 = vpop.f32.mrf.mxu0
        %v4692 = vadd.f32 0.0, %v4691
        %v4693 = vpop.f32.mrf.mxu0
        %v4694 = vadd.f32 0.0, %v4693
        %v4695 = vpop.f32.mrf.mxu0
        %v4696 = vadd.f32 0.0, %v4695
        %v4697 = vpop.f32.mrf.mxu0
        %v4698 = vadd.f32 0.0, %v4697
        %4699 = vmatprep.mubr.bf16.mxu0 %v3337
        %4700 = vmatmul.mubr.bf16.gmra.mxu0 %v3336
        %v4701 = vpop.f32.mrf.mxu0
        %v4702 = vadd.f32 0.0, %v4701
        %v4703 = vpop.f32.mrf.mxu0
        %v4704 = vadd.f32 0.0, %v4703
        %v4705 = vpop.f32.mrf.mxu0
        %v4706 = vadd.f32 0.0, %v4705
        %v4707 = vpop.f32.mrf.mxu0
        %v4708 = vadd.f32 0.0, %v4707
        %4709 = vmatprep.mubr.bf16.mxu0 %v3339
        %4710 = vmatmul.mubr.bf16.gmra.mxu0 %v3338
        %v4711 = vpop.f32.mrf.mxu0
        %v4712 = vadd.f32 0.0, %v4711
        %v4713 = vpop.f32.mrf.mxu0
        %v4714 = vadd.f32 0.0, %v4713
        %v4715 = vpop.f32.mrf.mxu0
        %v4716 = vadd.f32 0.0, %v4715
        %v4717 = vpop.f32.mrf.mxu0
        %v4718 = vadd.f32 0.0, %v4717
        %4719 = vmatprep.mubr.bf16.mxu0 %v3341
        %4720 = vmatmul.mubr.bf16.gmra.mxu0 %v3340
        %v4721 = vpop.f32.mrf.mxu0
        %v4722 = vadd.f32 0.0, %v4721
        %v4723 = vpop.f32.mrf.mxu0
        %v4724 = vadd.f32 0.0, %v4723
        %v4725 = vpop.f32.mrf.mxu0
        %v4726 = vadd.f32 0.0, %v4725
        %v4727 = vpop.f32.mrf.mxu0
        %v4728 = vadd.f32 0.0, %v4727
        %4729 = vmatprep.mubr.bf16.mxu0 %v3343
        %4730 = vmatmul.mubr.bf16.gmra.mxu0 %v3342
        %v4731 = vpop.f32.mrf.mxu0
        %v4732 = vadd.f32 0.0, %v4731
        %v4733 = vpop.f32.mrf.mxu0
        %v4734 = vadd.f32 0.0, %v4733
        %v4735 = vpop.f32.mrf.mxu0
        %v4736 = vadd.f32 0.0, %v4735
        %v4737 = vpop.f32.mrf.mxu0
        %v4738 = vadd.f32 0.0, %v4737
        %4739 = vmatprep.mubr.bf16.mxu0 %v3345
        %4740 = vmatmul.mubr.bf16.gmra.mxu0 %v3344
        %v4741 = vpop.f32.mrf.mxu0
        %v4742 = vadd.f32 0.0, %v4741
        %v4743 = vpop.f32.mrf.mxu0
        %v4744 = vadd.f32 0.0, %v4743
        %v4745 = vpop.f32.mrf.mxu0
        %v4746 = vadd.f32 0.0, %v4745
        %v4747 = vpop.f32.mrf.mxu0
        %v4748 = vadd.f32 0.0, %v4747
        %4749 = vmatprep.mubr.bf16.mxu0 %v3347
        %4750 = vmatmul.mubr.bf16.gmra.mxu0 %v3346
        %v4751 = vpop.f32.mrf.mxu0
        %v4752 = vadd.f32 0.0, %v4751
        %v4753 = vpop.f32.mrf.mxu0
        %v4754 = vadd.f32 0.0, %v4753
        %v4755 = vpop.f32.mrf.mxu0
        %v4756 = vadd.f32 0.0, %v4755
        %v4757 = vpop.f32.mrf.mxu0
        %v4758 = vadd.f32 0.0, %v4757
        %4759 = vmatprep.mubr.bf16.mxu0 %v3349
        %4760 = vmatmul.mubr.bf16.gmra.mxu0 %v3348
        %v4761 = vpop.f32.mrf.mxu0
        %v4762 = vadd.f32 0.0, %v4761
        %v4763 = vpop.f32.mrf.mxu0
        %v4764 = vadd.f32 0.0, %v4763
        %v4765 = vpop.f32.mrf.mxu0
        %v4766 = vadd.f32 0.0, %v4765
        %v4767 = vpop.f32.mrf.mxu0
        %v4768 = vadd.f32 0.0, %v4767
        %4769 = vmatprep.mubr.bf16.mxu0 %v3351
        %4770 = vmatmul.mubr.bf16.gmra.mxu0 %v3350
        %v4771 = vpop.f32.mrf.mxu0
        %v4772 = vadd.f32 0.0, %v4771
        %v4773 = vpop.f32.mrf.mxu0
        %v4774 = vadd.f32 0.0, %v4773
        %v4775 = vpop.f32.mrf.mxu0
        %v4776 = vadd.f32 0.0, %v4775
        %v4777 = vpop.f32.mrf.mxu0
        %v4778 = vadd.f32 0.0, %v4777
        %4779 = vmatprep.mubr.bf16.mxu0 %v3353
        %4780 = vmatmul.mubr.bf16.gmra.mxu0 %v3352
        %v4781 = vpop.f32.mrf.mxu0
        %v4782 = vadd.f32 0.0, %v4781
        %v4783 = vpop.f32.mrf.mxu0
        %v4784 = vadd.f32 0.0, %v4783
        %v4785 = vpop.f32.mrf.mxu0
        %v4786 = vadd.f32 0.0, %v4785
        %v4787 = vpop.f32.mrf.mxu0
        %v4788 = vadd.f32 0.0, %v4787
        %4789 = vmatprep.mubr.bf16.mxu0 %v3355
        %4790 = vmatmul.mubr.bf16.gmra.mxu0 %v3354
        %v4791 = vpop.f32.mrf.mxu0
        %v4792 = vadd.f32 0.0, %v4791
        %v4793 = vpop.f32.mrf.mxu0
        %v4794 = vadd.f32 0.0, %v4793
        %v4795 = vpop.f32.mrf.mxu0
        %v4796 = vadd.f32 0.0, %v4795
        %v4797 = vpop.f32.mrf.mxu0
        %v4798 = vadd.f32 0.0, %v4797
        %4799 = vdwg.mxu0
        %v4800 = vpack.c.bf16 %v4067, %v4063
        %v4801 = vpack.c.bf16 %v4069, %v4065
        %v4802 = vpack.c.bf16 %v4260, %v4256
        %v4803 = vpack.c.bf16 %v4262, %v4258
        %v4804 = vpack.c.bf16 %v4453, %v4449
        %v4805 = vpack.c.bf16 %v4455, %v4451
        %v4806 = vpack.c.bf16 %v4646, %v4642
        %v4807 = vpack.c.bf16 %v4648, %v4644
        %v4808 = vpack.c.bf16 %v4077, %v4073
        %v4809 = vpack.c.bf16 %v4079, %v4075
        %v4810 = vpack.c.bf16 %v4270, %v4266
        %v4811 = vpack.c.bf16 %v4272, %v4268
        %v4812 = vpack.c.bf16 %v4463, %v4459
        %v4813 = vpack.c.bf16 %v4465, %v4461
        %v4814 = vpack.c.bf16 %v4656, %v4652
        %v4815 = vpack.c.bf16 %v4658, %v4654
        %v4816 = vpack.c.bf16 %v4087, %v4083
        %v4817 = vpack.c.bf16 %v4089, %v4085
        %v4818 = vpack.c.bf16 %v4280, %v4276
        %v4819 = vpack.c.bf16 %v4282, %v4278
        %v4820 = vpack.c.bf16 %v4473, %v4469
        %v4821 = vpack.c.bf16 %v4475, %v4471
        %v4822 = vpack.c.bf16 %v4666, %v4662
        %v4823 = vpack.c.bf16 %v4668, %v4664
        %v4824 = vpack.c.bf16 %v4097, %v4093
        %v4825 = vpack.c.bf16 %v4099, %v4095
        %v4826 = vpack.c.bf16 %v4290, %v4286
        %v4827 = vpack.c.bf16 %v4292, %v4288
        %v4828 = vpack.c.bf16 %v4483, %v4479
        %v4829 = vpack.c.bf16 %v4485, %v4481
        %v4830 = vpack.c.bf16 %v4676, %v4672
        %v4831 = vpack.c.bf16 %v4678, %v4674
        %v4832 = vpack.c.bf16 %v4107, %v4103
        %v4833 = vpack.c.bf16 %v4109, %v4105
        %v4834 = vpack.c.bf16 %v4300, %v4296
        %v4835 = vpack.c.bf16 %v4302, %v4298
        %v4836 = vpack.c.bf16 %v4493, %v4489
        %v4837 = vpack.c.bf16 %v4495, %v4491
        %v4838 = vpack.c.bf16 %v4686, %v4682
        %v4839 = vpack.c.bf16 %v4688, %v4684
        %v4840 = vpack.c.bf16 %v4117, %v4113
        %v4841 = vpack.c.bf16 %v4119, %v4115
        %v4842 = vpack.c.bf16 %v4310, %v4306
        %v4843 = vpack.c.bf16 %v4312, %v4308
        %v4844 = vpack.c.bf16 %v4503, %v4499
        %v4845 = vpack.c.bf16 %v4505, %v4501
        %v4846 = vpack.c.bf16 %v4696, %v4692
        %v4847 = vpack.c.bf16 %v4698, %v4694
        %v4848 = vpack.c.bf16 %v4127, %v4123
        %v4849 = vpack.c.bf16 %v4129, %v4125
        %v4850 = vpack.c.bf16 %v4320, %v4316
        %v4851 = vpack.c.bf16 %v4322, %v4318
        %v4852 = vpack.c.bf16 %v4513, %v4509
        %v4853 = vpack.c.bf16 %v4515, %v4511
        %v4854 = vpack.c.bf16 %v4706, %v4702
        %v4855 = vpack.c.bf16 %v4708, %v4704
        %v4856 = vpack.c.bf16 %v4137, %v4133
        %v4857 = vpack.c.bf16 %v4139, %v4135
        %v4858 = vpack.c.bf16 %v4330, %v4326
        %v4859 = vpack.c.bf16 %v4332, %v4328
        %v4860 = vpack.c.bf16 %v4523, %v4519
        %v4861 = vpack.c.bf16 %v4525, %v4521
        %v4862 = vpack.c.bf16 %v4716, %v4712
        %v4863 = vpack.c.bf16 %v4718, %v4714
        %v4864 = vpack.c.bf16 %v4147, %v4143
        %v4865 = vpack.c.bf16 %v4149, %v4145
        %v4866 = vpack.c.bf16 %v4340, %v4336
        %v4867 = vpack.c.bf16 %v4342, %v4338
        %v4868 = vpack.c.bf16 %v4533, %v4529
        %v4869 = vpack.c.bf16 %v4535, %v4531
        %v4870 = vpack.c.bf16 %v4726, %v4722
        %v4871 = vpack.c.bf16 %v4728, %v4724
        %v4872 = vpack.c.bf16 %v4157, %v4153
        %v4873 = vpack.c.bf16 %v4159, %v4155
        %v4874 = vpack.c.bf16 %v4350, %v4346
        %v4875 = vpack.c.bf16 %v4352, %v4348
        %v4876 = vpack.c.bf16 %v4543, %v4539
        %v4877 = vpack.c.bf16 %v4545, %v4541
        %v4878 = vpack.c.bf16 %v4736, %v4732
        %v4879 = vpack.c.bf16 %v4738, %v4734
        %v4880 = vpack.c.bf16 %v4167, %v4163
        %v4881 = vpack.c.bf16 %v4169, %v4165
        %v4882 = vpack.c.bf16 %v4360, %v4356
        %v4883 = vpack.c.bf16 %v4362, %v4358
        %v4884 = vpack.c.bf16 %v4553, %v4549
        %v4885 = vpack.c.bf16 %v4555, %v4551
        %v4886 = vpack.c.bf16 %v4746, %v4742
        %v4887 = vpack.c.bf16 %v4748, %v4744
        %v4888 = vpack.c.bf16 %v4177, %v4173
        %v4889 = vpack.c.bf16 %v4179, %v4175
        %v4890 = vpack.c.bf16 %v4370, %v4366
        %v4891 = vpack.c.bf16 %v4372, %v4368
        %v4892 = vpack.c.bf16 %v4563, %v4559
        %v4893 = vpack.c.bf16 %v4565, %v4561
        %v4894 = vpack.c.bf16 %v4756, %v4752
        %v4895 = vpack.c.bf16 %v4758, %v4754
        %v4896 = vpack.c.bf16 %v4187, %v4183
        %v4897 = vpack.c.bf16 %v4189, %v4185
        %v4898 = vpack.c.bf16 %v4380, %v4376
        %v4899 = vpack.c.bf16 %v4382, %v4378
        %v4900 = vpack.c.bf16 %v4573, %v4569
        %v4901 = vpack.c.bf16 %v4575, %v4571
        %v4902 = vpack.c.bf16 %v4766, %v4762
        %v4903 = vpack.c.bf16 %v4768, %v4764
        %v4904 = vpack.c.bf16 %v4197, %v4193
        %v4905 = vpack.c.bf16 %v4199, %v4195
        %v4906 = vpack.c.bf16 %v4390, %v4386
        %v4907 = vpack.c.bf16 %v4392, %v4388
        %v4908 = vpack.c.bf16 %v4583, %v4579
        %v4909 = vpack.c.bf16 %v4585, %v4581
        %v4910 = vpack.c.bf16 %v4776, %v4772
        %v4911 = vpack.c.bf16 %v4778, %v4774
        %v4912 = vpack.c.bf16 %v4207, %v4203
        %v4913 = vpack.c.bf16 %v4209, %v4205
        %v4914 = vpack.c.bf16 %v4400, %v4396
        %v4915 = vpack.c.bf16 %v4402, %v4398
        %v4916 = vpack.c.bf16 %v4593, %v4589
        %v4917 = vpack.c.bf16 %v4595, %v4591
        %v4918 = vpack.c.bf16 %v4786, %v4782
        %v4919 = vpack.c.bf16 %v4788, %v4784
        %v4920 = vpack.c.bf16 %v4217, %v4213
        %v4921 = vpack.c.bf16 %v4219, %v4215
        %v4922 = vpack.c.bf16 %v4410, %v4406
        %v4923 = vpack.c.bf16 %v4412, %v4408
        %v4924 = vpack.c.bf16 %v4603, %v4599
        %v4925 = vpack.c.bf16 %v4605, %v4601
        %v4926 = vpack.c.bf16 %v4796, %v4792
        %v4927 = vpack.c.bf16 %v4798, %v4794
        %v5056 = vunpack.c.l.b16 %v4800
        %v5057 = vunpack.c.l.b16 %v4801
        %v5058 = vunpack.c.l.b16 %v4802
        %v5059 = vunpack.c.l.b16 %v4803
        %v5060 = vunpack.c.l.b16 %v4804
        %v5061 = vunpack.c.l.b16 %v4805
        %v5062 = vunpack.c.l.b16 %v4806
        %v5063 = vunpack.c.l.b16 %v4807
        %v5064 = vunpack.c.h.b16 %v4800
        %v5065 = vunpack.c.h.b16 %v4801
        %v5066 = vunpack.c.h.b16 %v4802
        %v5067 = vunpack.c.h.b16 %v4803
        %v5068 = vunpack.c.h.b16 %v4804
        %v5069 = vunpack.c.h.b16 %v4805
        %v5070 = vunpack.c.h.b16 %v4806
        %v5071 = vunpack.c.h.b16 %v4807
        %v5072 = vunpack.c.l.b16 %v4808
        %v5073 = vunpack.c.l.b16 %v4809
        %v5074 = vunpack.c.l.b16 %v4810
        %v5075 = vunpack.c.l.b16 %v4811
        %v5076 = vunpack.c.l.b16 %v4812
        %v5077 = vunpack.c.l.b16 %v4813
        %v5078 = vunpack.c.l.b16 %v4814
        %v5079 = vunpack.c.l.b16 %v4815
        %v5080 = vunpack.c.h.b16 %v4808
        %v5081 = vunpack.c.h.b16 %v4809
        %v5082 = vunpack.c.h.b16 %v4810
        %v5083 = vunpack.c.h.b16 %v4811
        %v5084 = vunpack.c.h.b16 %v4812
        %v5085 = vunpack.c.h.b16 %v4813
        %v5086 = vunpack.c.h.b16 %v4814
        %v5087 = vunpack.c.h.b16 %v4815
        %v5088 = vunpack.c.l.b16 %v4816
        %v5089 = vunpack.c.l.b16 %v4817
        %v5090 = vunpack.c.l.b16 %v4818
        %v5091 = vunpack.c.l.b16 %v4819
        %v5092 = vunpack.c.l.b16 %v4820
        %v5093 = vunpack.c.l.b16 %v4821
        %v5094 = vunpack.c.l.b16 %v4822
        %v5095 = vunpack.c.l.b16 %v4823
        %v5096 = vunpack.c.h.b16 %v4816
        %v5097 = vunpack.c.h.b16 %v4817
        %v5098 = vunpack.c.h.b16 %v4818
        %v5099 = vunpack.c.h.b16 %v4819
        %v5100 = vunpack.c.h.b16 %v4820
        %v5101 = vunpack.c.h.b16 %v4821
        %v5102 = vunpack.c.h.b16 %v4822
        %v5103 = vunpack.c.h.b16 %v4823
        %v5104 = vunpack.c.l.b16 %v4824
        %v5105 = vunpack.c.l.b16 %v4825
        %v5106 = vunpack.c.l.b16 %v4826
        %v5107 = vunpack.c.l.b16 %v4827
        %v5108 = vunpack.c.l.b16 %v4828
        %v5109 = vunpack.c.l.b16 %v4829
        %v5110 = vunpack.c.l.b16 %v4830
        %v5111 = vunpack.c.l.b16 %v4831
        %v5112 = vunpack.c.h.b16 %v4824
        %v5113 = vunpack.c.h.b16 %v4825
        %v5114 = vunpack.c.h.b16 %v4826
        %v5115 = vunpack.c.h.b16 %v4827
        %v5116 = vunpack.c.h.b16 %v4828
        %v5117 = vunpack.c.h.b16 %v4829
        %v5118 = vunpack.c.h.b16 %v4830
        %v5119 = vunpack.c.h.b16 %v4831
        %v5120 = vunpack.c.l.b16 %v4832
        %v5121 = vunpack.c.l.b16 %v4833
        %v5122 = vunpack.c.l.b16 %v4834
        %v5123 = vunpack.c.l.b16 %v4835
        %v5124 = vunpack.c.l.b16 %v4836
        %v5125 = vunpack.c.l.b16 %v4837
        %v5126 = vunpack.c.l.b16 %v4838
        %v5127 = vunpack.c.l.b16 %v4839
        %v5128 = vunpack.c.h.b16 %v4832
        %v5129 = vunpack.c.h.b16 %v4833
        %v5130 = vunpack.c.h.b16 %v4834
        %v5131 = vunpack.c.h.b16 %v4835
        %v5132 = vunpack.c.h.b16 %v4836
        %v5133 = vunpack.c.h.b16 %v4837
        %v5134 = vunpack.c.h.b16 %v4838
        %v5135 = vunpack.c.h.b16 %v4839
        %v5136 = vunpack.c.l.b16 %v4840
        %v5137 = vunpack.c.l.b16 %v4841
        %v5138 = vunpack.c.l.b16 %v4842
        %v5139 = vunpack.c.l.b16 %v4843
        %v5140 = vunpack.c.l.b16 %v4844
        %v5141 = vunpack.c.l.b16 %v4845
        %v5142 = vunpack.c.l.b16 %v4846
        %v5143 = vunpack.c.l.b16 %v4847
        %v5144 = vunpack.c.h.b16 %v4840
        %v5145 = vunpack.c.h.b16 %v4841
        %v5146 = vunpack.c.h.b16 %v4842
        %v5147 = vunpack.c.h.b16 %v4843
        %v5148 = vunpack.c.h.b16 %v4844
        %v5149 = vunpack.c.h.b16 %v4845
        %v5150 = vunpack.c.h.b16 %v4846
        %v5151 = vunpack.c.h.b16 %v4847
        %v5152 = vunpack.c.l.b16 %v4848
        %v5153 = vunpack.c.l.b16 %v4849
        %v5154 = vunpack.c.l.b16 %v4850
        %v5155 = vunpack.c.l.b16 %v4851
        %v5156 = vunpack.c.l.b16 %v4852
        %v5157 = vunpack.c.l.b16 %v4853
        %v5158 = vunpack.c.l.b16 %v4854
        %v5159 = vunpack.c.l.b16 %v4855
        %v5160 = vunpack.c.h.b16 %v4848
        %v5161 = vunpack.c.h.b16 %v4849
        %v5162 = vunpack.c.h.b16 %v4850
        %v5163 = vunpack.c.h.b16 %v4851
        %v5164 = vunpack.c.h.b16 %v4852
        %v5165 = vunpack.c.h.b16 %v4853
        %v5166 = vunpack.c.h.b16 %v4854
        %v5167 = vunpack.c.h.b16 %v4855
        %v5168 = vunpack.c.l.b16 %v4856
        %v5169 = vunpack.c.l.b16 %v4857
        %v5170 = vunpack.c.l.b16 %v4858
        %v5171 = vunpack.c.l.b16 %v4859
        %v5172 = vunpack.c.l.b16 %v4860
        %v5173 = vunpack.c.l.b16 %v4861
        %v5174 = vunpack.c.l.b16 %v4862
        %v5175 = vunpack.c.l.b16 %v4863
        %v5176 = vunpack.c.h.b16 %v4856
        %v5177 = vunpack.c.h.b16 %v4857
        %v5178 = vunpack.c.h.b16 %v4858
        %v5179 = vunpack.c.h.b16 %v4859
        %v5180 = vunpack.c.h.b16 %v4860
        %v5181 = vunpack.c.h.b16 %v4861
        %v5182 = vunpack.c.h.b16 %v4862
        %v5183 = vunpack.c.h.b16 %v4863
        %v5184 = vunpack.c.l.b16 %v4864
        %v5185 = vunpack.c.l.b16 %v4865
        %v5186 = vunpack.c.l.b16 %v4866
        %v5187 = vunpack.c.l.b16 %v4867
        %v5188 = vunpack.c.l.b16 %v4868
        %v5189 = vunpack.c.l.b16 %v4869
        %v5190 = vunpack.c.l.b16 %v4870
        %v5191 = vunpack.c.l.b16 %v4871
        %v5192 = vunpack.c.h.b16 %v4864
        %v5193 = vunpack.c.h.b16 %v4865
        %v5194 = vunpack.c.h.b16 %v4866
        %v5195 = vunpack.c.h.b16 %v4867
        %v5196 = vunpack.c.h.b16 %v4868
        %v5197 = vunpack.c.h.b16 %v4869
        %v5198 = vunpack.c.h.b16 %v4870
        %v5199 = vunpack.c.h.b16 %v4871
        %v5200 = vunpack.c.l.b16 %v4872
        %v5201 = vunpack.c.l.b16 %v4873
        %v5202 = vunpack.c.l.b16 %v4874
        %v5203 = vunpack.c.l.b16 %v4875
        %v5204 = vunpack.c.l.b16 %v4876
        %v5205 = vunpack.c.l.b16 %v4877
        %v5206 = vunpack.c.l.b16 %v4878
        %v5207 = vunpack.c.l.b16 %v4879
        %v5208 = vunpack.c.h.b16 %v4872
        %v5209 = vunpack.c.h.b16 %v4873
        %v5210 = vunpack.c.h.b16 %v4874
        %v5211 = vunpack.c.h.b16 %v4875
        %v5212 = vunpack.c.h.b16 %v4876
        %v5213 = vunpack.c.h.b16 %v4877
        %v5214 = vunpack.c.h.b16 %v4878
        %v5215 = vunpack.c.h.b16 %v4879
        %v5216 = vunpack.c.l.b16 %v4880
        %v5217 = vunpack.c.l.b16 %v4881
        %v5218 = vunpack.c.l.b16 %v4882
        %v5219 = vunpack.c.l.b16 %v4883
        %v5220 = vunpack.c.l.b16 %v4884
        %v5221 = vunpack.c.l.b16 %v4885
        %v5222 = vunpack.c.l.b16 %v4886
        %v5223 = vunpack.c.l.b16 %v4887
        %v5224 = vunpack.c.h.b16 %v4880
        %v5225 = vunpack.c.h.b16 %v4881
        %v5226 = vunpack.c.h.b16 %v4882
        %v5227 = vunpack.c.h.b16 %v4883
        %v5228 = vunpack.c.h.b16 %v4884
        %v5229 = vunpack.c.h.b16 %v4885
        %v5230 = vunpack.c.h.b16 %v4886
        %v5231 = vunpack.c.h.b16 %v4887
        %v5232 = vunpack.c.l.b16 %v4888
        %v5233 = vunpack.c.l.b16 %v4889
        %v5234 = vunpack.c.l.b16 %v4890
        %v5235 = vunpack.c.l.b16 %v4891
        %v5236 = vunpack.c.l.b16 %v4892
        %v5237 = vunpack.c.l.b16 %v4893
        %v5238 = vunpack.c.l.b16 %v4894
        %v5239 = vunpack.c.l.b16 %v4895
        %v5240 = vunpack.c.h.b16 %v4888
        %v5241 = vunpack.c.h.b16 %v4889
        %v5242 = vunpack.c.h.b16 %v4890
        %v5243 = vunpack.c.h.b16 %v4891
        %v5244 = vunpack.c.h.b16 %v4892
        %v5245 = vunpack.c.h.b16 %v4893
        %v5246 = vunpack.c.h.b16 %v4894
        %v5247 = vunpack.c.h.b16 %v4895
        %v5248 = vunpack.c.l.b16 %v4896
        %v5249 = vunpack.c.l.b16 %v4897
        %v5250 = vunpack.c.l.b16 %v4898
        %v5251 = vunpack.c.l.b16 %v4899
        %v5252 = vunpack.c.l.b16 %v4900
        %v5253 = vunpack.c.l.b16 %v4901
        %v5254 = vunpack.c.l.b16 %v4902
        %v5255 = vunpack.c.l.b16 %v4903
        %v5256 = vunpack.c.h.b16 %v4896
        %v5257 = vunpack.c.h.b16 %v4897
        %v5258 = vunpack.c.h.b16 %v4898
        %v5259 = vunpack.c.h.b16 %v4899
        %v5260 = vunpack.c.h.b16 %v4900
        %v5261 = vunpack.c.h.b16 %v4901
        %v5262 = vunpack.c.h.b16 %v4902
        %v5263 = vunpack.c.h.b16 %v4903
        %v5264 = vunpack.c.l.b16 %v4904
        %v5265 = vunpack.c.l.b16 %v4905
        %v5266 = vunpack.c.l.b16 %v4906
        %v5267 = vunpack.c.l.b16 %v4907
        %v5268 = vunpack.c.l.b16 %v4908
        %v5269 = vunpack.c.l.b16 %v4909
        %v5270 = vunpack.c.l.b16 %v4910
        %v5271 = vunpack.c.l.b16 %v4911
        %v5272 = vunpack.c.h.b16 %v4904
        %v5273 = vunpack.c.h.b16 %v4905
        %v5274 = vunpack.c.h.b16 %v4906
        %v5275 = vunpack.c.h.b16 %v4907
        %v5276 = vunpack.c.h.b16 %v4908
        %v5277 = vunpack.c.h.b16 %v4909
        %v5278 = vunpack.c.h.b16 %v4910
        %v5279 = vunpack.c.h.b16 %v4911
        %v5280 = vunpack.c.l.b16 %v4912
        %v5281 = vunpack.c.l.b16 %v4913
        %v5282 = vunpack.c.l.b16 %v4914
        %v5283 = vunpack.c.l.b16 %v4915
        %v5284 = vunpack.c.l.b16 %v4916
        %v5285 = vunpack.c.l.b16 %v4917
        %v5286 = vunpack.c.l.b16 %v4918
        %v5287 = vunpack.c.l.b16 %v4919
        %v5288 = vunpack.c.h.b16 %v4912
        %v5289 = vunpack.c.h.b16 %v4913
        %v5290 = vunpack.c.h.b16 %v4914
        %v5291 = vunpack.c.h.b16 %v4915
        %v5292 = vunpack.c.h.b16 %v4916
        %v5293 = vunpack.c.h.b16 %v4917
        %v5294 = vunpack.c.h.b16 %v4918
        %v5295 = vunpack.c.h.b16 %v4919
        %v5296 = vunpack.c.l.b16 %v4920
        %v5297 = vunpack.c.l.b16 %v4921
        %v5298 = vunpack.c.l.b16 %v4922
        %v5299 = vunpack.c.l.b16 %v4923
        %v5300 = vunpack.c.l.b16 %v4924
        %v5301 = vunpack.c.l.b16 %v4925
        %v5302 = vunpack.c.l.b16 %v4926
        %v5303 = vunpack.c.l.b16 %v4927
        %v5304 = vunpack.c.h.b16 %v4920
        %v5305 = vunpack.c.h.b16 %v4921
        %v5306 = vunpack.c.h.b16 %v4922
        %v5307 = vunpack.c.h.b16 %v4923
        %v5308 = vunpack.c.h.b16 %v4924
        %v5309 = vunpack.c.h.b16 %v4925
        %v5310 = vunpack.c.h.b16 %v4926
        %v5311 = vunpack.c.h.b16 %v4927
        %v5312 = vpack.c.b16 %v5057, %v5056
        %v5313 = vpack.c.b16 %v5059, %v5058
        %v5314 = vpack.c.b16 %v5061, %v5060
        %v5315 = vpack.c.b16 %v5063, %v5062
        %v5316 = vpack.c.b16 %v5065, %v5064
        %v5317 = vpack.c.b16 %v5067, %v5066
        %v5318 = vpack.c.b16 %v5069, %v5068
        %v5319 = vpack.c.b16 %v5071, %v5070
        %v5320 = vpack.c.b16 %v5073, %v5072
        %v5321 = vpack.c.b16 %v5075, %v5074
        %v5322 = vpack.c.b16 %v5077, %v5076
        %v5323 = vpack.c.b16 %v5079, %v5078
        %v5324 = vpack.c.b16 %v5081, %v5080
        %v5325 = vpack.c.b16 %v5083, %v5082
        %v5326 = vpack.c.b16 %v5085, %v5084
        %v5327 = vpack.c.b16 %v5087, %v5086
        %v5328 = vpack.c.b16 %v5089, %v5088
        %v5329 = vpack.c.b16 %v5091, %v5090
        %v5330 = vpack.c.b16 %v5093, %v5092
        %v5331 = vpack.c.b16 %v5095, %v5094
        %v5332 = vpack.c.b16 %v5097, %v5096
        %v5333 = vpack.c.b16 %v5099, %v5098
        %v5334 = vpack.c.b16 %v5101, %v5100
        %v5335 = vpack.c.b16 %v5103, %v5102
        %v5336 = vpack.c.b16 %v5105, %v5104
        %v5337 = vpack.c.b16 %v5107, %v5106
        %v5338 = vpack.c.b16 %v5109, %v5108
        %v5339 = vpack.c.b16 %v5111, %v5110
        %v5340 = vpack.c.b16 %v5113, %v5112
        %v5341 = vpack.c.b16 %v5115, %v5114
        %v5342 = vpack.c.b16 %v5117, %v5116
        %v5343 = vpack.c.b16 %v5119, %v5118
        %v5344 = vpack.c.b16 %v5121, %v5120
        %v5345 = vpack.c.b16 %v5123, %v5122
        %v5346 = vpack.c.b16 %v5125, %v5124
        %v5347 = vpack.c.b16 %v5127, %v5126
        %v5348 = vpack.c.b16 %v5129, %v5128
        %v5349 = vpack.c.b16 %v5131, %v5130
        %v5350 = vpack.c.b16 %v5133, %v5132
        %v5351 = vpack.c.b16 %v5135, %v5134
        %v5352 = vpack.c.b16 %v5137, %v5136
        %v5353 = vpack.c.b16 %v5139, %v5138
        %v5354 = vpack.c.b16 %v5141, %v5140
        %v5355 = vpack.c.b16 %v5143, %v5142
        %v5356 = vpack.c.b16 %v5145, %v5144
        %v5357 = vpack.c.b16 %v5147, %v5146
        %v5358 = vpack.c.b16 %v5149, %v5148
        %v5359 = vpack.c.b16 %v5151, %v5150
        %v5360 = vpack.c.b16 %v5153, %v5152
        %v5361 = vpack.c.b16 %v5155, %v5154
        %v5362 = vpack.c.b16 %v5157, %v5156
        %v5363 = vpack.c.b16 %v5159, %v5158
        %v5364 = vpack.c.b16 %v5161, %v5160
        %v5365 = vpack.c.b16 %v5163, %v5162
        %v5366 = vpack.c.b16 %v5165, %v5164
        %v5367 = vpack.c.b16 %v5167, %v5166
        %v5368 = vpack.c.b16 %v5169, %v5168
        %v5369 = vpack.c.b16 %v5171, %v5170
        %v5370 = vpack.c.b16 %v5173, %v5172
        %v5371 = vpack.c.b16 %v5175, %v5174
        %v5372 = vpack.c.b16 %v5177, %v5176
        %v5373 = vpack.c.b16 %v5179, %v5178
        %v5374 = vpack.c.b16 %v5181, %v5180
        %v5375 = vpack.c.b16 %v5183, %v5182
        %v5376 = vpack.c.b16 %v5185, %v5184
        %v5377 = vpack.c.b16 %v5187, %v5186
        %v5378 = vpack.c.b16 %v5189, %v5188
        %v5379 = vpack.c.b16 %v5191, %v5190
        %v5380 = vpack.c.b16 %v5193, %v5192
        %v5381 = vpack.c.b16 %v5195, %v5194
        %v5382 = vpack.c.b16 %v5197, %v5196
        %v5383 = vpack.c.b16 %v5199, %v5198
        %v5384 = vpack.c.b16 %v5201, %v5200
        %v5385 = vpack.c.b16 %v5203, %v5202
        %v5386 = vpack.c.b16 %v5205, %v5204
        %v5387 = vpack.c.b16 %v5207, %v5206
        %v5388 = vpack.c.b16 %v5209, %v5208
        %v5389 = vpack.c.b16 %v5211, %v5210
        %v5390 = vpack.c.b16 %v5213, %v5212
        %v5391 = vpack.c.b16 %v5215, %v5214
        %v5392 = vpack.c.b16 %v5217, %v5216
        %v5393 = vpack.c.b16 %v5219, %v5218
        %v5394 = vpack.c.b16 %v5221, %v5220
        %v5395 = vpack.c.b16 %v5223, %v5222
        %v5396 = vpack.c.b16 %v5225, %v5224
        %v5397 = vpack.c.b16 %v5227, %v5226
        %v5398 = vpack.c.b16 %v5229, %v5228
        %v5399 = vpack.c.b16 %v5231, %v5230
        %v5400 = vpack.c.b16 %v5233, %v5232
        %v5401 = vpack.c.b16 %v5235, %v5234
        %v5402 = vpack.c.b16 %v5237, %v5236
        %v5403 = vpack.c.b16 %v5239, %v5238
        %v5404 = vpack.c.b16 %v5241, %v5240
        %v5405 = vpack.c.b16 %v5243, %v5242
        %v5406 = vpack.c.b16 %v5245, %v5244
        %v5407 = vpack.c.b16 %v5247, %v5246
        %v5408 = vpack.c.b16 %v5249, %v5248
        %v5409 = vpack.c.b16 %v5251, %v5250
        %v5410 = vpack.c.b16 %v5253, %v5252
        %v5411 = vpack.c.b16 %v5255, %v5254
        %v5412 = vpack.c.b16 %v5257, %v5256
        %v5413 = vpack.c.b16 %v5259, %v5258
        %v5414 = vpack.c.b16 %v5261, %v5260
        %v5415 = vpack.c.b16 %v5263, %v5262
        %v5416 = vpack.c.b16 %v5265, %v5264
        %v5417 = vpack.c.b16 %v5267, %v5266
        %v5418 = vpack.c.b16 %v5269, %v5268
        %v5419 = vpack.c.b16 %v5271, %v5270
        %v5420 = vpack.c.b16 %v5273, %v5272
        %v5421 = vpack.c.b16 %v5275, %v5274
        %v5422 = vpack.c.b16 %v5277, %v5276
        %v5423 = vpack.c.b16 %v5279, %v5278
        %v5424 = vpack.c.b16 %v5281, %v5280
        %v5425 = vpack.c.b16 %v5283, %v5282
        %v5426 = vpack.c.b16 %v5285, %v5284
        %v5427 = vpack.c.b16 %v5287, %v5286
        %v5428 = vpack.c.b16 %v5289, %v5288
        %v5429 = vpack.c.b16 %v5291, %v5290
        %v5430 = vpack.c.b16 %v5293, %v5292
        %v5431 = vpack.c.b16 %v5295, %v5294
        %v5432 = vpack.c.b16 %v5297, %v5296
        %v5433 = vpack.c.b16 %v5299, %v5298
        %v5434 = vpack.c.b16 %v5301, %v5300
        %v5435 = vpack.c.b16 %v5303, %v5302
        %v5436 = vpack.c.b16 %v5305, %v5304
        %v5437 = vpack.c.b16 %v5307, %v5306
        %v5438 = vpack.c.b16 %v5309, %v5308
        %v5439 = vpack.c.b16 %v5311, %v5310
        %5568 = vst [vmem:[%s460] sm:$0xff] %v5312
        %5569 = vst [vmem:[%s460 + $0x8] sm:$0xff] %v5313
        %5570 = vst [vmem:[%s460 + $0x10] sm:$0xff] %v5314
        %5571 = vst [vmem:[%s460 + $0x18] sm:$0xff] %v5315
        %5572 = vst [vmem:[%s460 + $0x20] sm:$0xff] %v5316
        %5573 = vst [vmem:[%s460 + $0x28] sm:$0xff] %v5317
        %5574 = vst [vmem:[%s460 + $0x30] sm:$0xff] %v5318
        %5575 = vst [vmem:[%s460 + $0x38] sm:$0xff] %v5319
        %5576 = vst [vmem:[%s460 + $0x40] sm:$0xff] %v5320
        %5577 = vst [vmem:[%s460 + $0x48] sm:$0xff] %v5321
        %5578 = vst [vmem:[%s460 + $0x50] sm:$0xff] %v5322
        %5579 = vst [vmem:[%s460 + $0x58] sm:$0xff] %v5323
        %5580 = vst [vmem:[%s460 + $0x60] sm:$0xff] %v5324
        %5581 = vst [vmem:[%s460 + $0x68] sm:$0xff] %v5325
        %5582 = vst [vmem:[%s460 + $0x70] sm:$0xff] %v5326
        %5583 = vst [vmem:[%s460 + $0x78] sm:$0xff] %v5327
        %5584 = vst [vmem:[%s460 + $0x80] sm:$0xff] %v5328
        %5585 = vst [vmem:[%s460 + $0x88] sm:$0xff] %v5329
        %5586 = vst [vmem:[%s460 + $0x90] sm:$0xff] %v5330
        %5587 = vst [vmem:[%s460 + $0x98] sm:$0xff] %v5331
        %5588 = vst [vmem:[%s460 + $0xa0] sm:$0xff] %v5332
        %5589 = vst [vmem:[%s460 + $0xa8] sm:$0xff] %v5333
        %5590 = vst [vmem:[%s460 + $0xb0] sm:$0xff] %v5334
        %5591 = vst [vmem:[%s460 + $0xb8] sm:$0xff] %v5335
        %5592 = vst [vmem:[%s460 + $0xc0] sm:$0xff] %v5336
        %5593 = vst [vmem:[%s460 + $0xc8] sm:$0xff] %v5337
        %5594 = vst [vmem:[%s460 + $0xd0] sm:$0xff] %v5338
        %5595 = vst [vmem:[%s460 + $0xd8] sm:$0xff] %v5339
        %5596 = vst [vmem:[%s460 + $0xe0] sm:$0xff] %v5340
        %5597 = vst [vmem:[%s460 + $0xe8] sm:$0xff] %v5341
        %5598 = vst [vmem:[%s460 + $0xf0] sm:$0xff] %v5342
        %5599 = vst [vmem:[%s460 + $0xf8] sm:$0xff] %v5343
        %5600 = vst [vmem:[%s460 + $0x100] sm:$0xff] %v5344
        %5601 = vst [vmem:[%s460 + $0x108] sm:$0xff] %v5345
        %5602 = vst [vmem:[%s460 + $0x110] sm:$0xff] %v5346
        %5603 = vst [vmem:[%s460 + $0x118] sm:$0xff] %v5347
        %5604 = vst [vmem:[%s460 + $0x120] sm:$0xff] %v5348
        %5605 = vst [vmem:[%s460 + $0x128] sm:$0xff] %v5349
        %5606 = vst [vmem:[%s460 + $0x130] sm:$0xff] %v5350
        %5607 = vst [vmem:[%s460 + $0x138] sm:$0xff] %v5351
        %5608 = vst [vmem:[%s460 + $0x140] sm:$0xff] %v5352
        %5609 = vst [vmem:[%s460 + $0x148] sm:$0xff] %v5353
        %5610 = vst [vmem:[%s460 + $0x150] sm:$0xff] %v5354
        %5611 = vst [vmem:[%s460 + $0x158] sm:$0xff] %v5355
        %5612 = vst [vmem:[%s460 + $0x160] sm:$0xff] %v5356
        %5613 = vst [vmem:[%s460 + $0x168] sm:$0xff] %v5357
        %5614 = vst [vmem:[%s460 + $0x170] sm:$0xff] %v5358
        %5615 = vst [vmem:[%s460 + $0x178] sm:$0xff] %v5359
        %5616 = vst [vmem:[%s460 + $0x180] sm:$0xff] %v5360
        %5617 = vst [vmem:[%s460 + $0x188] sm:$0xff] %v5361
        %5618 = vst [vmem:[%s460 + $0x190] sm:$0xff] %v5362
        %5619 = vst [vmem:[%s460 + $0x198] sm:$0xff] %v5363
        %5620 = vst [vmem:[%s460 + $0x1a0] sm:$0xff] %v5364
        %5621 = vst [vmem:[%s460 + $0x1a8] sm:$0xff] %v5365
        %5622 = vst [vmem:[%s460 + $0x1b0] sm:$0xff] %v5366
        %5623 = vst [vmem:[%s460 + $0x1b8] sm:$0xff] %v5367
        %5624 = vst [vmem:[%s460 + $0x1c0] sm:$0xff] %v5368
        %5625 = vst [vmem:[%s460 + $0x1c8] sm:$0xff] %v5369
        %5626 = vst [vmem:[%s460 + $0x1d0] sm:$0xff] %v5370
        %5627 = vst [vmem:[%s460 + $0x1d8] sm:$0xff] %v5371
        %5628 = vst [vmem:[%s460 + $0x1e0] sm:$0xff] %v5372
        %5629 = vst [vmem:[%s460 + $0x1e8] sm:$0xff] %v5373
        %5630 = vst [vmem:[%s460 + $0x1f0] sm:$0xff] %v5374
        %5631 = vst [vmem:[%s460 + $0x1f8] sm:$0xff] %v5375
        %5632 = vst [vmem:[%s460 + $0x200] sm:$0xff] %v5376
        %5633 = vst [vmem:[%s460 + $0x208] sm:$0xff] %v5377
        %5634 = vst [vmem:[%s460 + $0x210] sm:$0xff] %v5378
        %5635 = vst [vmem:[%s460 + $0x218] sm:$0xff] %v5379
        %5636 = vst [vmem:[%s460 + $0x220] sm:$0xff] %v5380
        %5637 = vst [vmem:[%s460 + $0x228] sm:$0xff] %v5381
        %5638 = vst [vmem:[%s460 + $0x230] sm:$0xff] %v5382
        %5639 = vst [vmem:[%s460 + $0x238] sm:$0xff] %v5383
        %5640 = vst [vmem:[%s460 + $0x240] sm:$0xff] %v5384
        %5641 = vst [vmem:[%s460 + $0x248] sm:$0xff] %v5385
        %5642 = vst [vmem:[%s460 + $0x250] sm:$0xff] %v5386
        %5643 = vst [vmem:[%s460 + $0x258] sm:$0xff] %v5387
        %5644 = vst [vmem:[%s460 + $0x260] sm:$0xff] %v5388
        %5645 = vst [vmem:[%s460 + $0x268] sm:$0xff] %v5389
        %5646 = vst [vmem:[%s460 + $0x270] sm:$0xff] %v5390
        %5647 = vst [vmem:[%s460 + $0x278] sm:$0xff] %v5391
        %5648 = vst [vmem:[%s460 + $0x280] sm:$0xff] %v5392
        %5649 = vst [vmem:[%s460 + $0x288] sm:$0xff] %v5393
        %5650 = vst [vmem:[%s460 + $0x290] sm:$0xff] %v5394
        %5651 = vst [vmem:[%s460 + $0x298] sm:$0xff] %v5395
        %5652 = vst [vmem:[%s460 + $0x2a0] sm:$0xff] %v5396
        %5653 = vst [vmem:[%s460 + $0x2a8] sm:$0xff] %v5397
        %5654 = vst [vmem:[%s460 + $0x2b0] sm:$0xff] %v5398
        %5655 = vst [vmem:[%s460 + $0x2b8] sm:$0xff] %v5399
        %5656 = vst [vmem:[%s460 + $0x2c0] sm:$0xff] %v5400
        %5657 = vst [vmem:[%s460 + $0x2c8] sm:$0xff] %v5401
        %5658 = vst [vmem:[%s460 + $0x2d0] sm:$0xff] %v5402
        %5659 = vst [vmem:[%s460 + $0x2d8] sm:$0xff] %v5403
        %5660 = vst [vmem:[%s460 + $0x2e0] sm:$0xff] %v5404
        %5661 = vst [vmem:[%s460 + $0x2e8] sm:$0xff] %v5405
        %5662 = vst [vmem:[%s460 + $0x2f0] sm:$0xff] %v5406
        %5663 = vst [vmem:[%s460 + $0x2f8] sm:$0xff] %v5407
        %5664 = vst [vmem:[%s460 + $0x300] sm:$0xff] %v5408
        %5665 = vst [vmem:[%s460 + $0x308] sm:$0xff] %v5409
        %5666 = vst [vmem:[%s460 + $0x310] sm:$0xff] %v5410
        %5667 = vst [vmem:[%s460 + $0x318] sm:$0xff] %v5411
        %5668 = vst [vmem:[%s460 + $0x320] sm:$0xff] %v5412
        %5669 = vst [vmem:[%s460 + $0x328] sm:$0xff] %v5413
        %5670 = vst [vmem:[%s460 + $0x330] sm:$0xff] %v5414
        %5671 = vst [vmem:[%s460 + $0x338] sm:$0xff] %v5415
        %5672 = vst [vmem:[%s460 + $0x340] sm:$0xff] %v5416
        %5673 = vst [vmem:[%s460 + $0x348] sm:$0xff] %v5417
        %5674 = vst [vmem:[%s460 + $0x350] sm:$0xff] %v5418
        %5675 = vst [vmem:[%s460 + $0x358] sm:$0xff] %v5419
        %5676 = vst [vmem:[%s460 + $0x360] sm:$0xff] %v5420
        %5677 = vst [vmem:[%s460 + $0x368] sm:$0xff] %v5421
        %5678 = vst [vmem:[%s460 + $0x370] sm:$0xff] %v5422
        %5679 = vst [vmem:[%s460 + $0x378] sm:$0xff] %v5423
        %5680 = vst [vmem:[%s460 + $0x380] sm:$0xff] %v5424
        %5681 = vst [vmem:[%s460 + $0x388] sm:$0xff] %v5425
        %5682 = vst [vmem:[%s460 + $0x390] sm:$0xff] %v5426
        %5683 = vst [vmem:[%s460 + $0x398] sm:$0xff] %v5427
        %5684 = vst [vmem:[%s460 + $0x3a0] sm:$0xff] %v5428
        %5685 = vst [vmem:[%s460 + $0x3a8] sm:$0xff] %v5429
        %5686 = vst [vmem:[%s460 + $0x3b0] sm:$0xff] %v5430
        %5687 = vst [vmem:[%s460 + $0x3b8] sm:$0xff] %v5431
        %5688 = vst [vmem:[%s460 + $0x3c0] sm:$0xff] %v5432
        %5689 = vst [vmem:[%s460 + $0x3c8] sm:$0xff] %v5433
        %5690 = vst [vmem:[%s460 + $0x3d0] sm:$0xff] %v5434
        %5691 = vst [vmem:[%s460 + $0x3d8] sm:$0xff] %v5435
        %5692 = vst [vmem:[%s460 + $0x3e0] sm:$0xff] %v5436
        %5693 = vst [vmem:[%s460 + $0x3e8] sm:$0xff] %v5437
        %5694 = vst [vmem:[%s460 + $0x3f0] sm:$0xff] %v5438
        %5695 = vst [vmem:[%s460 + $0x3f8] sm:$0xff] %v5439
        %s5696 = sand.u32 %s231, 1
        %s5697 = scalar_lea.sflag [#allocation5], %s5696
        %s5698 = sand.u32 %s231, 1
        %s5699 = smul.addr %s5698, 1024
        %s5700 = scalar_lea.vmem [#allocation17], %s5699
        // Predicated region
        $region89: #{tpu_custom_call.1} parent=51 // pred_check
          %p5701 = pneg %p241
        $region90: #{tpu_custom_call.1} parent=51 // pred_check_branch
          %5703 = sbr.rel (%p5701) target = $region92
        $region91: #{tpu_custom_call.1} parent=51 // pred_region
          %s5704 = smul.u32 32, %s35
          %s5705 = smul.u32 8, %s36
          %s5707 = ssub.s32 16384, 16384
          %5708 = vsyncadd %s5697, %s5707
          %s5709 = smul.addr %s5704, 16
          %s5710 = sadd.s32 %s5705, %s5709
          %s5711 = smul.addr %s5710, 64
          %s5712 = scalar_lea.hbm %s8, %s5711
          %s5713 = sshll.u32 %s5700, 4
          %s5714 = int_to_ptr.vmem [resolvable:$true] %s5713
          %5719 = dma.vmem_to_hbm [thread:$0]  %s5714, 16384, %s5712, %s5697, 512, 1024, 32
        $region92: #{tpu_custom_call.1} parent=51 // pred_fallthru
          _
      $region52: #{tpu_custom_call.1} parent=5 // pred_fallthru
        _
      %p5720 = scmp.le.s32.totalorder 2, %s26
      // Predicated region
      $region93: #{tpu_custom_call.1} parent=5 // pred_check
        %p5721 = pneg %p5720
      $region94: #{tpu_custom_call.1} parent=5 // pred_check_branch
        %5723 = sbr.rel (%p5721) target = $region96
      $region95: #{tpu_custom_call.1} parent=5 // pred_region
        %s5724 = ssub.s32 %s26, 2
        // Predicated region
        $region97: #{tpu_custom_call.1} parent=95 // pred_check
          %p5725 = pneg %p247
        $region98: #{tpu_custom_call.1} parent=95 // pred_check_branch
          %5727 = sbr.rel (%p5725) target = $region100
        $region99: #{tpu_custom_call.1} parent=95 // pred_region
          %s5728 = sand.u32 %s232, 1
          %s5729 = scalar_lea.sflag [#allocation5], %s5728
          %s5730 = sand.u32 %s232, 1
          %s5731 = smul.addr %s5730, 1024
          %s5732 = scalar_lea.vmem [#allocation17], %s5731
          %5733 = dma.done %s5729, 16384
        $region100: #{tpu_custom_call.1} parent=95 // pred_fallthru
          _
      $region96: #{tpu_custom_call.1} parent=5 // pred_fallthru
        _
    $region6: #{tpu_custom_call.1} parent=1 // loop_footer
      %s30 = sadd.s32 1, %s26
    $region7: #{tpu_custom_call.1} parent=1 // loop_footer_branch
      %25 = sbr.rel target = $region3
    $region8: #{tpu_custom_call.1} parent=1 // loop_exit
      _
    %5734 = vsyncpa [#allocation4], 1
    %s5735 = scalar_lea.sflag [#allocation4], 1
    %5736 = vsyncpa %s5735, 1
    %5737 = vsyncpa [#allocation7], 1
    %5738 = vsyncpa [#allocation10], 1
    %5739 = vsyncpa [#allocation13], 1
    %5740 = vsyncpa [#allocation16], 1
    %s5741 = scalar_lea.sflag [#allocation16], 1
    %5742 = vsyncpa %s5741, 1
    %5743 = vsyncpa [#allocation5], 1
    %s5744 = scalar_lea.sflag [#allocation5], 1
    %5745 = vsyncpa %s5744, 1

</llo_original>
